<compile_context>
chip_gen: v7x
topology: tpu7x:2x2x1
jax: 0.10.0
libtpu: 0.0.40
codegen_flags: <defaults>
</compile_context>

<pallas_src>
import functools

import jax
import jax.numpy as jnp
from jax.experimental import pallas as pl
from jax.experimental.pallas import tpu as pltpu

CHANNELS = [8, 16, 32, 64]
LAYERS = [2, 2, 2, 2]
BN_EPS = 1e-3
ALPHA_CLAMP = 1e-3
C_PAD = 128            # lane-dense padded channel count (one full vreg width)


# ----------------------- boundary layout conversion -------------------------
#
# "phi_L" layout of a level-L NHWC tensor (n = 3 - L halvings down to level 3):
#   rows sorted by key (y%2, x%2, (y//2)%2, (x//2)%2, ..., b, y>>n, x>>n), channels last.
# Properties used by the kernels:
#   * the 4 leading blocks are the 2x2 parity sub-grids w.r.t. the next-coarser level,
#   * within each block the rows follow phi_{L+1} of the parent pixel,
# so upsample / stride-2 conv / shortcut all become row-aligned slab operations.

def to_phi(x_nchw, n, c_pad=C_PAD):
    B, C, H, W = x_nchw.shape
    Hq, Wq = H >> n, W >> n
    x = x_nchw.reshape(B, C, Hq, *([2] * n), Wq, *([2] * n))
    # axes: 0=B, 1=C, 2=Hq, 3..2+n = y-bits (MSB..LSB), 3+n = Wq, 4+n..3+2n = x-bits
    perm = []
    for m in range(1, n + 1):                      # least-significant bit pair outermost
        perm += [3 + n - m, 4 + 2 * n - m]
    perm += [0, 2, 3 + n, 1]                       # B, y_top, x_top, C
    x = jnp.transpose(x, perm).reshape((4 ** n) * B * Hq * Wq, C)
    if c_pad > C:
        x = jnp.pad(x, ((0, 0), (0, c_pad - C)))
    return x


def from_phi(x_phi, n, nchw_shape):
    B, C, H, W = nchw_shape
    Hq, Wq = H >> n, W >> n
    x = x_phi[:, :C].reshape(*([2, 2] * n), B, Hq, Wq, C)
    # source axes: pair m at (2(m-1), 2(m-1)+1); B=2n, Hq=2n+1, Wq=2n+2, C=2n+3
    perm = [2 * n, 2 * n + 3, 2 * n + 1]
    perm += [2 * (m - 1) for m in range(n, 0, -1)]        # y_n .. y_1
    perm += [2 * n + 2]
    perm += [2 * (m - 1) + 1 for m in range(n, 0, -1)]    # x_n .. x_1
    return jnp.transpose(x, perm).reshape(B, C, H, W)


def _alpha_row(alpha):
    # SubNet.forward() clamps |alpha| >= 1e-3 in place (sign preserved) before use.
    a = alpha.reshape(1, -1)
    a = jnp.sign(a) * jnp.maximum(jnp.abs(a), ALPHA_CLAMP)
    return jnp.pad(a, ((0, 0), (0, C_PAD - a.shape[1])))


# ------------------------------ fused kernel --------------------------------

def _silu(y):
    # SiLU = y * sigmoid(y); approx reciprocal runs on the EUP instead of the VALU.
    return y * pl.reciprocal(1.0 + jnp.exp(-y), approx=True)


def _level_kernel(*refs, has_down, has_up, num_blocks, rep):
    """One whole RevCol level:  out = alpha * c_prev + blocks(Fusion(c_down, c_up)).

    Ref order (matches _run_level):
      c_down, [c_up], c_prev, alpha, [up_w, up_b], [down_w, down_b],
      blocks_w, blocks_b, out
    Channels padded to C_PAD lanes; activations f32, weights bf16, f32 accumulation.
    """
    it = iter(refs)
    c_down_ref = next(it)
    c_up_ref = next(it) if has_up else None
    c_prev_ref = next(it)
    alpha_ref = next(it)
    if has_up:
        up_w_ref, up_b_ref = next(it), next(it)
    if has_down:
        down_w_ref, down_b_ref = next(it), next(it)
    blocks_w_ref, blocks_b_ref = next(it), next(it)
    out_ref = next(it)

    # ---- Fusion.down -------------------------------------------------------
    if has_down:
        # c_down_ref: (4, R, C) = the 4 spatial taps of the 2x2/stride-2 conv, rows
        # already aligned with this tile's output rows (quadtree layout), so the
        # strided conv is one lane-concat + one (R, 4C) x (4C, C) MXU matmul.
        cd = c_down_ref[...]
        cdc = jnp.concatenate([cd[0], cd[1], cd[2], cd[3]], axis=-1)
        down = jnp.dot(cdc.astype(jnp.bfloat16), down_w_ref[...],
                       preferred_element_type=jnp.float32) + down_b_ref[...]
    else:
        down = c_down_ref[...]                       # level 0: nn.Identity

    # ---- Fusion.up: Conv1x1 + BN + SiLU + nearest 2x upsample ---------------
    if has_up:
        u = jnp.dot(c_up_ref[...].astype(jnp.bfloat16), up_w_ref[...],
                    preferred_element_type=jnp.float32) + up_b_ref[...]
        u = _silu(u)
        # Nearest 2x upsample == add u to every output parity block; with rep==1
        # each grid step IS one parity block, so it's a plain aligned add.
        if rep == 1:
            fused = down + u
        else:
            r_, c_ = down.shape
            fused = (down.reshape(rep, r_ // rep, c_) + u[None]).reshape(r_, c_)
    else:
        fused = down

    # ---- blocks: num_blocks x (Conv1x1 + BN + SiLU), BN folded --------------
    y = fused
    for t in range(num_blocks):
        y = _silu(jnp.dot(y.astype(jnp.bfloat16), blocks_w_ref[t],
                          preferred_element_type=jnp.float32) + blocks_b_ref[t])

    # ---- shortcut epilogue (written in place over c_prev's HBM buffer) ------
    out_ref[...] = alpha_ref[...] * c_prev_ref[...] + y


def _run_level(level, params, alpha_row, c_down_phi, c_up_phi, c_prev_phi):
    p = params[f"level{level}"]
    M = c_prev_phi.shape[0]
    has_down = level >= 1
    has_up = level <= 2
    num_blocks = int(p["blocks_w"].shape[0])

    # Tile over the 4 output parity blocks (parallel across v7x's 2 TCs, pipelined);
    # fall back to a single full-slab step if the tile would break (8,128) alignment.
    tiles = 4 if (has_up and M % 4 == 0 and (M // 4) % 8 == 0) else 1
    R = M // tiles
    rep = (R // c_up_phi.shape[0]) if has_up else 1

    operands, in_specs = [], []
    if has_down:
        operands.append(c_down_phi.reshape(4, M, C_PAD))        # (tap, phi_L row, C)
        in_specs.append(pl.BlockSpec((4, R, C_PAD), lambda k: (0, k, 0)))
    else:
        operands.append(c_down_phi)                              # identity down (level 0)
        in_specs.append(pl.BlockSpec((R, C_PAD), lambda k: (k, 0)))
    if has_up:
        mup = c_up_phi.shape[0]
        operands.append(c_up_phi)                                # stays resident
        in_specs.append(pl.BlockSpec((mup, C_PAD), lambda k: (0, 0)))
    c_prev_idx = len(operands)
    operands.append(c_prev_phi)
    in_specs.append(pl.BlockSpec((R, C_PAD), lambda k: (k, 0)))
    operands.append(alpha_row)
    in_specs.append(pl.BlockSpec((1, C_PAD), lambda k: (0, 0)))
    if has_up:
        operands += [p["up_w"], p["up_b"]]
        in_specs += [pl.BlockSpec(p["up_w"].shape, lambda k: (0, 0)),
                     pl.BlockSpec(p["up_b"].shape, lambda k: (0, 0))]
    if has_down:
        operands += [p["down_w"], p["down_b"]]
        in_specs += [pl.BlockSpec(p["down_w"].shape, lambda k: (0, 0)),
                     pl.BlockSpec(p["down_b"].shape, lambda k: (0, 0))]
    operands += [p["blocks_w"], p["blocks_b"]]
    in_specs += [pl.BlockSpec(p["blocks_w"].shape, lambda k: (0, 0, 0)),
                 pl.BlockSpec(p["blocks_b"].shape, lambda k: (0, 0, 0))]

    kernel = functools.partial(_level_kernel, has_down=has_down, has_up=has_up,
                               num_blocks=num_blocks, rep=rep)

    return pl.pallas_call(
        kernel,
        out_shape=jax.ShapeDtypeStruct((M, C_PAD), jnp.float32),
        grid=(tiles,),
        in_specs=in_specs,
        out_specs=pl.BlockSpec((R, C_PAD), lambda k: (k, 0)),
        input_output_aliases={c_prev_idx: 0},        # shortcut written in place
        compiler_params=pltpu.CompilerParams(
            dimension_semantics=("parallel",) if tiles > 1 else ("arbitrary",),
            vmem_limit_bytes=32 * 1024 * 1024),      # well within v7x's 64 MiB physical
    )(*operands)


# ------------------------------ forward pass --------------------------------

def subnet_forward(params, x, c0, c1, c2, c3):
    """RevCol SubNet forward (first_col=False). NCHW in / NCHW out."""
    # Boundary conversion (once per tensor): NCHW -> channel-padded quadtree slabs.
    xp = to_phi(x, 3)
    c0p, c1p, c2p, c3p = to_phi(c0, 3), to_phi(c1, 2), to_phi(c2, 1), to_phi(c3, 0)
    alphas = [_alpha_row(params[f"alpha{i}"]) for i in range(4)]

    c0p = _run_level(0, params, alphas[0], xp, c1p, c0p)
    c1p = _run_level(1, params, alphas[1], c0p, c2p, c1p)
    c2p = _run_level(2, params, alphas[2], c1p, c3p, c2p)
    c3p = _run_level(3, params, alphas[3], c2p, None, c3p)

    return (from_phi(c0p, 3, c0.shape), from_phi(c1p, 2, c1.shape),
            from_phi(c2p, 1, c2.shape), from_phi(c3p, 0, c3.shape))


# --------------------------- parameter creation -----------------------------

def _fold_conv_bn(key, cin, cout, k):
    """Conv2d(cin,cout,k,bias=False) + eval-mode BatchNorm2d(cout), folded."""
    kw_, kg, kb, km = jax.random.split(key, 4)
    w = jax.random.normal(kw_, (cout, cin, k, k), jnp.float32) / jnp.sqrt(float(cin * k * k))
    gamma = 1.0 + 0.1 * jax.random.normal(kg, (cout,), jnp.float32)
    beta = 0.1 * jax.random.normal(kb, (cout,), jnp.float32)
    mean = 0.1 * jax.random.normal(km, (cout,), jnp.float32)
    var = jnp.ones((cout,), jnp.float32)
    scale = gamma / jnp.sqrt(var + BN_EPS)
    return w * scale[:, None, None, None], beta - mean * scale


def _pad2(m, rows=C_PAD, cols=C_PAD):
    r, c = m.shape
    return jnp.pad(m, ((0, rows - r), (0, cols - c)))


def init_params(key):
    params = {}
    keys = iter(jax.random.split(key, 64))
    for lvl in range(4):
        c = CHANNELS[lvl]
        p = {}
        if lvl >= 1:   # Fusion.down = Conv2x2 stride2 (no act); 4 taps stacked along K
            w, b = _fold_conv_bn(next(keys), CHANNELS[lvl - 1], c, 2)
            taps = [_pad2(w[:, :, dy, dx].T) for dy in (0, 1) for dx in (0, 1)]
            p["down_w"] = jnp.concatenate(taps, axis=0).astype(jnp.bfloat16)   # (4*128,128)
            p["down_b"] = _pad2(b[None, :], 1, C_PAD)                          # (1,128) f32
        if lvl <= 2:   # Fusion.up = Conv1x1 + SiLU (first_col=False)
            w, b = _fold_conv_bn(next(keys), CHANNELS[lvl + 1], c, 1)
            p["up_w"] = _pad2(w[:, :, 0, 0].T).astype(jnp.bfloat16)            # (128,128)
            p["up_b"] = _pad2(b[None, :], 1, C_PAD)
        bw, bb = [], []
        for _ in range(LAYERS[lvl]):                 # blocks: Conv1x1 + BN + SiLU
            w, b = _fold_conv_bn(next(keys), c, c, 1)
            bw.append(_pad2(w[:, :, 0, 0].T))
            bb.append(_pad2(b[None, :], 1, C_PAD))
        p["blocks_w"] = jnp.stack(bw).astype(jnp.bfloat16)                     # (NB,128,128)
        p["blocks_b"] = jnp.stack(bb)                                          # (NB,1,128)
        params[f"level{lvl}"] = p
        params[f"alpha{lvl}"] = 0.5 * jnp.ones((1, c, 1, 1), jnp.float32)
    return params


# -------------------- plain-JAX reference (for validation) ------------------

def _ref_silu(y):
    return y * jax.nn.sigmoid(y)


def _ref_conv1x1(x, w_pad, b_pad, cin, cout, act):
    y = jnp.einsum("bhwc,cd->bhwd", x.astype(jnp.bfloat16), w_pad[:cin, :cout],
                   preferred_element_type=jnp.float32) + b_pad[0, :cout]
    return _ref_silu(y) if act else y


def _ref_down(x, wd_pad, bd_pad, cin, cout):
    y = jnp.zeros((x.shape[0], x.shape[1] // 2, x.shape[2] // 2, cout), jnp.float32)
    for p in range(4):
        dy, dx = p // 2, p % 2
        w = wd_pad[p * C_PAD:p * C_PAD + cin, :cout]
        y = y + jnp.einsum("bhwc,cd->bhwd", x[:, dy::2, dx::2, :].astype(jnp.bfloat16),
                           w, preferred_element_type=jnp.float32)
    return y + bd_pad[0, :cout]


def subnet_forward_ref(params, x, c0, c1, c2, c3):
    t = lambda a: jnp.transpose(a, (0, 2, 3, 1))
    ti = lambda a: jnp.transpose(a, (0, 3, 1, 2))
    x, c0, c1, c2, c3 = map(t, (x, c0, c1, c2, c3))
    al = []
    for i in range(4):
        a = params[f"alpha{i}"]
        a = jnp.sign(a) * jnp.maximum(jnp.abs(a), ALPHA_CLAMP)
        al.append(jnp.transpose(a, (0, 2, 3, 1)))

    def level(lvl, c_down, c_up):
        p = params[f"level{lvl}"]
        c = CHANNELS[lvl]
        down = c_down if lvl == 0 else _ref_down(c_down, p["down_w"], p["down_b"],
                                                 CHANNELS[lvl - 1], c)
        if lvl == 3:
            fused = down
        else:
            up = _ref_conv1x1(c_up, p["up_w"], p["up_b"], CHANNELS[lvl + 1], c, act=True)
            fused = jnp.repeat(jnp.repeat(up, 2, axis=1), 2, axis=2) + down
        y = fused
        for k in range(p["blocks_w"].shape[0]):
            y = _ref_conv1x1(y, p["blocks_w"][k], p["blocks_b"][k], c, c, act=True)
        return y

    c0 = al[0] * c0 + level(0, x, c1)
    c1 = al[1] * c1 + level(1, c0, c2)
    c2 = al[2] * c2 + level(2, c1, c3)
    c3 = al[3] * c3 + level(3, c2, None)
    return tuple(map(ti, (c0, c1, c2, c3)))


# ----------------------------------- main -----------------------------------

if __name__ == "__main__":
    key = jax.random.PRNGKey(0)
    kp, kx, k0, k1, k2, k3 = jax.random.split(key, 6)
    params = init_params(kp)

    B, H = 2, 16
    x = jax.random.normal(kx, (B, CHANNELS[0], H, H), jnp.float32)
    c0 = jax.random.normal(k0, (B, CHANNELS[0], H, H), jnp.float32)
    c1 = jax.random.normal(k1, (B, CHANNELS[1], H // 2, H // 2), jnp.float32)
    c2 = jax.random.normal(k2, (B, CHANNELS[2], H // 4, H // 4), jnp.float32)
    c3 = jax.random.normal(k3, (B, CHANNELS[3], H // 8, H // 8), jnp.float32)

    fwd = jax.jit(subnet_forward)
    out = fwd(params, x, c0, c1, c2, c3)
    jax.block_until_ready(out)

    assert out[0].shape == (B, CHANNELS[0], H, H)
    assert out[1].shape == (B, CHANNELS[1], H // 2, H // 2)
    assert out[2].shape == (B, CHANNELS[2], H // 4, H // 4)
    assert out[3].shape == (B, CHANNELS[3], H // 8, H // 8)

    ref = jax.jit(subnet_forward_ref)(params, x, c0, c1, c2, c3)
    jax.block_until_ready(ref)
    for o, r in zip(out, ref):
        err = float(jnp.max(jnp.abs(o - r)))
        assert err < 5e-2, f"kernel vs reference mismatch: max abs err {err}"

    print("KERNEL_OK")
</pallas_src>

<mosaic_0001>
module attributes {stable_mosaic.version = 11 : i64} {
  func.func @_level_kernel(%arg0: i32, %arg1: memref<4x32x128xf32, #tpu.memory_space<vmem>>, %arg2: memref<32x128xf32, #tpu.memory_space<vmem>>, %arg3: memref<32x128xf32, #tpu.memory_space<vmem>>, %arg4: memref<1x128xf32, #tpu.memory_space<vmem>>, %arg5: memref<128x128xbf16, #tpu.memory_space<vmem>>, %arg6: memref<1x128xf32, #tpu.memory_space<vmem>>, %arg7: memref<512x128xbf16, #tpu.memory_space<vmem>>, %arg8: memref<1x128xf32, #tpu.memory_space<vmem>>, %arg9: memref<2x128x128xbf16, #tpu.memory_space<vmem>>, %arg10: memref<2x1x128xf32, #tpu.memory_space<vmem>>, %arg11: memref<32x128xf32, #tpu.memory_space<vmem>>) attributes {dimension_semantics = [#tpu.dimension_semantics<parallel>], iteration_bounds = array<i64: 4>, scalar_prefetch = 0 : i64, scratch_operands = 0 : i64, tpu.core_type = #tpu.core_type<tc>, window_params = [{transform_indices = @transform_0, window_bounds = array<i64: 4, 32, 128>}, {pipeline_mode = #tpu.pipeline_mode<synchronous>, transform_indices = @transform_1, window_bounds = array<i64: 32, 128>}, {transform_indices = @transform_2, window_bounds = array<i64: 32, 128>}, {pipeline_mode = #tpu.pipeline_mode<synchronous>, transform_indices = @transform_3, window_bounds = array<i64: 1, 128>}, {pipeline_mode = #tpu.pipeline_mode<synchronous>, transform_indices = @transform_4, window_bounds = array<i64: 128, 128>}, {pipeline_mode = #tpu.pipeline_mode<synchronous>, transform_indices = @transform_5, window_bounds = array<i64: 1, 128>}, {pipeline_mode = #tpu.pipeline_mode<synchronous>, transform_indices = @transform_6, window_bounds = array<i64: 512, 128>}, {pipeline_mode = #tpu.pipeline_mode<synchronous>, transform_indices = @transform_7, window_bounds = array<i64: 1, 128>}, {pipeline_mode = #tpu.pipeline_mode<synchronous>, transform_indices = @transform_8, window_bounds = array<i64: 2, 128, 128>}, {pipeline_mode = #tpu.pipeline_mode<synchronous>, transform_indices = @transform_9, window_bounds = array<i64: 2, 1, 128>}, {transform_indices = @transform_10, window_bounds = array<i64: 32, 128>}]} {
    %c0 = arith.constant 0 : index
    %c0_0 = arith.constant 0 : index
    %c0_1 = arith.constant 0 : index
    %0 = vector.load %arg1[%c0, %c0_0, %c0_1] : memref<4x32x128xf32, #tpu.memory_space<vmem>>, vector<4x32x128xf32>
    %1 = vector.extract_strided_slice %0 {offsets = [0, 0, 0], sizes = [1, 32, 128], strides = [1, 1, 1]} : vector<4x32x128xf32> to vector<1x32x128xf32>
    %2 = vector.shape_cast %1 : vector<1x32x128xf32> to vector<32x128xf32>
    %3 = vector.extract_strided_slice %0 {offsets = [1, 0, 0], sizes = [1, 32, 128], strides = [1, 1, 1]} : vector<4x32x128xf32> to vector<1x32x128xf32>
    %4 = vector.shape_cast %3 : vector<1x32x128xf32> to vector<32x128xf32>
    %5 = vector.extract_strided_slice %0 {offsets = [2, 0, 0], sizes = [1, 32, 128], strides = [1, 1, 1]} : vector<4x32x128xf32> to vector<1x32x128xf32>
    %6 = vector.shape_cast %5 : vector<1x32x128xf32> to vector<32x128xf32>
    %7 = vector.extract_strided_slice %0 {offsets = [3, 0, 0], sizes = [1, 32, 128], strides = [1, 1, 1]} : vector<4x32x128xf32> to vector<1x32x128xf32>
    %8 = vector.shape_cast %7 : vector<1x32x128xf32> to vector<32x128xf32>
    %9 = tpu.concatenate %2, %4, %6, %8 in 1 : vector<32x128xf32>, vector<32x128xf32>, vector<32x128xf32>, vector<32x128xf32> -> vector<32x512xf32>
    %10 = arith.truncf %9 : vector<32x512xf32> to vector<32x512xbf16>
    %c0_2 = arith.constant 0 : index
    %c0_3 = arith.constant 0 : index
    %11 = vector.load %arg7[%c0_2, %c0_3] : memref<512x128xbf16, #tpu.memory_space<vmem>>, vector<512x128xbf16>
    %cst = arith.constant dense<0.000000e+00> : vector<32x128xf32>
    %12 = tpu.matmul %10, %11, %cst {dimension_numbers = #tpu.dot_dimension_numbers<[1], [0], [0], [1], [0, 0, 1, 1], [], []>} : vector<32x512xbf16>, vector<512x128xbf16>, vector<32x128xf32> -> vector<32x128xf32>
    %c0_4 = arith.constant 0 : index
    %c0_5 = arith.constant 0 : index
    %13 = vector.load %arg8[%c0_4, %c0_5] : memref<1x128xf32, #tpu.memory_space<vmem>>, vector<1x128xf32>
    %14 = vector.broadcast %13 : vector<1x128xf32> to vector<32x128xf32>
    %15 = arith.addf %12, %14 : vector<32x128xf32>
    %c0_6 = arith.constant 0 : index
    %c0_7 = arith.constant 0 : index
    %16 = vector.load %arg2[%c0_6, %c0_7] : memref<32x128xf32, #tpu.memory_space<vmem>>, vector<32x128xf32>
    %17 = arith.truncf %16 : vector<32x128xf32> to vector<32x128xbf16>
    %c0_8 = arith.constant 0 : index
    %c0_9 = arith.constant 0 : index
    %18 = vector.load %arg5[%c0_8, %c0_9] : memref<128x128xbf16, #tpu.memory_space<vmem>>, vector<128x128xbf16>
    %cst_10 = arith.constant dense<0.000000e+00> : vector<32x128xf32>
    %19 = tpu.matmul %17, %18, %cst_10 {dimension_numbers = #tpu.dot_dimension_numbers<[1], [0], [0], [1], [0, 0, 1, 1], [], []>} : vector<32x128xbf16>, vector<128x128xbf16>, vector<32x128xf32> -> vector<32x128xf32>
    %c0_11 = arith.constant 0 : index
    %c0_12 = arith.constant 0 : index
    %20 = vector.load %arg6[%c0_11, %c0_12] : memref<1x128xf32, #tpu.memory_space<vmem>>, vector<1x128xf32>
    %21 = vector.broadcast %20 : vector<1x128xf32> to vector<32x128xf32>
    %22 = arith.addf %19, %21 : vector<32x128xf32>
    %cst_13 = arith.constant 0.000000e+00 : f32
    %23 = vector.broadcast %cst_13 : f32 to vector<32x128xf32>
    %24 = arith.subf %23, %22 : vector<32x128xf32>
    %25 = math.exp %24 : vector<32x128xf32>
    %cst_14 = arith.constant 1.000000e+00 : f32
    %26 = vector.broadcast %cst_14 : f32 to vector<32x128xf32>
    %27 = arith.addf %26, %25 : vector<32x128xf32>
    %28 = tpu.reciprocal %27 {approx = true} : vector<32x128xf32> -> vector<32x128xf32>
    %29 = arith.mulf %22, %28 : vector<32x128xf32>
    %30 = arith.addf %15, %29 : vector<32x128xf32>
    %31 = arith.truncf %30 : vector<32x128xf32> to vector<32x128xbf16>
    %c0_15 = arith.constant 0 : index
    %c0_16 = arith.constant 0 : index
    %c0_17 = arith.constant 0 : index
    %32 = vector.load %arg9[%c0_15, %c0_16, %c0_17] : memref<2x128x128xbf16, #tpu.memory_space<vmem>>, vector<1x128x128xbf16>
    %33 = vector.shape_cast %32 : vector<1x128x128xbf16> to vector<128x128xbf16>
    %cst_18 = arith.constant dense<0.000000e+00> : vector<32x128xf32>
    %34 = tpu.matmul %31, %33, %cst_18 {dimension_numbers = #tpu.dot_dimension_numbers<[1], [0], [0], [1], [0, 0, 1, 1], [], []>} : vector<32x128xbf16>, vector<128x128xbf16>, vector<32x128xf32> -> vector<32x128xf32>
    %c0_19 = arith.constant 0 : index
    %c0_20 = arith.constant 0 : index
    %c0_21 = arith.constant 0 : index
    %35 = vector.load %arg10[%c0_19, %c0_20, %c0_21] : memref<2x1x128xf32, #tpu.memory_space<vmem>>, vector<1x1x128xf32>
    %36 = vector.shape_cast %35 : vector<1x1x128xf32> to vector<1x128xf32>
    %37 = vector.broadcast %36 : vector<1x128xf32> to vector<32x128xf32>
    %38 = arith.addf %34, %37 : vector<32x128xf32>
    %cst_22 = arith.constant 0.000000e+00 : f32
    %39 = vector.broadcast %cst_22 : f32 to vector<32x128xf32>
    %40 = arith.subf %39, %38 : vector<32x128xf32>
    %41 = math.exp %40 : vector<32x128xf32>
    %cst_23 = arith.constant 1.000000e+00 : f32
    %42 = vector.broadcast %cst_23 : f32 to vector<32x128xf32>
    %43 = arith.addf %42, %41 : vector<32x128xf32>
    %44 = tpu.reciprocal %43 {approx = true} : vector<32x128xf32> -> vector<32x128xf32>
    %45 = arith.mulf %38, %44 : vector<32x128xf32>
    %46 = arith.truncf %45 : vector<32x128xf32> to vector<32x128xbf16>
    %c1 = arith.constant 1 : index
    %c0_24 = arith.constant 0 : index
    %c0_25 = arith.constant 0 : index
    %47 = vector.load %arg9[%c1, %c0_24, %c0_25] : memref<2x128x128xbf16, #tpu.memory_space<vmem>>, vector<1x128x128xbf16>
    %48 = vector.shape_cast %47 : vector<1x128x128xbf16> to vector<128x128xbf16>
    %cst_26 = arith.constant dense<0.000000e+00> : vector<32x128xf32>
    %49 = tpu.matmul %46, %48, %cst_26 {dimension_numbers = #tpu.dot_dimension_numbers<[1], [0], [0], [1], [0, 0, 1, 1], [], []>} : vector<32x128xbf16>, vector<128x128xbf16>, vector<32x128xf32> -> vector<32x128xf32>
    %c1_27 = arith.constant 1 : index
    %c0_28 = arith.constant 0 : index
    %c0_29 = arith.constant 0 : index
    %50 = vector.load %arg10[%c1_27, %c0_28, %c0_29] : memref<2x1x128xf32, #tpu.memory_space<vmem>>, vector<1x1x128xf32>
    %51 = vector.shape_cast %50 : vector<1x1x128xf32> to vector<1x128xf32>
    %52 = vector.broadcast %51 : vector<1x128xf32> to vector<32x128xf32>
    %53 = arith.addf %49, %52 : vector<32x128xf32>
    %cst_30 = arith.constant 0.000000e+00 : f32
    %54 = vector.broadcast %cst_30 : f32 to vector<32x128xf32>
    %55 = arith.subf %54, %53 : vector<32x128xf32>
    %56 = math.exp %55 : vector<32x128xf32>
    %cst_31 = arith.constant 1.000000e+00 : f32
    %57 = vector.broadcast %cst_31 : f32 to vector<32x128xf32>
    %58 = arith.addf %57, %56 : vector<32x128xf32>
    %59 = tpu.reciprocal %58 {approx = true} : vector<32x128xf32> -> vector<32x128xf32>
    %60 = arith.mulf %53, %59 : vector<32x128xf32>
    %c0_32 = arith.constant 0 : index
    %c0_33 = arith.constant 0 : index
    %61 = vector.load %arg4[%c0_32, %c0_33] : memref<1x128xf32, #tpu.memory_space<vmem>>, vector<1x128xf32>
    %c0_34 = arith.constant 0 : index
    %c0_35 = arith.constant 0 : index
    %62 = vector.load %arg3[%c0_34, %c0_35] : memref<32x128xf32, #tpu.memory_space<vmem>>, vector<32x128xf32>
    %63 = vector.broadcast %61 : vector<1x128xf32> to vector<32x128xf32>
    %64 = arith.mulf %63, %62 : vector<32x128xf32>
    %65 = arith.addf %64, %60 : vector<32x128xf32>
    %c0_36 = arith.constant 0 : index
    %c0_37 = arith.constant 0 : index
    %66 = vector.load %arg11[%c0_36, %c0_37] : memref<32x128xf32, #tpu.memory_space<vmem>>, vector<32x128xf32>
    tpu.vector_store %arg11[%c0_36, %c0_37], %65 {strides = array<i32>} : memref<32x128xf32, #tpu.memory_space<vmem>>, vector<32x128xf32>,
    return
  }
  func.func @transform_0(%arg0: i32) -> (i32, i32, i32) {
    %c0_i32 = arith.constant 0 : i32
    %c0_i32_0 = arith.constant 0 : i32
    %c0_i32_1 = arith.constant 0 : i32
    return %c0_i32, %arg0, %c0_i32_0 : i32, i32, i32
  }
  func.func @transform_1(%arg0: i32) -> (i32, i32) {
    %c0_i32 = arith.constant 0 : i32
    %c0_i32_0 = arith.constant 0 : i32
    %c0_i32_1 = arith.constant 0 : i32
    return %c0_i32, %c0_i32_0 : i32, i32
  }
  func.func @transform_2(%arg0: i32) -> (i32, i32) {
    %c0_i32 = arith.constant 0 : i32
    %c0_i32_0 = arith.constant 0 : i32
    return %arg0, %c0_i32 : i32, i32
  }
  func.func @transform_3(%arg0: i32) -> (i32, i32) {
    %c0_i32 = arith.constant 0 : i32
    %c0_i32_0 = arith.constant 0 : i32
    %c0_i32_1 = arith.constant 0 : i32
    return %c0_i32, %c0_i32_0 : i32, i32
  }
  func.func @transform_4(%arg0: i32) -> (i32, i32) {
    %c0_i32 = arith.constant 0 : i32
    %c0_i32_0 = arith.constant 0 : i32
    %c0_i32_1 = arith.constant 0 : i32
    return %c0_i32, %c0_i32_0 : i32, i32
  }
  func.func @transform_5(%arg0: i32) -> (i32, i32) {
    %c0_i32 = arith.constant 0 : i32
    %c0_i32_0 = arith.constant 0 : i32
    %c0_i32_1 = arith.constant 0 : i32
    return %c0_i32, %c0_i32_0 : i32, i32
  }
  func.func @transform_6(%arg0: i32) -> (i32, i32) {
    %c0_i32 = arith.constant 0 : i32
    %c0_i32_0 = arith.constant 0 : i32
    %c0_i32_1 = arith.constant 0 : i32
    return %c0_i32, %c0_i32_0 : i32, i32
  }
  func.func @transform_7(%arg0: i32) -> (i32, i32) {
    %c0_i32 = arith.constant 0 : i32
    %c0_i32_0 = arith.constant 0 : i32
    %c0_i32_1 = arith.constant 0 : i32
    return %c0_i32, %c0_i32_0 : i32, i32
  }
  func.func @transform_8(%arg0: i32) -> (i32, i32, i32) {
    %c0_i32 = arith.constant 0 : i32
    %c0_i32_0 = arith.constant 0 : i32
    %c0_i32_1 = arith.constant 0 : i32
    %c0_i32_2 = arith.constant 0 : i32
    return %c0_i32, %c0_i32_0, %c0_i32_1 : i32, i32, i32
  }
  func.func @transform_9(%arg0: i32) -> (i32, i32, i32) {
    %c0_i32 = arith.constant 0 : i32
    %c0_i32_0 = arith.constant 0 : i32
    %c0_i32_1 = arith.constant 0 : i32
    %c0_i32_2 = arith.constant 0 : i32
    return %c0_i32, %c0_i32_0, %c0_i32_1 : i32, i32, i32
  }
  func.func @transform_10(%arg0: i32) -> (i32, i32) {
    %c0_i32 = arith.constant 0 : i32
    %c0_i32_0 = arith.constant 0 : i32
    return %arg0, %c0_i32 : i32, i32
  }
}

module attributes {stable_mosaic.version = 11 : i64} {
  func.func @_level_kernel(%arg0: i32, %arg1: memref<128x128xf32, #tpu.memory_space<vmem>>, %arg2: memref<128x128xf32, #tpu.memory_space<vmem>>, %arg3: memref<128x128xf32, #tpu.memory_space<vmem>>, %arg4: memref<1x128xf32, #tpu.memory_space<vmem>>, %arg5: memref<128x128xbf16, #tpu.memory_space<vmem>>, %arg6: memref<1x128xf32, #tpu.memory_space<vmem>>, %arg7: memref<2x128x128xbf16, #tpu.memory_space<vmem>>, %arg8: memref<2x1x128xf32, #tpu.memory_space<vmem>>, %arg9: memref<128x128xf32, #tpu.memory_space<vmem>>) attributes {dimension_semantics = [#tpu.dimension_semantics<parallel>], iteration_bounds = array<i64: 4>, scalar_prefetch = 0 : i64, scratch_operands = 0 : i64, tpu.core_type = #tpu.core_type<tc>, window_params = [{transform_indices = @transform_0, window_bounds = array<i64: 128, 128>}, {pipeline_mode = #tpu.pipeline_mode<synchronous>, transform_indices = @transform_1, window_bounds = array<i64: 128, 128>}, {transform_indices = @transform_2, window_bounds = array<i64: 128, 128>}, {pipeline_mode = #tpu.pipeline_mode<synchronous>, transform_indices = @transform_3, window_bounds = array<i64: 1, 128>}, {pipeline_mode = #tpu.pipeline_mode<synchronous>, transform_indices = @transform_4, window_bounds = array<i64: 128, 128>}, {pipeline_mode = #tpu.pipeline_mode<synchronous>, transform_indices = @transform_5, window_bounds = array<i64: 1, 128>}, {pipeline_mode = #tpu.pipeline_mode<synchronous>, transform_indices = @transform_6, window_bounds = array<i64: 2, 128, 128>}, {pipeline_mode = #tpu.pipeline_mode<synchronous>, transform_indices = @transform_7, window_bounds = array<i64: 2, 1, 128>}, {transform_indices = @transform_8, window_bounds = array<i64: 128, 128>}]} {
    %c0 = arith.constant 0 : index
    %c0_0 = arith.constant 0 : index
    %0 = vector.load %arg1[%c0, %c0_0] : memref<128x128xf32, #tpu.memory_space<vmem>>, vector<128x128xf32>
    %c0_1 = arith.constant 0 : index
    %c0_2 = arith.constant 0 : index
    %1 = vector.load %arg2[%c0_1, %c0_2] : memref<128x128xf32, #tpu.memory_space<vmem>>, vector<128x128xf32>
    %2 = arith.truncf %1 : vector<128x128xf32> to vector<128x128xbf16>
    %c0_3 = arith.constant 0 : index
    %c0_4 = arith.constant 0 : index
    %3 = vector.load %arg5[%c0_3, %c0_4] : memref<128x128xbf16, #tpu.memory_space<vmem>>, vector<128x128xbf16>
    %cst = arith.constant dense<0.000000e+00> : vector<128x128xf32>
    %4 = tpu.matmul %2, %3, %cst {dimension_numbers = #tpu.dot_dimension_numbers<[1], [0], [0], [1], [0, 0, 1, 1], [], []>} : vector<128x128xbf16>, vector<128x128xbf16>, vector<128x128xf32> -> vector<128x128xf32>
    %c0_5 = arith.constant 0 : index
    %c0_6 = arith.constant 0 : index
    %5 = vector.load %arg6[%c0_5, %c0_6] : memref<1x128xf32, #tpu.memory_space<vmem>>, vector<1x128xf32>
    %6 = vector.broadcast %5 : vector<1x128xf32> to vector<128x128xf32>
    %7 = arith.addf %4, %6 : vector<128x128xf32>
    %cst_7 = arith.constant 0.000000e+00 : f32
    %8 = vector.broadcast %cst_7 : f32 to vector<128x128xf32>
    %9 = arith.subf %8, %7 : vector<128x128xf32>
    %10 = math.exp %9 : vector<128x128xf32>
    %cst_8 = arith.constant 1.000000e+00 : f32
    %11 = vector.broadcast %cst_8 : f32 to vector<128x128xf32>
    %12 = arith.addf %11, %10 : vector<128x128xf32>
    %13 = tpu.reciprocal %12 {approx = true} : vector<128x128xf32> -> vector<128x128xf32>
    %14 = arith.mulf %7, %13 : vector<128x128xf32>
    %15 = arith.addf %0, %14 : vector<128x128xf32>
    %16 = arith.truncf %15 : vector<128x128xf32> to vector<128x128xbf16>
    %c0_9 = arith.constant 0 : index
    %c0_10 = arith.constant 0 : index
    %c0_11 = arith.constant 0 : index
    %17 = vector.load %arg7[%c0_9, %c0_10, %c0_11] : memref<2x128x128xbf16, #tpu.memory_space<vmem>>, vector<1x128x128xbf16>
    %18 = vector.shape_cast %17 : vector<1x128x128xbf16> to vector<128x128xbf16>
    %cst_12 = arith.constant dense<0.000000e+00> : vector<128x128xf32>
    %19 = tpu.matmul %16, %18, %cst_12 {dimension_numbers = #tpu.dot_dimension_numbers<[1], [0], [0], [1], [0, 0, 1, 1], [], []>} : vector<128x128xbf16>, vector<128x128xbf16>, vector<128x128xf32> -> vector<128x128xf32>
    %c0_13 = arith.constant 0 : index
    %c0_14 = arith.constant 0 : index
    %c0_15 = arith.constant 0 : index
    %20 = vector.load %arg8[%c0_13, %c0_14, %c0_15] : memref<2x1x128xf32, #tpu.memory_space<vmem>>, vector<1x1x128xf32>
    %21 = vector.shape_cast %20 : vector<1x1x128xf32> to vector<1x128xf32>
    %22 = vector.broadcast %21 : vector<1x128xf32> to vector<128x128xf32>
    %23 = arith.addf %19, %22 : vector<128x128xf32>
    %cst_16 = arith.constant 0.000000e+00 : f32
    %24 = vector.broadcast %cst_16 : f32 to vector<128x128xf32>
    %25 = arith.subf %24, %23 : vector<128x128xf32>
    %26 = math.exp %25 : vector<128x128xf32>
    %cst_17 = arith.constant 1.000000e+00 : f32
    %27 = vector.broadcast %cst_17 : f32 to vector<128x128xf32>
    %28 = arith.addf %27, %26 : vector<128x128xf32>
    %29 = tpu.reciprocal %28 {approx = true} : vector<128x128xf32> -> vector<128x128xf32>
    %30 = arith.mulf %23, %29 : vector<128x128xf32>
    %31 = arith.truncf %30 : vector<128x128xf32> to vector<128x128xbf16>
    %c1 = arith.constant 1 : index
    %c0_18 = arith.constant 0 : index
    %c0_19 = arith.constant 0 : index
    %32 = vector.load %arg7[%c1, %c0_18, %c0_19] : memref<2x128x128xbf16, #tpu.memory_space<vmem>>, vector<1x128x128xbf16>
    %33 = vector.shape_cast %32 : vector<1x128x128xbf16> to vector<128x128xbf16>
    %cst_20 = arith.constant dense<0.000000e+00> : vector<128x128xf32>
    %34 = tpu.matmul %31, %33, %cst_20 {dimension_numbers = #tpu.dot_dimension_numbers<[1], [0], [0], [1], [0, 0, 1, 1], [], []>} : vector<128x128xbf16>, vector<128x128xbf16>, vector<128x128xf32> -> vector<128x128xf32>
    %c1_21 = arith.constant 1 : index
    %c0_22 = arith.constant 0 : index
    %c0_23 = arith.constant 0 : index
    %35 = vector.load %arg8[%c1_21, %c0_22, %c0_23] : memref<2x1x128xf32, #tpu.memory_space<vmem>>, vector<1x1x128xf32>
    %36 = vector.shape_cast %35 : vector<1x1x128xf32> to vector<1x128xf32>
    %37 = vector.broadcast %36 : vector<1x128xf32> to vector<128x128xf32>
    %38 = arith.addf %34, %37 : vector<128x128xf32>
    %cst_24 = arith.constant 0.000000e+00 : f32
    %39 = vector.broadcast %cst_24 : f32 to vector<128x128xf32>
    %40 = arith.subf %39, %38 : vector<128x128xf32>
    %41 = math.exp %40 : vector<128x128xf32>
    %cst_25 = arith.constant 1.000000e+00 : f32
    %42 = vector.broadcast %cst_25 : f32 to vector<128x128xf32>
    %43 = arith.addf %42, %41 : vector<128x128xf32>
    %44 = tpu.reciprocal %43 {approx = true} : vector<128x128xf32> -> vector<128x128xf32>
    %45 = arith.mulf %38, %44 : vector<128x128xf32>
    %c0_26 = arith.constant 0 : index
    %c0_27 = arith.constant 0 : index
    %46 = vector.load %arg4[%c0_26, %c0_27] : memref<1x128xf32, #tpu.memory_space<vmem>>, vector<1x128xf32>
    %c0_28 = arith.constant 0 : index
    %c0_29 = arith.constant 0 : index
    %47 = vector.load %arg3[%c0_28, %c0_29] : memref<128x128xf32, #tpu.memory_space<vmem>>, vector<128x128xf32>
    %48 = vector.broadcast %46 : vector<1x128xf32> to vector<128x128xf32>
    %49 = arith.mulf %48, %47 : vector<128x128xf32>
    %50 = arith.addf %49, %45 : vector<128x128xf32>
    %c0_30 = arith.constant 0 : index
    %c0_31 = arith.constant 0 : index
    %51 = vector.load %arg9[%c0_30, %c0_31] : memref<128x128xf32, #tpu.memory_space<vmem>>, vector<128x128xf32>
    tpu.vector_store %arg9[%c0_30, %c0_31], %50 {strides = array<i32>} : memref<128x128xf32, #tpu.memory_space<vmem>>, vector<128x128xf32>,
    return
  }
  func.func @transform_0(%arg0: i32) -> (i32, i32) {
    %c0_i32 = arith.constant 0 : i32
    %c0_i32_0 = arith.constant 0 : i32
    return %arg0, %c0_i32 : i32, i32
  }
  func.func @transform_1(%arg0: i32) -> (i32, i32) {
    %c0_i32 = arith.constant 0 : i32
    %c0_i32_0 = arith.constant 0 : i32
    %c0_i32_1 = arith.constant 0 : i32
    return %c0_i32, %c0_i32_0 : i32, i32
  }
  func.func @transform_2(%arg0: i32) -> (i32, i32) {
    %c0_i32 = arith.constant 0 : i32
    %c0_i32_0 = arith.constant 0 : i32
    return %arg0, %c0_i32 : i32, i32
  }
  func.func @transform_3(%arg0: i32) -> (i32, i32) {
    %c0_i32 = arith.constant 0 : i32
    %c0_i32_0 = arith.constant 0 : i32
    %c0_i32_1 = arith.constant 0 : i32
    return %c0_i32, %c0_i32_0 : i32, i32
  }
  func.func @transform_4(%arg0: i32) -> (i32, i32) {
    %c0_i32 = arith.constant 0 : i32
    %c0_i32_0 = arith.constant 0 : i32
    %c0_i32_1 = arith.constant 0 : i32
    return %c0_i32, %c0_i32_0 : i32, i32
  }
  func.func @transform_5(%arg0: i32) -> (i32, i32) {
    %c0_i32 = arith.constant 0 : i32
    %c0_i32_0 = arith.constant 0 : i32
    %c0_i32_1 = arith.constant 0 : i32
    return %c0_i32, %c0_i32_0 : i32, i32
  }
  func.func @transform_6(%arg0: i32) -> (i32, i32, i32) {
    %c0_i32 = arith.constant 0 : i32
    %c0_i32_0 = arith.constant 0 : i32
    %c0_i32_1 = arith.constant 0 : i32
    %c0_i32_2 = arith.constant 0 : i32
    return %c0_i32, %c0_i32_0, %c0_i32_1 : i32, i32, i32
  }
  func.func @transform_7(%arg0: i32) -> (i32, i32, i32) {
    %c0_i32 = arith.constant 0 : i32
    %c0_i32_0 = arith.constant 0 : i32
    %c0_i32_1 = arith.constant 0 : i32
    %c0_i32_2 = arith.constant 0 : i32
    return %c0_i32, %c0_i32_0, %c0_i32_1 : i32, i32, i32
  }
  func.func @transform_8(%arg0: i32) -> (i32, i32) {
    %c0_i32 = arith.constant 0 : i32
    %c0_i32_0 = arith.constant 0 : i32
    return %arg0, %c0_i32 : i32, i32
  }
}

module attributes {stable_mosaic.version = 11 : i64} {
  func.func @_level_kernel(%arg0: i32, %arg1: memref<4x8x128xf32, #tpu.memory_space<vmem>>, %arg2: memref<8x128xf32, #tpu.memory_space<vmem>>, %arg3: memref<8x128xf32, #tpu.memory_space<vmem>>, %arg4: memref<1x128xf32, #tpu.memory_space<vmem>>, %arg5: memref<128x128xbf16, #tpu.memory_space<vmem>>, %arg6: memref<1x128xf32, #tpu.memory_space<vmem>>, %arg7: memref<512x128xbf16, #tpu.memory_space<vmem>>, %arg8: memref<1x128xf32, #tpu.memory_space<vmem>>, %arg9: memref<2x128x128xbf16, #tpu.memory_space<vmem>>, %arg10: memref<2x1x128xf32, #tpu.memory_space<vmem>>, %arg11: memref<8x128xf32, #tpu.memory_space<vmem>>) attributes {dimension_semantics = [#tpu.dimension_semantics<parallel>], iteration_bounds = array<i64: 4>, scalar_prefetch = 0 : i64, scratch_operands = 0 : i64, tpu.core_type = #tpu.core_type<tc>, window_params = [{transform_indices = @transform_0, window_bounds = array<i64: 4, 8, 128>}, {pipeline_mode = #tpu.pipeline_mode<synchronous>, transform_indices = @transform_1, window_bounds = array<i64: 8, 128>}, {transform_indices = @transform_2, window_bounds = array<i64: 8, 128>}, {pipeline_mode = #tpu.pipeline_mode<synchronous>, transform_indices = @transform_3, window_bounds = array<i64: 1, 128>}, {pipeline_mode = #tpu.pipeline_mode<synchronous>, transform_indices = @transform_4, window_bounds = array<i64: 128, 128>}, {pipeline_mode = #tpu.pipeline_mode<synchronous>, transform_indices = @transform_5, window_bounds = array<i64: 1, 128>}, {pipeline_mode = #tpu.pipeline_mode<synchronous>, transform_indices = @transform_6, window_bounds = array<i64: 512, 128>}, {pipeline_mode = #tpu.pipeline_mode<synchronous>, transform_indices = @transform_7, window_bounds = array<i64: 1, 128>}, {pipeline_mode = #tpu.pipeline_mode<synchronous>, transform_indices = @transform_8, window_bounds = array<i64: 2, 128, 128>}, {pipeline_mode = #tpu.pipeline_mode<synchronous>, transform_indices = @transform_9, window_bounds = array<i64: 2, 1, 128>}, {transform_indices = @transform_10, window_bounds = array<i64: 8, 128>}]} {
    %c0 = arith.constant 0 : index
    %c0_0 = arith.constant 0 : index
    %c0_1 = arith.constant 0 : index
    %0 = vector.load %arg1[%c0, %c0_0, %c0_1] : memref<4x8x128xf32, #tpu.memory_space<vmem>>, vector<4x8x128xf32>
    %1 = vector.extract_strided_slice %0 {offsets = [0, 0, 0], sizes = [1, 8, 128], strides = [1, 1, 1]} : vector<4x8x128xf32> to vector<1x8x128xf32>
    %2 = vector.shape_cast %1 : vector<1x8x128xf32> to vector<8x128xf32>
    %3 = vector.extract_strided_slice %0 {offsets = [1, 0, 0], sizes = [1, 8, 128], strides = [1, 1, 1]} : vector<4x8x128xf32> to vector<1x8x128xf32>
    %4 = vector.shape_cast %3 : vector<1x8x128xf32> to vector<8x128xf32>
    %5 = vector.extract_strided_slice %0 {offsets = [2, 0, 0], sizes = [1, 8, 128], strides = [1, 1, 1]} : vector<4x8x128xf32> to vector<1x8x128xf32>
    %6 = vector.shape_cast %5 : vector<1x8x128xf32> to vector<8x128xf32>
    %7 = vector.extract_strided_slice %0 {offsets = [3, 0, 0], sizes = [1, 8, 128], strides = [1, 1, 1]} : vector<4x8x128xf32> to vector<1x8x128xf32>
    %8 = vector.shape_cast %7 : vector<1x8x128xf32> to vector<8x128xf32>
    %9 = tpu.concatenate %2, %4, %6, %8 in 1 : vector<8x128xf32>, vector<8x128xf32>, vector<8x128xf32>, vector<8x128xf32> -> vector<8x512xf32>
    %10 = arith.truncf %9 : vector<8x512xf32> to vector<8x512xbf16>
    %c0_2 = arith.constant 0 : index
    %c0_3 = arith.constant 0 : index
    %11 = vector.load %arg7[%c0_2, %c0_3] : memref<512x128xbf16, #tpu.memory_space<vmem>>, vector<512x128xbf16>
    %cst = arith.constant dense<0.000000e+00> : vector<8x128xf32>
    %12 = tpu.matmul %10, %11, %cst {dimension_numbers = #tpu.dot_dimension_numbers<[1], [0], [0], [1], [0, 0, 1, 1], [], []>} : vector<8x512xbf16>, vector<512x128xbf16>, vector<8x128xf32> -> vector<8x128xf32>
    %c0_4 = arith.constant 0 : index
    %c0_5 = arith.constant 0 : index
    %13 = vector.load %arg8[%c0_4, %c0_5] : memref<1x128xf32, #tpu.memory_space<vmem>>, vector<1x128xf32>
    %14 = vector.broadcast %13 : vector<1x128xf32> to vector<8x128xf32>
    %15 = arith.addf %12, %14 : vector<8x128xf32>
    %c0_6 = arith.constant 0 : index
    %c0_7 = arith.constant 0 : index
    %16 = vector.load %arg2[%c0_6, %c0_7] : memref<8x128xf32, #tpu.memory_space<vmem>>, vector<8x128xf32>
    %17 = arith.truncf %16 : vector<8x128xf32> to vector<8x128xbf16>
    %c0_8 = arith.constant 0 : index
    %c0_9 = arith.constant 0 : index
    %18 = vector.load %arg5[%c0_8, %c0_9] : memref<128x128xbf16, #tpu.memory_space<vmem>>, vector<128x128xbf16>
    %cst_10 = arith.constant dense<0.000000e+00> : vector<8x128xf32>
    %19 = tpu.matmul %17, %18, %cst_10 {dimension_numbers = #tpu.dot_dimension_numbers<[1], [0], [0], [1], [0, 0, 1, 1], [], []>} : vector<8x128xbf16>, vector<128x128xbf16>, vector<8x128xf32> -> vector<8x128xf32>
    %c0_11 = arith.constant 0 : index
    %c0_12 = arith.constant 0 : index
    %20 = vector.load %arg6[%c0_11, %c0_12] : memref<1x128xf32, #tpu.memory_space<vmem>>, vector<1x128xf32>
    %21 = vector.broadcast %20 : vector<1x128xf32> to vector<8x128xf32>
    %22 = arith.addf %19, %21 : vector<8x128xf32>
    %cst_13 = arith.constant 0.000000e+00 : f32
    %23 = vector.broadcast %cst_13 : f32 to vector<8x128xf32>
    %24 = arith.subf %23, %22 : vector<8x128xf32>
    %25 = math.exp %24 : vector<8x128xf32>
    %cst_14 = arith.constant 1.000000e+00 : f32
    %26 = vector.broadcast %cst_14 : f32 to vector<8x128xf32>
    %27 = arith.addf %26, %25 : vector<8x128xf32>
    %28 = tpu.reciprocal %27 {approx = true} : vector<8x128xf32> -> vector<8x128xf32>
    %29 = arith.mulf %22, %28 : vector<8x128xf32>
    %30 = arith.addf %15, %29 : vector<8x128xf32>
    %31 = arith.truncf %30 : vector<8x128xf32> to vector<8x128xbf16>
    %c0_15 = arith.constant 0 : index
    %c0_16 = arith.constant 0 : index
    %c0_17 = arith.constant 0 : index
    %32 = vector.load %arg9[%c0_15, %c0_16, %c0_17] : memref<2x128x128xbf16, #tpu.memory_space<vmem>>, vector<1x128x128xbf16>
    %33 = vector.shape_cast %32 : vector<1x128x128xbf16> to vector<128x128xbf16>
    %cst_18 = arith.constant dense<0.000000e+00> : vector<8x128xf32>
    %34 = tpu.matmul %31, %33, %cst_18 {dimension_numbers = #tpu.dot_dimension_numbers<[1], [0], [0], [1], [0, 0, 1, 1], [], []>} : vector<8x128xbf16>, vector<128x128xbf16>, vector<8x128xf32> -> vector<8x128xf32>
    %c0_19 = arith.constant 0 : index
    %c0_20 = arith.constant 0 : index
    %c0_21 = arith.constant 0 : index
    %35 = vector.load %arg10[%c0_19, %c0_20, %c0_21] : memref<2x1x128xf32, #tpu.memory_space<vmem>>, vector<1x1x128xf32>
    %36 = vector.shape_cast %35 : vector<1x1x128xf32> to vector<1x128xf32>
    %37 = vector.broadcast %36 : vector<1x128xf32> to vector<8x128xf32>
    %38 = arith.addf %34, %37 : vector<8x128xf32>
    %cst_22 = arith.constant 0.000000e+00 : f32
    %39 = vector.broadcast %cst_22 : f32 to vector<8x128xf32>
    %40 = arith.subf %39, %38 : vector<8x128xf32>
    %41 = math.exp %40 : vector<8x128xf32>
    %cst_23 = arith.constant 1.000000e+00 : f32
    %42 = vector.broadcast %cst_23 : f32 to vector<8x128xf32>
    %43 = arith.addf %42, %41 : vector<8x128xf32>
    %44 = tpu.reciprocal %43 {approx = true} : vector<8x128xf32> -> vector<8x128xf32>
    %45 = arith.mulf %38, %44 : vector<8x128xf32>
    %46 = arith.truncf %45 : vector<8x128xf32> to vector<8x128xbf16>
    %c1 = arith.constant 1 : index
    %c0_24 = arith.constant 0 : index
    %c0_25 = arith.constant 0 : index
    %47 = vector.load %arg9[%c1, %c0_24, %c0_25] : memref<2x128x128xbf16, #tpu.memory_space<vmem>>, vector<1x128x128xbf16>
    %48 = vector.shape_cast %47 : vector<1x128x128xbf16> to vector<128x128xbf16>
    %cst_26 = arith.constant dense<0.000000e+00> : vector<8x128xf32>
    %49 = tpu.matmul %46, %48, %cst_26 {dimension_numbers = #tpu.dot_dimension_numbers<[1], [0], [0], [1], [0, 0, 1, 1], [], []>} : vector<8x128xbf16>, vector<128x128xbf16>, vector<8x128xf32> -> vector<8x128xf32>
    %c1_27 = arith.constant 1 : index
    %c0_28 = arith.constant 0 : index
    %c0_29 = arith.constant 0 : index
    %50 = vector.load %arg10[%c1_27, %c0_28, %c0_29] : memref<2x1x128xf32, #tpu.memory_space<vmem>>, vector<1x1x128xf32>
    %51 = vector.shape_cast %50 : vector<1x1x128xf32> to vector<1x128xf32>
    %52 = vector.broadcast %51 : vector<1x128xf32> to vector<8x128xf32>
    %53 = arith.addf %49, %52 : vector<8x128xf32>
    %cst_30 = arith.constant 0.000000e+00 : f32
    %54 = vector.broadcast %cst_30 : f32 to vector<8x128xf32>
    %55 = arith.subf %54, %53 : vector<8x128xf32>
    %56 = math.exp %55 : vector<8x128xf32>
    %cst_31 = arith.constant 1.000000e+00 : f32
    %57 = vector.broadcast %cst_31 : f32 to vector<8x128xf32>
    %58 = arith.addf %57, %56 : vector<8x128xf32>
    %59 = tpu.reciprocal %58 {approx = true} : vector<8x128xf32> -> vector<8x128xf32>
    %60 = arith.mulf %53, %59 : vector<8x128xf32>
    %c0_32 = arith.constant 0 : index
    %c0_33 = arith.constant 0 : index
    %61 = vector.load %arg4[%c0_32, %c0_33] : memref<1x128xf32, #tpu.memory_space<vmem>>, vector<1x128xf32>
    %c0_34 = arith.constant 0 : index
    %c0_35 = arith.constant 0 : index
    %62 = vector.load %arg3[%c0_34, %c0_35] : memref<8x128xf32, #tpu.memory_space<vmem>>, vector<8x128xf32>
    %63 = vector.broadcast %61 : vector<1x128xf32> to vector<8x128xf32>
    %64 = arith.mulf %63, %62 : vector<8x128xf32>
    %65 = arith.addf %64, %60 : vector<8x128xf32>
    %c0_36 = arith.constant 0 : index
    %c0_37 = arith.constant 0 : index
    %66 = vector.load %arg11[%c0_36, %c0_37] : memref<8x128xf32, #tpu.memory_space<vmem>>, vector<8x128xf32>
    tpu.vector_store %arg11[%c0_36, %c0_37], %65 {strides = array<i32>} : memref<8x128xf32, #tpu.memory_space<vmem>>, vector<8x128xf32>,
    return
  }
  func.func @transform_0(%arg0: i32) -> (i32, i32, i32) {
    %c0_i32 = arith.constant 0 : i32
    %c0_i32_0 = arith.constant 0 : i32
    %c0_i32_1 = arith.constant 0 : i32
    return %c0_i32, %arg0, %c0_i32_0 : i32, i32, i32
  }
  func.func @transform_1(%arg0: i32) -> (i32, i32) {
    %c0_i32 = arith.constant 0 : i32
    %c0_i32_0 = arith.constant 0 : i32
    %c0_i32_1 = arith.constant 0 : i32
    return %c0_i32, %c0_i32_0 : i32, i32
  }
  func.func @transform_2(%arg0: i32) -> (i32, i32) {
    %c0_i32 = arith.constant 0 : i32
    %c0_i32_0 = arith.constant 0 : i32
    return %arg0, %c0_i32 : i32, i32
  }
  func.func @transform_3(%arg0: i32) -> (i32, i32) {
    %c0_i32 = arith.constant 0 : i32
    %c0_i32_0 = arith.constant 0 : i32
    %c0_i32_1 = arith.constant 0 : i32
    return %c0_i32, %c0_i32_0 : i32, i32
  }
  func.func @transform_4(%arg0: i32) -> (i32, i32) {
    %c0_i32 = arith.constant 0 : i32
    %c0_i32_0 = arith.constant 0 : i32
    %c0_i32_1 = arith.constant 0 : i32
    return %c0_i32, %c0_i32_0 : i32, i32
  }
  func.func @transform_5(%arg0: i32) -> (i32, i32) {
    %c0_i32 = arith.constant 0 : i32
    %c0_i32_0 = arith.constant 0 : i32
    %c0_i32_1 = arith.constant 0 : i32
    return %c0_i32, %c0_i32_0 : i32, i32
  }
  func.func @transform_6(%arg0: i32) -> (i32, i32) {
    %c0_i32 = arith.constant 0 : i32
    %c0_i32_0 = arith.constant 0 : i32
    %c0_i32_1 = arith.constant 0 : i32
    return %c0_i32, %c0_i32_0 : i32, i32
  }
  func.func @transform_7(%arg0: i32) -> (i32, i32) {
    %c0_i32 = arith.constant 0 : i32
    %c0_i32_0 = arith.constant 0 : i32
    %c0_i32_1 = arith.constant 0 : i32
    return %c0_i32, %c0_i32_0 : i32, i32
  }
  func.func @transform_8(%arg0: i32) -> (i32, i32, i32) {
    %c0_i32 = arith.constant 0 : i32
    %c0_i32_0 = arith.constant 0 : i32
    %c0_i32_1 = arith.constant 0 : i32
    %c0_i32_2 = arith.constant 0 : i32
    return %c0_i32, %c0_i32_0, %c0_i32_1 : i32, i32, i32
  }
  func.func @transform_9(%arg0: i32) -> (i32, i32, i32) {
    %c0_i32 = arith.constant 0 : i32
    %c0_i32_0 = arith.constant 0 : i32
    %c0_i32_1 = arith.constant 0 : i32
    %c0_i32_2 = arith.constant 0 : i32
    return %c0_i32, %c0_i32_0, %c0_i32_1 : i32, i32, i32
  }
  func.func @transform_10(%arg0: i32) -> (i32, i32) {
    %c0_i32 = arith.constant 0 : i32
    %c0_i32_0 = arith.constant 0 : i32
    return %arg0, %c0_i32 : i32, i32
  }
}

module attributes {stable_mosaic.version = 11 : i64} {
  func.func @_level_kernel(%arg0: i32, %arg1: memref<4x8x128xf32, #tpu.memory_space<vmem>>, %arg2: memref<8x128xf32, #tpu.memory_space<vmem>>, %arg3: memref<1x128xf32, #tpu.memory_space<vmem>>, %arg4: memref<512x128xbf16, #tpu.memory_space<vmem>>, %arg5: memref<1x128xf32, #tpu.memory_space<vmem>>, %arg6: memref<2x128x128xbf16, #tpu.memory_space<vmem>>, %arg7: memref<2x1x128xf32, #tpu.memory_space<vmem>>, %arg8: memref<8x128xf32, #tpu.memory_space<vmem>>) attributes {dimension_semantics = [#tpu.dimension_semantics<arbitrary>], iteration_bounds = array<i64: 1>, scalar_prefetch = 0 : i64, scratch_operands = 0 : i64, tpu.core_type = #tpu.core_type<tc>, window_params = [{transform_indices = @transform_0, window_bounds = array<i64: 4, 8, 128>}, {transform_indices = @transform_1, window_bounds = array<i64: 8, 128>}, {pipeline_mode = #tpu.pipeline_mode<synchronous>, transform_indices = @transform_2, window_bounds = array<i64: 1, 128>}, {pipeline_mode = #tpu.pipeline_mode<synchronous>, transform_indices = @transform_3, window_bounds = array<i64: 512, 128>}, {pipeline_mode = #tpu.pipeline_mode<synchronous>, transform_indices = @transform_4, window_bounds = array<i64: 1, 128>}, {pipeline_mode = #tpu.pipeline_mode<synchronous>, transform_indices = @transform_5, window_bounds = array<i64: 2, 128, 128>}, {pipeline_mode = #tpu.pipeline_mode<synchronous>, transform_indices = @transform_6, window_bounds = array<i64: 2, 1, 128>}, {transform_indices = @transform_7, window_bounds = array<i64: 8, 128>}]} {
    %c0 = arith.constant 0 : index
    %c0_0 = arith.constant 0 : index
    %c0_1 = arith.constant 0 : index
    %0 = vector.load %arg1[%c0, %c0_0, %c0_1] : memref<4x8x128xf32, #tpu.memory_space<vmem>>, vector<4x8x128xf32>
    %1 = vector.extract_strided_slice %0 {offsets = [0, 0, 0], sizes = [1, 8, 128], strides = [1, 1, 1]} : vector<4x8x128xf32> to vector<1x8x128xf32>
    %2 = vector.shape_cast %1 : vector<1x8x128xf32> to vector<8x128xf32>
    %3 = vector.extract_strided_slice %0 {offsets = [1, 0, 0], sizes = [1, 8, 128], strides = [1, 1, 1]} : vector<4x8x128xf32> to vector<1x8x128xf32>
    %4 = vector.shape_cast %3 : vector<1x8x128xf32> to vector<8x128xf32>
    %5 = vector.extract_strided_slice %0 {offsets = [2, 0, 0], sizes = [1, 8, 128], strides = [1, 1, 1]} : vector<4x8x128xf32> to vector<1x8x128xf32>
    %6 = vector.shape_cast %5 : vector<1x8x128xf32> to vector<8x128xf32>
    %7 = vector.extract_strided_slice %0 {offsets = [3, 0, 0], sizes = [1, 8, 128], strides = [1, 1, 1]} : vector<4x8x128xf32> to vector<1x8x128xf32>
    %8 = vector.shape_cast %7 : vector<1x8x128xf32> to vector<8x128xf32>
    %9 = tpu.concatenate %2, %4, %6, %8 in 1 : vector<8x128xf32>, vector<8x128xf32>, vector<8x128xf32>, vector<8x128xf32> -> vector<8x512xf32>
    %10 = arith.truncf %9 : vector<8x512xf32> to vector<8x512xbf16>
    %c0_2 = arith.constant 0 : index
    %c0_3 = arith.constant 0 : index
    %11 = vector.load %arg4[%c0_2, %c0_3] : memref<512x128xbf16, #tpu.memory_space<vmem>>, vector<512x128xbf16>
    %cst = arith.constant dense<0.000000e+00> : vector<8x128xf32>
    %12 = tpu.matmul %10, %11, %cst {dimension_numbers = #tpu.dot_dimension_numbers<[1], [0], [0], [1], [0, 0, 1, 1], [], []>} : vector<8x512xbf16>, vector<512x128xbf16>, vector<8x128xf32> -> vector<8x128xf32>
    %c0_4 = arith.constant 0 : index
    %c0_5 = arith.constant 0 : index
    %13 = vector.load %arg5[%c0_4, %c0_5] : memref<1x128xf32, #tpu.memory_space<vmem>>, vector<1x128xf32>
    %14 = vector.broadcast %13 : vector<1x128xf32> to vector<8x128xf32>
    %15 = arith.addf %12, %14 : vector<8x128xf32>
    %16 = arith.truncf %15 : vector<8x128xf32> to vector<8x128xbf16>
    %c0_6 = arith.constant 0 : index
    %c0_7 = arith.constant 0 : index
    %c0_8 = arith.constant 0 : index
    %17 = vector.load %arg6[%c0_6, %c0_7, %c0_8] : memref<2x128x128xbf16, #tpu.memory_space<vmem>>, vector<1x128x128xbf16>
    %18 = vector.shape_cast %17 : vector<1x128x128xbf16> to vector<128x128xbf16>
    %cst_9 = arith.constant dense<0.000000e+00> : vector<8x128xf32>
    %19 = tpu.matmul %16, %18, %cst_9 {dimension_numbers = #tpu.dot_dimension_numbers<[1], [0], [0], [1], [0, 0, 1, 1], [], []>} : vector<8x128xbf16>, vector<128x128xbf16>, vector<8x128xf32> -> vector<8x128xf32>
    %c0_10 = arith.constant 0 : index
    %c0_11 = arith.constant 0 : index
    %c0_12 = arith.constant 0 : index
    %20 = vector.load %arg7[%c0_10, %c0_11, %c0_12] : memref<2x1x128xf32, #tpu.memory_space<vmem>>, vector<1x1x128xf32>
    %21 = vector.shape_cast %20 : vector<1x1x128xf32> to vector<1x128xf32>
    %22 = vector.broadcast %21 : vector<1x128xf32> to vector<8x128xf32>
    %23 = arith.addf %19, %22 : vector<8x128xf32>
    %cst_13 = arith.constant 0.000000e+00 : f32
    %24 = vector.broadcast %cst_13 : f32 to vector<8x128xf32>
    %25 = arith.subf %24, %23 : vector<8x128xf32>
    %26 = math.exp %25 : vector<8x128xf32>
    %cst_14 = arith.constant 1.000000e+00 : f32
    %27 = vector.broadcast %cst_14 : f32 to vector<8x128xf32>
    %28 = arith.addf %27, %26 : vector<8x128xf32>
    %29 = tpu.reciprocal %28 {approx = true} : vector<8x128xf32> -> vector<8x128xf32>
    %30 = arith.mulf %23, %29 : vector<8x128xf32>
    %31 = arith.truncf %30 : vector<8x128xf32> to vector<8x128xbf16>
    %c1 = arith.constant 1 : index
    %c0_15 = arith.constant 0 : index
    %c0_16 = arith.constant 0 : index
    %32 = vector.load %arg6[%c1, %c0_15, %c0_16] : memref<2x128x128xbf16, #tpu.memory_space<vmem>>, vector<1x128x128xbf16>
    %33 = vector.shape_cast %32 : vector<1x128x128xbf16> to vector<128x128xbf16>
    %cst_17 = arith.constant dense<0.000000e+00> : vector<8x128xf32>
    %34 = tpu.matmul %31, %33, %cst_17 {dimension_numbers = #tpu.dot_dimension_numbers<[1], [0], [0], [1], [0, 0, 1, 1], [], []>} : vector<8x128xbf16>, vector<128x128xbf16>, vector<8x128xf32> -> vector<8x128xf32>
    %c1_18 = arith.constant 1 : index
    %c0_19 = arith.constant 0 : index
    %c0_20 = arith.constant 0 : index
    %35 = vector.load %arg7[%c1_18, %c0_19, %c0_20] : memref<2x1x128xf32, #tpu.memory_space<vmem>>, vector<1x1x128xf32>
    %36 = vector.shape_cast %35 : vector<1x1x128xf32> to vector<1x128xf32>
    %37 = vector.broadcast %36 : vector<1x128xf32> to vector<8x128xf32>
    %38 = arith.addf %34, %37 : vector<8x128xf32>
    %cst_21 = arith.constant 0.000000e+00 : f32
    %39 = vector.broadcast %cst_21 : f32 to vector<8x128xf32>
    %40 = arith.subf %39, %38 : vector<8x128xf32>
    %41 = math.exp %40 : vector<8x128xf32>
    %cst_22 = arith.constant 1.000000e+00 : f32
    %42 = vector.broadcast %cst_22 : f32 to vector<8x128xf32>
    %43 = arith.addf %42, %41 : vector<8x128xf32>
    %44 = tpu.reciprocal %43 {approx = true} : vector<8x128xf32> -> vector<8x128xf32>
    %45 = arith.mulf %38, %44 : vector<8x128xf32>
    %c0_23 = arith.constant 0 : index
    %c0_24 = arith.constant 0 : index
    %46 = vector.load %arg3[%c0_23, %c0_24] : memref<1x128xf32, #tpu.memory_space<vmem>>, vector<1x128xf32>
    %c0_25 = arith.constant 0 : index
    %c0_26 = arith.constant 0 : index
    %47 = vector.load %arg2[%c0_25, %c0_26] : memref<8x128xf32, #tpu.memory_space<vmem>>, vector<8x128xf32>
    %48 = vector.broadcast %46 : vector<1x128xf32> to vector<8x128xf32>
    %49 = arith.mulf %48, %47 : vector<8x128xf32>
    %50 = arith.addf %49, %45 : vector<8x128xf32>
    %c0_27 = arith.constant 0 : index
    %c0_28 = arith.constant 0 : index
    %51 = vector.load %arg8[%c0_27, %c0_28] : memref<8x128xf32, #tpu.memory_space<vmem>>, vector<8x128xf32>
    tpu.vector_store %arg8[%c0_27, %c0_28], %50 {strides = array<i32>} : memref<8x128xf32, #tpu.memory_space<vmem>>, vector<8x128xf32>,
    return
  }
  func.func @transform_0(%arg0: i32) -> (i32, i32, i32) {
    %c0_i32 = arith.constant 0 : i32
    %c0_i32_0 = arith.constant 0 : i32
    %c0_i32_1 = arith.constant 0 : i32
    return %c0_i32, %arg0, %c0_i32_0 : i32, i32, i32
  }
  func.func @transform_1(%arg0: i32) -> (i32, i32) {
    %c0_i32 = arith.constant 0 : i32
    %c0_i32_0 = arith.constant 0 : i32
    return %arg0, %c0_i32 : i32, i32
  }
  func.func @transform_2(%arg0: i32) -> (i32, i32) {
    %c0_i32 = arith.constant 0 : i32
    %c0_i32_0 = arith.constant 0 : i32
    %c0_i32_1 = arith.constant 0 : i32
    return %c0_i32, %c0_i32_0 : i32, i32
  }
  func.func @transform_3(%arg0: i32) -> (i32, i32) {
    %c0_i32 = arith.constant 0 : i32
    %c0_i32_0 = arith.constant 0 : i32
    %c0_i32_1 = arith.constant 0 : i32
    return %c0_i32, %c0_i32_0 : i32, i32
  }
  func.func @transform_4(%arg0: i32) -> (i32, i32) {
    %c0_i32 = arith.constant 0 : i32
    %c0_i32_0 = arith.constant 0 : i32
    %c0_i32_1 = arith.constant 0 : i32
    return %c0_i32, %c0_i32_0 : i32, i32
  }
  func.func @transform_5(%arg0: i32) -> (i32, i32, i32) {
    %c0_i32 = arith.constant 0 : i32
    %c0_i32_0 = arith.constant 0 : i32
    %c0_i32_1 = arith.constant 0 : i32
    %c0_i32_2 = arith.constant 0 : i32
    return %c0_i32, %c0_i32_0, %c0_i32_1 : i32, i32, i32
  }
  func.func @transform_6(%arg0: i32) -> (i32, i32, i32) {
    %c0_i32 = arith.constant 0 : i32
    %c0_i32_0 = arith.constant 0 : i32
    %c0_i32_1 = arith.constant 0 : i32
    %c0_i32_2 = arith.constant 0 : i32
    return %c0_i32, %c0_i32_0, %c0_i32_1 : i32, i32, i32
  }
  func.func @transform_7(%arg0: i32) -> (i32, i32) {
    %c0_i32 = arith.constant 0 : i32
    %c0_i32_0 = arith.constant 0 : i32
    return %arg0, %c0_i32 : i32, i32
  }
}

</mosaic_0001>

<llo_original>
// kernel: subnet_forward.5
$region0: #{subnet_forward.5}
  #allocation0 [shape = 'u32[]', space=smem, size = 0x4, offset = 0x4, fixed_abs, tag = 'smem constant byte address 0x4 - core index']
  #allocation1 [shape = 'u32[144,128]{1,0:T(1,128)}', space=vmem, size = 0x12000, scoped, tag = 'internal scratch']
  %s0 = inlined_call_operand.vmem [shape: f32[4,128,128], index: 0, kind: input, shape index: {}]
  %s1 = inlined_call_operand.vmem [shape: f32[32,128], index: 1, kind: input, shape index: {}]
  %s2 = inlined_call_operand.vmem [shape: f32[128,128], index: 2, kind: input, shape index: {}, may-alias: {2,10}]
  %s3 = inlined_call_operand.vmem [shape: f32[1,128], index: 3, kind: input, shape index: {}]
  %s4 = inlined_call_operand.vmem [shape: bf16[128,128], index: 4, kind: input, shape index: {}]
  %s5 = inlined_call_operand.vmem [shape: f32[1,128], index: 5, kind: input, shape index: {}]
  %s6 = inlined_call_operand.vmem [shape: bf16[512,128], index: 6, kind: input, shape index: {}]
  %s7 = inlined_call_operand.vmem [shape: f32[1,128], index: 7, kind: input, shape index: {}]
  %s8 = inlined_call_operand.vmem [shape: bf16[2,128,128], index: 8, kind: input, shape index: {}]
  %s9 = inlined_call_operand.vmem [shape: f32[2,1,128], index: 9, kind: input, shape index: {}]
  %s10 = inlined_call_operand.vmem [shape: f32[128,128], index: 10, kind: output, shape index: {}, may-alias: {2,10}]
  %s11 = sld [smem:[#allocation0]]
  $region111: #{subnet_forward.5} parent=0
    _
  %s13 = ssub.s32 1, %s11
  %s14 = scalar_select 0, %s13, %s11
  $region1: #{subnet_forward.5} parent=0
    #allocation2 [shape = 'u8[131072]{0}', space=vmem, size = 0x20000, scoped, tag = 'input window, operand 0']
    loop: start=0, step=1, limit=6
    $region2: #{subnet_forward.5} parent=1 // loop_pre_header
      _
    $region3: #{subnet_forward.5} parent=1 // loop_header
      %s16 = sphi 0, %s20
      %p17 = scmp.ge.s32.totalorder %s16, 6
      %s26 = sphi 0, %s28
      %s29 = sphi 0, %s26
      %s30 = sphi 0, %s29
      %s46 = sphi 0, %s30
      %s50 = sphi 0, %s50
      %s52 = sphi 0, %s50
      %s53 = sphi 0, %s52
      %s67 = sphi 0, %s53
      %s73 = sphi 0, %s75
      %s76 = sphi 0, %s73
      %s77 = sphi 0, %s76
      %s93 = sphi 0, %s77
      %s97 = sphi 0, %s97
      %s99 = sphi 0, %s97
      %s100 = sphi 0, %s99
      %s114 = sphi 0, %s100
      %s118 = sphi 0, %s118
      %s120 = sphi 0, %s118
      %s121 = sphi 0, %s120
      %s135 = sphi 0, %s121
      %s139 = sphi 0, %s139
      %s141 = sphi 0, %s139
      %s142 = sphi 0, %s141
      %s156 = sphi 0, %s142
      %s160 = sphi 0, %s160
      %s162 = sphi 0, %s160
      %s163 = sphi 0, %s162
      %s177 = sphi 0, %s163
      %s181 = sphi 0, %s181
      %s183 = sphi 0, %s181
      %s184 = sphi 0, %s183
      %s198 = sphi 0, %s184
      %s202 = sphi 0, %s202
      %s204 = sphi 0, %s202
      %s205 = sphi 0, %s204
      %s219 = sphi 0, %s205
      %s223 = sphi 0, %s223
      %s225 = sphi 0, %s223
      %s226 = sphi 0, %s225
      %s240 = sphi 0, %s226
      %s246 = sphi 0, %s248
      %s249 = sphi 0, %s246
      %s250 = sphi 0, %s249
      %s266 = sphi 0, %s250
    $region4: #{subnet_forward.5} parent=1 // loop_header_branch
      %19 = sbr.rel (%p17) target = $region8
    $region5: #{subnet_forward.5} parent=1 // loop_body
      %s21 = ssub.s32 %s16, 1
      %s22 = ssub.s32 %s16, 2
      %s23 = sadd.s32 %s16, 1
      %s24 = ssub.s32 %s16, %s23
      %p25 = scmp.eq.s32.totalorder %s24, 0
      %s27 = sadd.s32 %s26, 1
      %s28 = scalar_select %p25, %s26, %s27
      %p31 = pneg %p25
      %p32 = scmp.eq.s32.totalorder %s16, 3
      %p33 = por %p31, %p32
      %p34 = scmp.ne.s32.totalorder %s26, %s29
      %p35 = scmp.eq.s32.totalorder %s16, 0
      %p36 = por %p34, %p35
      %p37 = scmp.ne.s32.totalorder %s26, %s29
      %p38 = scmp.eq.s32.totalorder %s21, 3
      %p39 = por %p37, %p38
      %p40 = scmp.ne.s32.totalorder %s29, %s30
      %p41 = scmp.eq.s32.totalorder %s21, 0
      %p42 = por %p40, %p41
      %p43 = scmp.ne.s32.totalorder %s29, %s30
      %p44 = scmp.eq.s32.totalorder %s22, 3
      %p45 = por %p43, %p44
      %p47 = scmp.ne.s32.totalorder %s30, %s46
      %p48 = scmp.eq.s32.totalorder %s22, 0
      %p49 = por %p47, %p48
      %s51 = sadd.s32 %s50, 1
      %p54 = scmp.eq.s32.totalorder %s16, 3
      %p55 = scmp.ne.s32.totalorder %s50, %s52
      %p56 = scmp.eq.s32.totalorder %s16, 0
      %p57 = por %p55, %p56
      %p58 = scmp.ne.s32.totalorder %s50, %s52
      %p59 = scmp.eq.s32.totalorder %s21, 3
      %p60 = por %p58, %p59
      %p61 = scmp.ne.s32.totalorder %s52, %s53
      %p62 = scmp.eq.s32.totalorder %s21, 0
      %p63 = por %p61, %p62
      %p64 = scmp.ne.s32.totalorder %s52, %s53
      %p65 = scmp.eq.s32.totalorder %s22, 3
      %p66 = por %p64, %p65
      %p68 = scmp.ne.s32.totalorder %s53, %s67
      %p69 = scmp.eq.s32.totalorder %s22, 0
      %p70 = por %p68, %p69
      %s71 = ssub.s32 %s16, %s23
      %p72 = scmp.eq.s32.totalorder %s71, 0
      %s74 = sadd.s32 %s73, 1
      %s75 = scalar_select %p72, %s73, %s74
      %p78 = pneg %p72
      %p79 = scmp.eq.s32.totalorder %s16, 3
      %p80 = por %p78, %p79
      %p81 = scmp.ne.s32.totalorder %s73, %s76
      %p82 = scmp.eq.s32.totalorder %s16, 0
      %p83 = por %p81, %p82
      %p84 = scmp.ne.s32.totalorder %s73, %s76
      %p85 = scmp.eq.s32.totalorder %s21, 3
      %p86 = por %p84, %p85
      %p87 = scmp.ne.s32.totalorder %s76, %s77
      %p88 = scmp.eq.s32.totalorder %s21, 0
      %p89 = por %p87, %p88
      %p90 = scmp.ne.s32.totalorder %s76, %s77
      %p91 = scmp.eq.s32.totalorder %s22, 3
      %p92 = por %p90, %p91
      %p94 = scmp.ne.s32.totalorder %s77, %s93
      %p95 = scmp.eq.s32.totalorder %s22, 0
      %p96 = por %p94, %p95
      %s98 = sadd.s32 %s97, 1
      %p101 = scmp.eq.s32.totalorder %s16, 3
      %p102 = scmp.ne.s32.totalorder %s97, %s99
      %p103 = scmp.eq.s32.totalorder %s16, 0
      %p104 = por %p102, %p103
      %p105 = scmp.ne.s32.totalorder %s97, %s99
      %p106 = scmp.eq.s32.totalorder %s21, 3
      %p107 = por %p105, %p106
      %p108 = scmp.ne.s32.totalorder %s99, %s100
      %p109 = scmp.eq.s32.totalorder %s21, 0
      %p110 = por %p108, %p109
      %p111 = scmp.ne.s32.totalorder %s99, %s100
      %p112 = scmp.eq.s32.totalorder %s22, 3
      %p113 = por %p111, %p112
      %p115 = scmp.ne.s32.totalorder %s100, %s114
      %p116 = scmp.eq.s32.totalorder %s22, 0
      %p117 = por %p115, %p116
      %s119 = sadd.s32 %s118, 1
      %p122 = scmp.eq.s32.totalorder %s16, 3
      %p123 = scmp.ne.s32.totalorder %s118, %s120
      %p124 = scmp.eq.s32.totalorder %s16, 0
      %p125 = por %p123, %p124
      %p126 = scmp.ne.s32.totalorder %s118, %s120
      %p127 = scmp.eq.s32.totalorder %s21, 3
      %p128 = por %p126, %p127
      %p129 = scmp.ne.s32.totalorder %s120, %s121
      %p130 = scmp.eq.s32.totalorder %s21, 0
      %p131 = por %p129, %p130
      %p132 = scmp.ne.s32.totalorder %s120, %s121
      %p133 = scmp.eq.s32.totalorder %s22, 3
      %p134 = por %p132, %p133
      %p136 = scmp.ne.s32.totalorder %s121, %s135
      %p137 = scmp.eq.s32.totalorder %s22, 0
      %p138 = por %p136, %p137
      %s140 = sadd.s32 %s139, 1
      %p143 = scmp.eq.s32.totalorder %s16, 3
      %p144 = scmp.ne.s32.totalorder %s139, %s141
      %p145 = scmp.eq.s32.totalorder %s16, 0
      %p146 = por %p144, %p145
      %p147 = scmp.ne.s32.totalorder %s139, %s141
      %p148 = scmp.eq.s32.totalorder %s21, 3
      %p149 = por %p147, %p148
      %p150 = scmp.ne.s32.totalorder %s141, %s142
      %p151 = scmp.eq.s32.totalorder %s21, 0
      %p152 = por %p150, %p151
      %p153 = scmp.ne.s32.totalorder %s141, %s142
      %p154 = scmp.eq.s32.totalorder %s22, 3
      %p155 = por %p153, %p154
      %p157 = scmp.ne.s32.totalorder %s142, %s156
      %p158 = scmp.eq.s32.totalorder %s22, 0
      %p159 = por %p157, %p158
      %s161 = sadd.s32 %s160, 1
      %p164 = scmp.eq.s32.totalorder %s16, 3
      %p165 = scmp.ne.s32.totalorder %s160, %s162
      %p166 = scmp.eq.s32.totalorder %s16, 0
      %p167 = por %p165, %p166
      %p168 = scmp.ne.s32.totalorder %s160, %s162
      %p169 = scmp.eq.s32.totalorder %s21, 3
      %p170 = por %p168, %p169
      %p171 = scmp.ne.s32.totalorder %s162, %s163
      %p172 = scmp.eq.s32.totalorder %s21, 0
      %p173 = por %p171, %p172
      %p174 = scmp.ne.s32.totalorder %s162, %s163
      %p175 = scmp.eq.s32.totalorder %s22, 3
      %p176 = por %p174, %p175
      %p178 = scmp.ne.s32.totalorder %s163, %s177
      %p179 = scmp.eq.s32.totalorder %s22, 0
      %p180 = por %p178, %p179
      %s182 = sadd.s32 %s181, 1
      %p185 = scmp.eq.s32.totalorder %s16, 3
      %p186 = scmp.ne.s32.totalorder %s181, %s183
      %p187 = scmp.eq.s32.totalorder %s16, 0
      %p188 = por %p186, %p187
      %p189 = scmp.ne.s32.totalorder %s181, %s183
      %p190 = scmp.eq.s32.totalorder %s21, 3
      %p191 = por %p189, %p190
      %p192 = scmp.ne.s32.totalorder %s183, %s184
      %p193 = scmp.eq.s32.totalorder %s21, 0
      %p194 = por %p192, %p193
      %p195 = scmp.ne.s32.totalorder %s183, %s184
      %p196 = scmp.eq.s32.totalorder %s22, 3
      %p197 = por %p195, %p196
      %p199 = scmp.ne.s32.totalorder %s184, %s198
      %p200 = scmp.eq.s32.totalorder %s22, 0
      %p201 = por %p199, %p200
      %s203 = sadd.s32 %s202, 1
      %p206 = scmp.eq.s32.totalorder %s16, 3
      %p207 = scmp.ne.s32.totalorder %s202, %s204
      %p208 = scmp.eq.s32.totalorder %s16, 0
      %p209 = por %p207, %p208
      %p210 = scmp.ne.s32.totalorder %s202, %s204
      %p211 = scmp.eq.s32.totalorder %s21, 3
      %p212 = por %p210, %p211
      %p213 = scmp.ne.s32.totalorder %s204, %s205
      %p214 = scmp.eq.s32.totalorder %s21, 0
      %p215 = por %p213, %p214
      %p216 = scmp.ne.s32.totalorder %s204, %s205
      %p217 = scmp.eq.s32.totalorder %s22, 3
      %p218 = por %p216, %p217
      %p220 = scmp.ne.s32.totalorder %s205, %s219
      %p221 = scmp.eq.s32.totalorder %s22, 0
      %p222 = por %p220, %p221
      %s224 = sadd.s32 %s223, 1
      %p227 = scmp.eq.s32.totalorder %s16, 3
      %p228 = scmp.ne.s32.totalorder %s223, %s225
      %p229 = scmp.eq.s32.totalorder %s16, 0
      %p230 = por %p228, %p229
      %p231 = scmp.ne.s32.totalorder %s223, %s225
      %p232 = scmp.eq.s32.totalorder %s21, 3
      %p233 = por %p231, %p232
      %p234 = scmp.ne.s32.totalorder %s225, %s226
      %p235 = scmp.eq.s32.totalorder %s21, 0
      %p236 = por %p234, %p235
      %p237 = scmp.ne.s32.totalorder %s225, %s226
      %p238 = scmp.eq.s32.totalorder %s22, 3
      %p239 = por %p237, %p238
      %p241 = scmp.ne.s32.totalorder %s226, %s240
      %p242 = scmp.eq.s32.totalorder %s22, 0
      %p243 = por %p241, %p242
      %s244 = ssub.s32 %s16, %s23
      %p245 = scmp.eq.s32.totalorder %s244, 0
      %s247 = sadd.s32 %s246, 1
      %s248 = scalar_select %p245, %s246, %s247
      %p251 = pneg %p245
      %p252 = scmp.eq.s32.totalorder %s16, 3
      %p253 = por %p251, %p252
      %p254 = scmp.ne.s32.totalorder %s246, %s249
      %p255 = scmp.eq.s32.totalorder %s16, 0
      %p256 = por %p254, %p255
      %p257 = scmp.ne.s32.totalorder %s246, %s249
      %p258 = scmp.eq.s32.totalorder %s21, 3
      %p259 = por %p257, %p258
      %p260 = scmp.ne.s32.totalorder %s249, %s250
      %p261 = scmp.eq.s32.totalorder %s21, 0
      %p262 = por %p260, %p261
      %p263 = scmp.ne.s32.totalorder %s249, %s250
      %p264 = scmp.eq.s32.totalorder %s22, 3
      %p265 = por %p263, %p264
      %p267 = scmp.ne.s32.totalorder %s250, %s266
      %p268 = scmp.eq.s32.totalorder %s22, 0
      %p269 = por %p267, %p268
      %p270 = scmp.le.s32.totalorder 1, %s16
      %p271 = scmp.lt.s32.totalorder %s16, 5
      %p272 = pnand %p270, %p271
      %p273 = pneg %p272
      // Predicated region
      $region9: #{subnet_forward.5} parent=5 // pred_check
        _
      $region10: #{subnet_forward.5} parent=5 // pred_check_branch
        %275 = sbr.rel (%p272) target = $region12
      $region11: #{subnet_forward.5} parent=5 // pred_region
        %s276 = ssub.s32 %s16, 1
        // Predicated region
        $region13: #{subnet_forward.5} parent=11 // pred_check
          %p277 = pneg %p63
        $region14: #{subnet_forward.5} parent=11 // pred_check_branch
          %279 = sbr.rel (%p277) target = $region16
        $region15: #{subnet_forward.5} parent=11 // pred_region
          _
        $region16: #{subnet_forward.5} parent=11 // pred_fallthru
          _
        // Predicated region
        $region17: #{subnet_forward.5} parent=11 // pred_check
          %p280 = pneg %p110
        $region18: #{subnet_forward.5} parent=11 // pred_check_branch
          %282 = sbr.rel (%p280) target = $region20
        $region19: #{subnet_forward.5} parent=11 // pred_region
          _
        $region20: #{subnet_forward.5} parent=11 // pred_fallthru
          _
        // Predicated region
        $region21: #{subnet_forward.5} parent=11 // pred_check
          %p283 = pneg %p131
        $region22: #{subnet_forward.5} parent=11 // pred_check_branch
          %285 = sbr.rel (%p283) target = $region24
        $region23: #{subnet_forward.5} parent=11 // pred_region
          _
        $region24: #{subnet_forward.5} parent=11 // pred_fallthru
          _
        // Predicated region
        $region25: #{subnet_forward.5} parent=11 // pred_check
          %p286 = pneg %p152
        $region26: #{subnet_forward.5} parent=11 // pred_check_branch
          %288 = sbr.rel (%p286) target = $region28
        $region27: #{subnet_forward.5} parent=11 // pred_region
          _
        $region28: #{subnet_forward.5} parent=11 // pred_fallthru
          _
        // Predicated region
        $region29: #{subnet_forward.5} parent=11 // pred_check
          %p289 = pneg %p173
        $region30: #{subnet_forward.5} parent=11 // pred_check_branch
          %291 = sbr.rel (%p289) target = $region32
        $region31: #{subnet_forward.5} parent=11 // pred_region
          _
        $region32: #{subnet_forward.5} parent=11 // pred_fallthru
          _
        // Predicated region
        $region33: #{subnet_forward.5} parent=11 // pred_check
          %p292 = pneg %p194
        $region34: #{subnet_forward.5} parent=11 // pred_check_branch
          %294 = sbr.rel (%p292) target = $region36
        $region35: #{subnet_forward.5} parent=11 // pred_region
          _
        $region36: #{subnet_forward.5} parent=11 // pred_fallthru
          _
        // Predicated region
        $region37: #{subnet_forward.5} parent=11 // pred_check
          %p295 = pneg %p215
        $region38: #{subnet_forward.5} parent=11 // pred_check_branch
          %297 = sbr.rel (%p295) target = $region40
        $region39: #{subnet_forward.5} parent=11 // pred_region
          _
        $region40: #{subnet_forward.5} parent=11 // pred_fallthru
          _
        // Predicated region
        $region41: #{subnet_forward.5} parent=11 // pred_check
          %p298 = pneg %p236
        $region42: #{subnet_forward.5} parent=11 // pred_check_branch
          %300 = sbr.rel (%p298) target = $region44
        $region43: #{subnet_forward.5} parent=11 // pred_region
          _
        $region44: #{subnet_forward.5} parent=11 // pred_fallthru
          _
      $region12: #{subnet_forward.5} parent=5 // pred_fallthru
        _
      %p301 = scmp.lt.s32.totalorder %s16, 4
      // Predicated region
      $region45: #{subnet_forward.5} parent=5 // pred_check
        %p302 = pneg %p301
      $region46: #{subnet_forward.5} parent=5 // pred_check_branch
        %304 = sbr.rel (%p302) target = $region48
      $region47: #{subnet_forward.5} parent=5 // pred_region
        // Predicated region
        $region49: #{subnet_forward.5} parent=47 // pred_check
          %p305 = pneg %p36
        $region50: #{subnet_forward.5} parent=47 // pred_check_branch
          %307 = sbr.rel (%p305) target = $region52
        $region51: #{subnet_forward.5} parent=47 // pred_region
          %s308 = sand.u32 %s26, 1
          %s309 = sand.u32 %s26, 1
          %s310 = smul.addr %s309, 128
          %s311 = scalar_lea.vmem [#allocation2], %s310
          %s312 = smul.u32 4, %s16
          %s313 = smul.addr %s312, 8
          %s314 = scalar_lea.vmem %s0, %s313
          // Predicated region
          $region53: #{subnet_forward.5} parent=51 // pred_check
            _
          $region54: #{subnet_forward.5} parent=51 // pred_check_branch
            %316 = sbr.rel (0) target = $region56
          $region55: #{subnet_forward.5} parent=51 // pred_region
            // Predicated region
            $region57: #{subnet_forward.5} parent=55 // pred_check
              _
            $region58: #{subnet_forward.5} parent=55 // pred_check_branch
              %318 = sbr.rel (0) target = $region60
            $region59: #{subnet_forward.5} parent=55 // pred_region
              // Predicated region
              $region72: #{subnet_forward.5} parent=59 // pred_check
                _
              $region73: #{subnet_forward.5} parent=59 // pred_check_branch
                %363 = sbr.rel (0) target = $region75
              $region74: #{subnet_forward.5} parent=59 // pred_region
                loop: start=0, step=1, limit=1
                $region76: #{subnet_forward.5} parent=74 // loop_pre_header
                  _
                $region77: #{subnet_forward.5} parent=74 // loop_header
                  %s365 = sphi 0, %s369
                  %p366 = scmp.ge.s32.totalorder %s365, 1
                  %s370 = sphi %s314, %s314
                  %s371 = sphi %s311, %s311
                $region78: #{subnet_forward.5} parent=74 // loop_header_branch
                  %368 = sbr.rel (%p366) target = $region82
                $region79: #{subnet_forward.5} parent=74 // loop_body
                  %v372 = vld [vmem:[%s370] sm:$0xff]
                  %373 = vst [vmem:[%s371] sm:$0xff] %v372
                  %v374 = vld [vmem:[%s370 + $0x8] sm:$0xff]
                  %375 = vst [vmem:[%s371 + $0x8] sm:$0xff] %v374
                  %v376 = vld [vmem:[%s370 + $0x10] sm:$0xff]
                  %377 = vst [vmem:[%s371 + $0x10] sm:$0xff] %v376
                  %v378 = vld [vmem:[%s370 + $0x18] sm:$0xff]
                  %379 = vst [vmem:[%s371 + $0x18] sm:$0xff] %v378
                  %v380 = vld [vmem:[%s370 + $0x80] sm:$0xff]
                  %381 = vst [vmem:[%s371 + $0x20] sm:$0xff] %v380
                  %v382 = vld [vmem:[%s370 + $0x88] sm:$0xff]
                  %383 = vst [vmem:[%s371 + $0x28] sm:$0xff] %v382
                  %v384 = vld [vmem:[%s370 + $0x90] sm:$0xff]
                  %385 = vst [vmem:[%s371 + $0x30] sm:$0xff] %v384
                  %v386 = vld [vmem:[%s370 + $0x98] sm:$0xff]
                  %387 = vst [vmem:[%s371 + $0x38] sm:$0xff] %v386
                  %v388 = vld [vmem:[%s370 + $0x100] sm:$0xff]
                  %389 = vst [vmem:[%s371 + $0x40] sm:$0xff] %v388
                  %v390 = vld [vmem:[%s370 + $0x108] sm:$0xff]
                  %391 = vst [vmem:[%s371 + $0x48] sm:$0xff] %v390
                  %v392 = vld [vmem:[%s370 + $0x110] sm:$0xff]
                  %393 = vst [vmem:[%s371 + $0x50] sm:$0xff] %v392
                  %v394 = vld [vmem:[%s370 + $0x118] sm:$0xff]
                  %395 = vst [vmem:[%s371 + $0x58] sm:$0xff] %v394
                  %v396 = vld [vmem:[%s370 + $0x180] sm:$0xff]
                  %397 = vst [vmem:[%s371 + $0x60] sm:$0xff] %v396
                  %v398 = vld [vmem:[%s370 + $0x188] sm:$0xff]
                  %399 = vst [vmem:[%s371 + $0x68] sm:$0xff] %v398
                  %v400 = vld [vmem:[%s370 + $0x190] sm:$0xff]
                  %401 = vst [vmem:[%s371 + $0x70] sm:$0xff] %v400
                  %v402 = vld [vmem:[%s370 + $0x198] sm:$0xff]
                  %403 = vst [vmem:[%s371 + $0x78] sm:$0xff] %v402
                $region80: #{subnet_forward.5} parent=74 // loop_footer
                  %s369 = sadd.s32 1, %s365
                $region81: #{subnet_forward.5} parent=74 // loop_footer_branch
                  %364 = sbr.rel target = $region77
                $region82: #{subnet_forward.5} parent=74 // loop_exit
                  _
              $region75: #{subnet_forward.5} parent=59 // pred_fallthru
                _
              // Predicated region
              $region83: #{subnet_forward.5} parent=59 // pred_check
                _
              $region84: #{subnet_forward.5} parent=59 // pred_check_branch
                %405 = sbr.rel target = $region86
              $region85: #{subnet_forward.5} parent=59 // pred_region
                _
              $region86: #{subnet_forward.5} parent=59 // pred_fallthru
                _
            $region60: #{subnet_forward.5} parent=55 // pred_fallthru
              _
            // Predicated region
            $region61: #{subnet_forward.5} parent=55 // pred_check
              _
            $region62: #{subnet_forward.5} parent=55 // pred_check_branch
              %320 = sbr.rel target = $region64
            $region63: #{subnet_forward.5} parent=55 // pred_region
              loop: start=0, step=1, limit=1
              $region65: #{subnet_forward.5} parent=63 // loop_pre_header
                _
              $region66: #{subnet_forward.5} parent=63 // loop_header
                %s323 = sphi 0, %s327
                %p324 = scmp.ge.s32.totalorder %s323, 1
                %s328 = sphi %s314, %s314
                %s329 = sphi %s311, %s311
              $region67: #{subnet_forward.5} parent=63 // loop_header_branch
                %326 = sbr.rel (%p324) target = $region71
              $region68: #{subnet_forward.5} parent=63 // loop_body
                %v330 = vld [vmem:[%s328] sm:$0xff]
                %331 = vst [vmem:[%s329] sm:$0xff] %v330
                %v332 = vld [vmem:[%s328 + $0x8] sm:$0xff]
                %333 = vst [vmem:[%s329 + $0x8] sm:$0xff] %v332
                %v334 = vld [vmem:[%s328 + $0x10] sm:$0xff]
                %335 = vst [vmem:[%s329 + $0x10] sm:$0xff] %v334
                %v336 = vld [vmem:[%s328 + $0x18] sm:$0xff]
                %337 = vst [vmem:[%s329 + $0x18] sm:$0xff] %v336
                %v338 = vld [vmem:[%s328 + $0x80] sm:$0xff]
                %339 = vst [vmem:[%s329 + $0x20] sm:$0xff] %v338
                %v340 = vld [vmem:[%s328 + $0x88] sm:$0xff]
                %341 = vst [vmem:[%s329 + $0x28] sm:$0xff] %v340
                %v342 = vld [vmem:[%s328 + $0x90] sm:$0xff]
                %343 = vst [vmem:[%s329 + $0x30] sm:$0xff] %v342
                %v344 = vld [vmem:[%s328 + $0x98] sm:$0xff]
                %345 = vst [vmem:[%s329 + $0x38] sm:$0xff] %v344
                %v346 = vld [vmem:[%s328 + $0x100] sm:$0xff]
                %347 = vst [vmem:[%s329 + $0x40] sm:$0xff] %v346
                %v348 = vld [vmem:[%s328 + $0x108] sm:$0xff]
                %349 = vst [vmem:[%s329 + $0x48] sm:$0xff] %v348
                %v350 = vld [vmem:[%s328 + $0x110] sm:$0xff]
                %351 = vst [vmem:[%s329 + $0x50] sm:$0xff] %v350
                %v352 = vld [vmem:[%s328 + $0x118] sm:$0xff]
                %353 = vst [vmem:[%s329 + $0x58] sm:$0xff] %v352
                %v354 = vld [vmem:[%s328 + $0x180] sm:$0xff]
                %355 = vst [vmem:[%s329 + $0x60] sm:$0xff] %v354
                %v356 = vld [vmem:[%s328 + $0x188] sm:$0xff]
                %357 = vst [vmem:[%s329 + $0x68] sm:$0xff] %v356
                %v358 = vld [vmem:[%s328 + $0x190] sm:$0xff]
                %359 = vst [vmem:[%s329 + $0x70] sm:$0xff] %v358
                %v360 = vld [vmem:[%s328 + $0x198] sm:$0xff]
                %361 = vst [vmem:[%s329 + $0x78] sm:$0xff] %v360
              $region69: #{subnet_forward.5} parent=63 // loop_footer
                %s327 = sadd.s32 1, %s323
              $region70: #{subnet_forward.5} parent=63 // loop_footer_branch
                %322 = sbr.rel target = $region66
              $region71: #{subnet_forward.5} parent=63 // loop_exit
                _
            $region64: #{subnet_forward.5} parent=55 // pred_fallthru
              _
          $region56: #{subnet_forward.5} parent=51 // pred_fallthru
            _
          %406 = vnop
        $region52: #{subnet_forward.5} parent=47 // pred_fallthru
          _
        // Predicated region
        $region87: #{subnet_forward.5} parent=47 // pred_check
          %p407 = pneg %p83
        $region88: #{subnet_forward.5} parent=47 // pred_check_branch
          %409 = sbr.rel (%p407) target = $region90
        $region89: #{subnet_forward.5} parent=47 // pred_region
          %s410 = smul.u32 4, %s16
          %p411 = scmp.lt.s32.totalorder %s410, 15
          %s412 = scalar_select %p411, %s410, 15
          %s413 = smul.addr %s412, 8
          %s414 = scalar_lea.vmem %s2, %s413
          %s415 = smul.u32 4, %s16
        $region90: #{subnet_forward.5} parent=47 // pred_fallthru
          _
      $region48: #{subnet_forward.5} parent=5 // pred_fallthru
        _
      %p416 = scmp.le.s32.totalorder 1, %s16
      %p417 = scmp.lt.s32.totalorder %s16, 5
      %p418 = pnand %p416, %p417
      %p419 = pneg %p418
      // Predicated region
      $region91: #{subnet_forward.5} parent=5 // pred_check
        _
      $region92: #{subnet_forward.5} parent=5 // pred_check_branch
        %421 = sbr.rel (%p418) target = $region94
      $region93: #{subnet_forward.5} parent=5 // pred_region
        %s422 = ssub.s32 %s16, 1
        %s423 = sand.u32 %s29, 1
        %s424 = sand.u32 %s29, 1
        %s425 = smul.addr %s424, 128
        %s426 = scalar_lea.vmem [#allocation2], %s425
        // Predicated region
        $region95: #{subnet_forward.5} parent=93 // pred_check
          %p427 = pneg %p42
        $region96: #{subnet_forward.5} parent=93 // pred_check_branch
          %429 = sbr.rel (%p427) target = $region98
        $region97: #{subnet_forward.5} parent=93 // pred_region
          _
        $region98: #{subnet_forward.5} parent=93 // pred_fallthru
          _
        %s430 = sand.u32 %s29, 1
        %s431 = sand.u32 %s29, 1
        %s432 = smul.addr %s431, 128
        %s433 = scalar_lea.vmem [#allocation2], %s432
        %p434 = pneg %p42
        %p435 = pneg %p39
        %p436 = pneg %p63
        %p437 = pneg %p60
        %s438 = smul.u32 4, %s21
        %p439 = scmp.lt.s32.totalorder %s438, 15
        %s440 = scalar_select %p439, %s438, 15
        %s441 = smul.addr %s440, 8
        %s442 = scalar_lea.vmem %s2, %s441
        %p443 = pneg %p89
        %p444 = pneg %p86
        %p445 = pneg %p110
        %p446 = pneg %p107
        %p447 = pneg %p131
        %p448 = pneg %p128
        %p449 = pneg %p152
        %p450 = pneg %p149
        %p451 = pneg %p173
        %p452 = pneg %p170
        %p453 = pneg %p194
        %p454 = pneg %p191
        %p455 = pneg %p215
        %p456 = pneg %p212
        %p457 = pneg %p236
        %p458 = pneg %p233
        %p459 = pneg %p262
        %p460 = pneg %p259
        %s461 = smul.u32 4, %s21
        %p462 = scmp.lt.s32.totalorder %s461, 15
        %s463 = scalar_select %p462, %s461, 15
        %s464 = smul.addr %s463, 8
        %s465 = scalar_lea.vmem %s10, %s464
        %s466 = smul.u32 4, %s21
        %s467 = smul.u32 4, %s21
        %p468 = scmp.lt.s32.totalorder %s467, 15
        %s469 = scalar_select %p468, %s467, 15
        %s470 = smul.addr %s469, 8
        %s471 = scalar_lea.vmem %s2, %s470
        %s472 = smul.u32 4, %s21
        %s473 = smul.u32 4, %s21
        %p474 = scmp.lt.s32.totalorder %s473, 15
        %s475 = scalar_select %p474, %s473, 15
        %s476 = smul.addr %s475, 8
        %s477 = scalar_lea.vmem %s10, %s476
        %s478 = smul.u32 4, %s21
        %v480 = vld [vmem:[%s426] sm:$0xff]
        %v481 = vld [vmem:[%s426 + $0x8] sm:$0xff]
        %v482 = vld [vmem:[%s426 + $0x10] sm:$0xff]
        %v483 = vld [vmem:[%s426 + $0x18] sm:$0xff]
        %v484 = vld [vmem:[%s426 + $0x20] sm:$0xff]
        %v485 = vld [vmem:[%s426 + $0x28] sm:$0xff]
        %v486 = vld [vmem:[%s426 + $0x30] sm:$0xff]
        %v487 = vld [vmem:[%s426 + $0x38] sm:$0xff]
        %v488 = vld [vmem:[%s426 + $0x40] sm:$0xff]
        %v489 = vld [vmem:[%s426 + $0x48] sm:$0xff]
        %v490 = vld [vmem:[%s426 + $0x50] sm:$0xff]
        %v491 = vld [vmem:[%s426 + $0x58] sm:$0xff]
        %v492 = vld [vmem:[%s426 + $0x60] sm:$0xff]
        %v493 = vld [vmem:[%s426 + $0x68] sm:$0xff]
        %v494 = vld [vmem:[%s426 + $0x70] sm:$0xff]
        %v495 = vld [vmem:[%s426 + $0x78] sm:$0xff]
        %v496 = vpack.c.bf16 %v481, %v480
        %v497 = vpack.c.bf16 %v485, %v484
        %v498 = vpack.c.bf16 %v489, %v488
        %v499 = vpack.c.bf16 %v493, %v492
        %v500 = vpack.c.bf16 %v483, %v482
        %v501 = vpack.c.bf16 %v487, %v486
        %v502 = vpack.c.bf16 %v491, %v490
        %v503 = vpack.c.bf16 %v495, %v494
        %v504 = vld [vmem:[%s6] sm:$0xf]
        %v505 = vld [vmem:[%s6 + $0x4] sm:$0xf]
        %v506 = vld [vmem:[%s6 + $0x8] sm:$0xf]
        %v507 = vld [vmem:[%s6 + $0xc] sm:$0xf]
        %v508 = vld [vmem:[%s6 + $0x10] sm:$0xf]
        %v509 = vld [vmem:[%s6 + $0x14] sm:$0xf]
        %v510 = vld [vmem:[%s6 + $0x18] sm:$0xf]
        %v511 = vld [vmem:[%s6 + $0x1c] sm:$0xf]
        %v512 = vld [vmem:[%s6 + $0x20] sm:$0xf]
        %v513 = vld [vmem:[%s6 + $0x24] sm:$0xf]
        %v514 = vld [vmem:[%s6 + $0x28] sm:$0xf]
        %v515 = vld [vmem:[%s6 + $0x2c] sm:$0xf]
        %v516 = vld [vmem:[%s6 + $0x30] sm:$0xf]
        %v517 = vld [vmem:[%s6 + $0x34] sm:$0xf]
        %v518 = vld [vmem:[%s6 + $0x38] sm:$0xf]
        %v519 = vld [vmem:[%s6 + $0x3c] sm:$0xf]
        %v520 = vld [vmem:[%s6 + $0x40] sm:$0xf]
        %v521 = vld [vmem:[%s6 + $0x44] sm:$0xf]
        %v522 = vld [vmem:[%s6 + $0x48] sm:$0xf]
        %v523 = vld [vmem:[%s6 + $0x4c] sm:$0xf]
        %v524 = vld [vmem:[%s6 + $0x50] sm:$0xf]
        %v525 = vld [vmem:[%s6 + $0x54] sm:$0xf]
        %v526 = vld [vmem:[%s6 + $0x58] sm:$0xf]
        %v527 = vld [vmem:[%s6 + $0x5c] sm:$0xf]
        %v528 = vld [vmem:[%s6 + $0x60] sm:$0xf]
        %v529 = vld [vmem:[%s6 + $0x64] sm:$0xf]
        %v530 = vld [vmem:[%s6 + $0x68] sm:$0xf]
        %v531 = vld [vmem:[%s6 + $0x6c] sm:$0xf]
        %v532 = vld [vmem:[%s6 + $0x70] sm:$0xf]
        %v533 = vld [vmem:[%s6 + $0x74] sm:$0xf]
        %v534 = vld [vmem:[%s6 + $0x78] sm:$0xf]
        %v535 = vld [vmem:[%s6 + $0x7c] sm:$0xf]
        %v536 = vld [vmem:[%s6 + $0x80] sm:$0xf]
        %v537 = vld [vmem:[%s6 + $0x84] sm:$0xf]
        %v538 = vld [vmem:[%s6 + $0x88] sm:$0xf]
        %v539 = vld [vmem:[%s6 + $0x8c] sm:$0xf]
        %v540 = vld [vmem:[%s6 + $0x90] sm:$0xf]
        %v541 = vld [vmem:[%s6 + $0x94] sm:$0xf]
        %v542 = vld [vmem:[%s6 + $0x98] sm:$0xf]
        %v543 = vld [vmem:[%s6 + $0x9c] sm:$0xf]
        %v544 = vld [vmem:[%s6 + $0xa0] sm:$0xf]
        %v545 = vld [vmem:[%s6 + $0xa4] sm:$0xf]
        %v546 = vld [vmem:[%s6 + $0xa8] sm:$0xf]
        %v547 = vld [vmem:[%s6 + $0xac] sm:$0xf]
        %v548 = vld [vmem:[%s6 + $0xb0] sm:$0xf]
        %v549 = vld [vmem:[%s6 + $0xb4] sm:$0xf]
        %v550 = vld [vmem:[%s6 + $0xb8] sm:$0xf]
        %v551 = vld [vmem:[%s6 + $0xbc] sm:$0xf]
        %v552 = vld [vmem:[%s6 + $0xc0] sm:$0xf]
        %v553 = vld [vmem:[%s6 + $0xc4] sm:$0xf]
        %v554 = vld [vmem:[%s6 + $0xc8] sm:$0xf]
        %v555 = vld [vmem:[%s6 + $0xcc] sm:$0xf]
        %v556 = vld [vmem:[%s6 + $0xd0] sm:$0xf]
        %v557 = vld [vmem:[%s6 + $0xd4] sm:$0xf]
        %v558 = vld [vmem:[%s6 + $0xd8] sm:$0xf]
        %v559 = vld [vmem:[%s6 + $0xdc] sm:$0xf]
        %v560 = vld [vmem:[%s6 + $0xe0] sm:$0xf]
        %v561 = vld [vmem:[%s6 + $0xe4] sm:$0xf]
        %v562 = vld [vmem:[%s6 + $0xe8] sm:$0xf]
        %v563 = vld [vmem:[%s6 + $0xec] sm:$0xf]
        %v564 = vld [vmem:[%s6 + $0xf0] sm:$0xf]
        %v565 = vld [vmem:[%s6 + $0xf4] sm:$0xf]
        %v566 = vld [vmem:[%s6 + $0xf8] sm:$0xf]
        %v567 = vld [vmem:[%s6 + $0xfc] sm:$0xf]
        %v568 = vld [vmem:[%s7] sm:$0x1]
        %v570 = vlaneseq
        %v571 = vshrl.u32 %v570, 7
        %v572 = vsub.s32 0, %v571
        %v573 = vrot.slane %v568, %v572
        %v639 = vunpack.c.l.b16 %v504
        %v640 = vunpack.c.l.b16 %v505
        %v641 = vunpack.c.l.b16 %v506
        %v642 = vunpack.c.l.b16 %v507
        %v643 = vunpack.c.l.b16 %v508
        %v644 = vunpack.c.l.b16 %v509
        %v645 = vunpack.c.l.b16 %v510
        %v646 = vunpack.c.l.b16 %v511
        %v647 = vunpack.c.l.b16 %v512
        %v648 = vunpack.c.l.b16 %v513
        %v649 = vunpack.c.l.b16 %v514
        %v650 = vunpack.c.l.b16 %v515
        %v651 = vunpack.c.l.b16 %v516
        %v652 = vunpack.c.l.b16 %v517
        %v653 = vunpack.c.l.b16 %v518
        %v654 = vunpack.c.l.b16 %v519
        %v655 = vunpack.c.l.b16 %v520
        %v656 = vunpack.c.l.b16 %v521
        %v657 = vunpack.c.l.b16 %v522
        %v658 = vunpack.c.l.b16 %v523
        %v659 = vunpack.c.l.b16 %v524
        %v660 = vunpack.c.l.b16 %v525
        %v661 = vunpack.c.l.b16 %v526
        %v662 = vunpack.c.l.b16 %v527
        %v663 = vunpack.c.l.b16 %v528
        %v664 = vunpack.c.l.b16 %v529
        %v665 = vunpack.c.l.b16 %v530
        %v666 = vunpack.c.l.b16 %v531
        %v667 = vunpack.c.l.b16 %v532
        %v668 = vunpack.c.l.b16 %v533
        %v669 = vunpack.c.l.b16 %v534
        %v670 = vunpack.c.l.b16 %v535
        %v671 = vunpack.c.l.b16 %v536
        %v672 = vunpack.c.l.b16 %v537
        %v673 = vunpack.c.l.b16 %v538
        %v674 = vunpack.c.l.b16 %v539
        %v675 = vunpack.c.l.b16 %v540
        %v676 = vunpack.c.l.b16 %v541
        %v677 = vunpack.c.l.b16 %v542
        %v678 = vunpack.c.l.b16 %v543
        %v679 = vunpack.c.l.b16 %v544
        %v680 = vunpack.c.l.b16 %v545
        %v681 = vunpack.c.l.b16 %v546
        %v682 = vunpack.c.l.b16 %v547
        %v683 = vunpack.c.l.b16 %v548
        %v684 = vunpack.c.l.b16 %v549
        %v685 = vunpack.c.l.b16 %v550
        %v686 = vunpack.c.l.b16 %v551
        %v687 = vunpack.c.l.b16 %v552
        %v688 = vunpack.c.l.b16 %v553
        %v689 = vunpack.c.l.b16 %v554
        %v690 = vunpack.c.l.b16 %v555
        %v691 = vunpack.c.l.b16 %v556
        %v692 = vunpack.c.l.b16 %v557
        %v693 = vunpack.c.l.b16 %v558
        %v694 = vunpack.c.l.b16 %v559
        %v695 = vunpack.c.l.b16 %v560
        %v696 = vunpack.c.l.b16 %v561
        %v697 = vunpack.c.l.b16 %v562
        %v698 = vunpack.c.l.b16 %v563
        %v699 = vunpack.c.l.b16 %v564
        %v700 = vunpack.c.l.b16 %v565
        %v701 = vunpack.c.l.b16 %v566
        %v702 = vunpack.c.l.b16 %v567
        %v703 = vpack.c.b16 %v640, %v639
        %v704 = vpack.c.b16 %v642, %v641
        %v705 = vpack.c.b16 %v644, %v643
        %v706 = vpack.c.b16 %v646, %v645
        %v707 = vpack.c.b16 %v648, %v647
        %v708 = vpack.c.b16 %v650, %v649
        %v709 = vpack.c.b16 %v652, %v651
        %v710 = vpack.c.b16 %v654, %v653
        %v711 = vpack.c.b16 %v656, %v655
        %v712 = vpack.c.b16 %v658, %v657
        %v713 = vpack.c.b16 %v660, %v659
        %v714 = vpack.c.b16 %v662, %v661
        %v715 = vpack.c.b16 %v664, %v663
        %v716 = vpack.c.b16 %v666, %v665
        %v717 = vpack.c.b16 %v668, %v667
        %v718 = vpack.c.b16 %v670, %v669
        %v719 = vpack.c.b16 %v672, %v671
        %v720 = vpack.c.b16 %v674, %v673
        %v721 = vpack.c.b16 %v676, %v675
        %v722 = vpack.c.b16 %v678, %v677
        %v723 = vpack.c.b16 %v680, %v679
        %v724 = vpack.c.b16 %v682, %v681
        %v725 = vpack.c.b16 %v684, %v683
        %v726 = vpack.c.b16 %v686, %v685
        %v727 = vpack.c.b16 %v688, %v687
        %v728 = vpack.c.b16 %v690, %v689
        %v729 = vpack.c.b16 %v692, %v691
        %v730 = vpack.c.b16 %v694, %v693
        %v731 = vpack.c.b16 %v696, %v695
        %v732 = vpack.c.b16 %v698, %v697
        %v733 = vpack.c.b16 %v700, %v699
        %v734 = vpack.c.b16 %v702, %v701
        %767 = vmatprep.subr.bf16.mxu0 0
        %768 = vmatpush1.bf16.msra.mxu0 %v703
        %769 = vmatprep.subr.bf16.mxu0 0
        %770 = vmatpush1.bf16.msra.mxu0 %v704
        %771 = vmatprep.subr.bf16.mxu0 0
        %772 = vmatpush1.bf16.msra.mxu0 %v705
        %773 = vmatprep.subr.bf16.mxu0 0
        %774 = vmatpush1.bf16.msra.mxu0 %v706
        %775 = vmatprep.subr.bf16.mxu0 0
        %776 = vmatpush1.bf16.msra.mxu0 %v707
        %777 = vmatprep.subr.bf16.mxu0 0
        %778 = vmatpush1.bf16.msra.mxu0 %v708
        %779 = vmatprep.subr.bf16.mxu0 0
        %780 = vmatpush1.bf16.msra.mxu0 %v709
        %781 = vmatprep.subr.bf16.mxu0 0
        %782 = vmatpush1.bf16.msra.mxu0 %v710
        %783 = vmatprep.subr.bf16.mxu0 0
        %784 = vmatpush1.bf16.msra.mxu0 %v711
        %785 = vmatprep.subr.bf16.mxu0 0
        %786 = vmatpush1.bf16.msra.mxu0 %v712
        %787 = vmatprep.subr.bf16.mxu0 0
        %788 = vmatpush1.bf16.msra.mxu0 %v713
        %789 = vmatprep.subr.bf16.mxu0 0
        %790 = vmatpush1.bf16.msra.mxu0 %v714
        %791 = vmatprep.subr.bf16.mxu0 0
        %792 = vmatpush1.bf16.msra.mxu0 %v715
        %793 = vmatprep.subr.bf16.mxu0 0
        %794 = vmatpush1.bf16.msra.mxu0 %v716
        %795 = vmatprep.subr.bf16.mxu0 0
        %796 = vmatpush1.bf16.msra.mxu0 %v717
        %797 = vmatprep.subr.bf16.mxu0 0
        %798 = vmatpush1.bf16.msra.mxu0 %v718
        %799 = vmatprep.mubr.bf16.mxu0 %v497
        %800 = vmatmul.mubr.bf16.gmra.mrb[0].mxu0 %v496
        %v801 = vpop.f32.mrb[0].mxu0
        %v802 = vadd.f32 %v573, %v801
        %v803 = vpop.f32.mrb[0].mxu0
        %v804 = vpop.f32.mrb[0].mxu0
        %v805 = vadd.f32 %v573, %v804
        %v806 = vpop.f32.mrb[0].mxu0
        %807 = vmatprep.mubr.bf16.mxu0 %v501
        %808 = vmatmul.mubr.bf16.gmra.mrb[0].mxu0 %v500
        %v809 = vpop.f32.mrb[0].mxu0
        %v810 = vadd.f32 %v573, %v809
        %v811 = vpop.f32.mrb[0].mxu0
        %v812 = vpop.f32.mrb[0].mxu0
        %v813 = vadd.f32 %v573, %v812
        %v814 = vpop.f32.mrb[0].mxu0
        %815 = vdwg.mxu0
        %816 = vmatprep.subr.bf16.mxu0 0
        %817 = vmatpush1.bf16.msra.mxu0 %v719
        %818 = vmatprep.subr.bf16.mxu0 0
        %819 = vmatpush1.bf16.msra.mxu0 %v720
        %820 = vmatprep.subr.bf16.mxu0 0
        %821 = vmatpush1.bf16.msra.mxu0 %v721
        %822 = vmatprep.subr.bf16.mxu0 0
        %823 = vmatpush1.bf16.msra.mxu0 %v722
        %824 = vmatprep.subr.bf16.mxu0 0
        %825 = vmatpush1.bf16.msra.mxu0 %v723
        %826 = vmatprep.subr.bf16.mxu0 0
        %827 = vmatpush1.bf16.msra.mxu0 %v724
        %828 = vmatprep.subr.bf16.mxu0 0
        %829 = vmatpush1.bf16.msra.mxu0 %v725
        %830 = vmatprep.subr.bf16.mxu0 0
        %831 = vmatpush1.bf16.msra.mxu0 %v726
        %832 = vmatprep.subr.bf16.mxu0 0
        %833 = vmatpush1.bf16.msra.mxu0 %v727
        %834 = vmatprep.subr.bf16.mxu0 0
        %835 = vmatpush1.bf16.msra.mxu0 %v728
        %836 = vmatprep.subr.bf16.mxu0 0
        %837 = vmatpush1.bf16.msra.mxu0 %v729
        %838 = vmatprep.subr.bf16.mxu0 0
        %839 = vmatpush1.bf16.msra.mxu0 %v730
        %840 = vmatprep.subr.bf16.mxu0 0
        %841 = vmatpush1.bf16.msra.mxu0 %v731
        %842 = vmatprep.subr.bf16.mxu0 0
        %843 = vmatpush1.bf16.msra.mxu0 %v732
        %844 = vmatprep.subr.bf16.mxu0 0
        %845 = vmatpush1.bf16.msra.mxu0 %v733
        %846 = vmatprep.subr.bf16.mxu0 0
        %847 = vmatpush1.bf16.msra.mxu0 %v734
        %848 = vmatprep.mubr.bf16.mxu0 %v499
        %849 = vmatmul.mubr.bf16.gmra.mrb[0].mxu0 %v498
        %v850 = vpop.f32.mrb[0].mxu0
        %v851 = vadd.f32 %v802, %v850
        %v852 = vpop.f32.mrb[0].mxu0
        %v853 = vpop.f32.mrb[0].mxu0
        %v854 = vadd.f32 %v805, %v853
        %v855 = vpop.f32.mrb[0].mxu0
        %856 = vmatprep.mubr.bf16.mxu0 %v503
        %857 = vmatmul.mubr.bf16.gmra.mrb[0].mxu0 %v502
        %v858 = vpop.f32.mrb[0].mxu0
        %v859 = vadd.f32 %v810, %v858
        %v860 = vpop.f32.mrb[0].mxu0
        %v861 = vpop.f32.mrb[0].mxu0
        %v862 = vadd.f32 %v813, %v861
        %v863 = vpop.f32.mrb[0].mxu0
        %864 = vdwg.mxu0
        %v865 = vld [vmem:[%s1] sm:$0xff]
        %v866 = vld [vmem:[%s1 + $0x8] sm:$0xff]
        %v867 = vld [vmem:[%s1 + $0x10] sm:$0xff]
        %v868 = vld [vmem:[%s1 + $0x18] sm:$0xff]
        %v869 = vpack.c.bf16 %v866, %v865
        %v870 = vpack.c.bf16 %v868, %v867
        %v871 = vld [vmem:[%s4] sm:$0xf]
        %v872 = vld [vmem:[%s4 + $0x4] sm:$0xf]
        %v873 = vld [vmem:[%s4 + $0x8] sm:$0xf]
        %v874 = vld [vmem:[%s4 + $0xc] sm:$0xf]
        %v875 = vld [vmem:[%s4 + $0x10] sm:$0xf]
        %v876 = vld [vmem:[%s4 + $0x14] sm:$0xf]
        %v877 = vld [vmem:[%s4 + $0x18] sm:$0xf]
        %v878 = vld [vmem:[%s4 + $0x1c] sm:$0xf]
        %v879 = vld [vmem:[%s4 + $0x20] sm:$0xf]
        %v880 = vld [vmem:[%s4 + $0x24] sm:$0xf]
        %v881 = vld [vmem:[%s4 + $0x28] sm:$0xf]
        %v882 = vld [vmem:[%s4 + $0x2c] sm:$0xf]
        %v883 = vld [vmem:[%s4 + $0x30] sm:$0xf]
        %v884 = vld [vmem:[%s4 + $0x34] sm:$0xf]
        %v885 = vld [vmem:[%s4 + $0x38] sm:$0xf]
        %v886 = vld [vmem:[%s4 + $0x3c] sm:$0xf]
        %v887 = vld [vmem:[%s5] sm:$0x1]
        %v889 = vlaneseq
        %v890 = vshrl.u32 %v889, 7
        %v891 = vsub.s32 0, %v890
        %v892 = vrot.slane %v887, %v891
        %v910 = vunpack.c.l.b16 %v871
        %v911 = vunpack.c.l.b16 %v872
        %v912 = vunpack.c.l.b16 %v873
        %v913 = vunpack.c.l.b16 %v874
        %v914 = vunpack.c.l.b16 %v875
        %v915 = vunpack.c.l.b16 %v876
        %v916 = vunpack.c.l.b16 %v877
        %v917 = vunpack.c.l.b16 %v878
        %v918 = vunpack.c.l.b16 %v879
        %v919 = vunpack.c.l.b16 %v880
        %v920 = vunpack.c.l.b16 %v881
        %v921 = vunpack.c.l.b16 %v882
        %v922 = vunpack.c.l.b16 %v883
        %v923 = vunpack.c.l.b16 %v884
        %v924 = vunpack.c.l.b16 %v885
        %v925 = vunpack.c.l.b16 %v886
        %v926 = vpack.c.b16 %v911, %v910
        %v927 = vpack.c.b16 %v913, %v912
        %v928 = vpack.c.b16 %v915, %v914
        %v929 = vpack.c.b16 %v917, %v916
        %v930 = vpack.c.b16 %v919, %v918
        %v931 = vpack.c.b16 %v921, %v920
        %v932 = vpack.c.b16 %v923, %v922
        %v933 = vpack.c.b16 %v925, %v924
        %942 = vmatprep.subr.bf16.mxu0 0
        %943 = vmatpush1.bf16.msra.mxu0 %v926
        %944 = vmatprep.subr.bf16.mxu0 0
        %945 = vmatpush1.bf16.msra.mxu0 %v927
        %946 = vmatprep.subr.bf16.mxu0 0
        %947 = vmatpush1.bf16.msra.mxu0 %v928
        %948 = vmatprep.subr.bf16.mxu0 0
        %949 = vmatpush1.bf16.msra.mxu0 %v929
        %950 = vmatprep.subr.bf16.mxu0 0
        %951 = vmatpush1.bf16.msra.mxu0 %v930
        %952 = vmatprep.subr.bf16.mxu0 0
        %953 = vmatpush1.bf16.msra.mxu0 %v931
        %954 = vmatprep.subr.bf16.mxu0 0
        %955 = vmatpush1.bf16.msra.mxu0 %v932
        %956 = vmatprep.subr.bf16.mxu0 0
        %957 = vmatpush1.bf16.msra.mxu0 %v933
        %958 = vmatprep.subr.bf16.mxu0 0
        %959 = vmatpush1.bf16.msra.mxu0 0
        %960 = vmatprep.subr.bf16.mxu0 0
        %961 = vmatpush1.bf16.msra.mxu0 0
        %962 = vmatprep.subr.bf16.mxu0 0
        %963 = vmatpush1.bf16.msra.mxu0 0
        %964 = vmatprep.subr.bf16.mxu0 0
        %965 = vmatpush1.bf16.msra.mxu0 0
        %966 = vmatprep.subr.bf16.mxu0 0
        %967 = vmatpush1.bf16.msra.mxu0 0
        %968 = vmatprep.subr.bf16.mxu0 0
        %969 = vmatpush1.bf16.msra.mxu0 0
        %970 = vmatprep.subr.bf16.mxu0 0
        %971 = vmatpush1.bf16.msra.mxu0 0
        %972 = vmatprep.subr.bf16.mxu0 0
        %973 = vmatpush1.bf16.msra.mxu0 0
        %974 = vmatprep.mubr.bf16.mxu0 0
        %975 = vmatmul.mubr.bf16.gmra.mrb[0].mxu0 %v869
        %v976 = vpop.f32.mrb[0].mxu0
        %v977 = vadd.f32 %v892, %v976
        %v978 = vpop.f32.mrb[0].mxu0
        %v979 = vpop.f32.mrb[0].mxu0
        %v980 = vadd.f32 %v892, %v979
        %v981 = vpop.f32.mrb[0].mxu0
        %982 = vmatprep.mubr.bf16.mxu0 0
        %983 = vmatmul.mubr.bf16.gmra.mrb[0].mxu0 %v870
        %v984 = vpop.f32.mrb[0].mxu0
        %v985 = vadd.f32 %v892, %v984
        %v986 = vpop.f32.mrb[0].mxu0
        %v987 = vpop.f32.mrb[0].mxu0
        %v988 = vadd.f32 %v892, %v987
        %v989 = vpop.f32.mrb[0].mxu0
        %990 = vdwg.mxu0
        %v991 = vsub.f32 0.0, %v977
        %v992 = vsub.f32 0.0, %v980
        %v993 = vsub.f32 0.0, %v985
        %v994 = vsub.f32 0.0, %v988
        %v995 = vmul.f32 %v991, 1.442695
        %v996 = vpow.pop %v995
        %v997 = vmul.f32 %v992, 1.442695
        %v998 = vpow.pop %v997
        %v999 = vmul.f32 %v993, 1.442695
        %v1000 = vpow.pop %v999
        %v1001 = vmul.f32 %v994, 1.442695
        %v1002 = vpow.pop %v1001
        %v1003 = vadd.f32 %v996, 1.0
        %v1004 = vadd.f32 %v998, 1.0
        %v1005 = vadd.f32 %v1000, 1.0
        %v1006 = vadd.f32 %v1002, 1.0
        %v1007 = vrcp.pop %v1003
        %v1008 = vrcp.pop %v1004
        %v1009 = vrcp.pop %v1005
        %v1010 = vrcp.pop %v1006
        %v1011 = vmul.f32 %v977, %v1007
        %v1012 = vmul.f32 %v980, %v1008
        %v1013 = vmul.f32 %v985, %v1009
        %v1014 = vmul.f32 %v988, %v1010
        %v1015 = vadd.f32 %v851, %v1011
        %v1016 = vadd.f32 %v854, %v1012
        %v1017 = vadd.f32 %v859, %v1013
        %v1018 = vadd.f32 %v862, %v1014
        %v1019 = vpack.c.bf16 %v1016, %v1015
        %v1020 = vpack.c.bf16 %v1018, %v1017
        %v1021 = vld [vmem:[%s8] sm:$0xf]
        %v1022 = vld [vmem:[%s8 + $0x4] sm:$0xf]
        %v1023 = vld [vmem:[%s8 + $0x8] sm:$0xf]
        %v1024 = vld [vmem:[%s8 + $0xc] sm:$0xf]
        %v1025 = vld [vmem:[%s8 + $0x10] sm:$0xf]
        %v1026 = vld [vmem:[%s8 + $0x14] sm:$0xf]
        %v1027 = vld [vmem:[%s8 + $0x18] sm:$0xf]
        %v1028 = vld [vmem:[%s8 + $0x1c] sm:$0xf]
        %v1029 = vld [vmem:[%s8 + $0x20] sm:$0xf]
        %v1030 = vld [vmem:[%s8 + $0x24] sm:$0xf]
        %v1031 = vld [vmem:[%s8 + $0x28] sm:$0xf]
        %v1032 = vld [vmem:[%s8 + $0x2c] sm:$0xf]
        %v1033 = vld [vmem:[%s8 + $0x30] sm:$0xf]
        %v1034 = vld [vmem:[%s8 + $0x34] sm:$0xf]
        %v1035 = vld [vmem:[%s8 + $0x38] sm:$0xf]
        %v1036 = vld [vmem:[%s8 + $0x3c] sm:$0xf]
        %v1037 = vld [vmem:[%s9] sm:$0x1]
        %v1039 = vlaneseq
        %v1040 = vshrl.u32 %v1039, 7
        %v1041 = vsub.s32 0, %v1040
        %v1042 = vrot.slane %v1037, %v1041
        %v1060 = vunpack.c.l.b16 %v1021
        %v1061 = vunpack.c.l.b16 %v1022
        %v1062 = vunpack.c.l.b16 %v1023
        %v1063 = vunpack.c.l.b16 %v1024
        %v1064 = vunpack.c.l.b16 %v1025
        %v1065 = vunpack.c.l.b16 %v1026
        %v1066 = vunpack.c.l.b16 %v1027
        %v1067 = vunpack.c.l.b16 %v1028
        %v1068 = vunpack.c.l.b16 %v1029
        %v1069 = vunpack.c.l.b16 %v1030
        %v1070 = vunpack.c.l.b16 %v1031
        %v1071 = vunpack.c.l.b16 %v1032
        %v1072 = vunpack.c.l.b16 %v1033
        %v1073 = vunpack.c.l.b16 %v1034
        %v1074 = vunpack.c.l.b16 %v1035
        %v1075 = vunpack.c.l.b16 %v1036
        %v1076 = vpack.c.b16 %v1061, %v1060
        %v1077 = vpack.c.b16 %v1063, %v1062
        %v1078 = vpack.c.b16 %v1065, %v1064
        %v1079 = vpack.c.b16 %v1067, %v1066
        %v1080 = vpack.c.b16 %v1069, %v1068
        %v1081 = vpack.c.b16 %v1071, %v1070
        %v1082 = vpack.c.b16 %v1073, %v1072
        %v1083 = vpack.c.b16 %v1075, %v1074
        %1092 = vmatprep.subr.bf16.mxu0 0
        %1093 = vmatpush1.bf16.msra.mxu0 %v1076
        %1094 = vmatprep.subr.bf16.mxu0 0
        %1095 = vmatpush1.bf16.msra.mxu0 %v1077
        %1096 = vmatprep.subr.bf16.mxu0 0
        %1097 = vmatpush1.bf16.msra.mxu0 %v1078
        %1098 = vmatprep.subr.bf16.mxu0 0
        %1099 = vmatpush1.bf16.msra.mxu0 %v1079
        %1100 = vmatprep.subr.bf16.mxu0 0
        %1101 = vmatpush1.bf16.msra.mxu0 %v1080
        %1102 = vmatprep.subr.bf16.mxu0 0
        %1103 = vmatpush1.bf16.msra.mxu0 %v1081
        %1104 = vmatprep.subr.bf16.mxu0 0
        %1105 = vmatpush1.bf16.msra.mxu0 %v1082
        %1106 = vmatprep.subr.bf16.mxu0 0
        %1107 = vmatpush1.bf16.msra.mxu0 %v1083
        %1108 = vmatprep.subr.bf16.mxu0 0
        %1109 = vmatpush1.bf16.msra.mxu0 0
        %1110 = vmatprep.subr.bf16.mxu0 0
        %1111 = vmatpush1.bf16.msra.mxu0 0
        %1112 = vmatprep.subr.bf16.mxu0 0
        %1113 = vmatpush1.bf16.msra.mxu0 0
        %1114 = vmatprep.subr.bf16.mxu0 0
        %1115 = vmatpush1.bf16.msra.mxu0 0
        %1116 = vmatprep.subr.bf16.mxu0 0
        %1117 = vmatpush1.bf16.msra.mxu0 0
        %1118 = vmatprep.subr.bf16.mxu0 0
        %1119 = vmatpush1.bf16.msra.mxu0 0
        %1120 = vmatprep.subr.bf16.mxu0 0
        %1121 = vmatpush1.bf16.msra.mxu0 0
        %1122 = vmatprep.subr.bf16.mxu0 0
        %1123 = vmatpush1.bf16.msra.mxu0 0
        %1124 = vmatprep.mubr.bf16.mxu0 0
        %1125 = vmatmul.mubr.bf16.gmra.mrb[0].mxu0 %v1019
        %v1126 = vpop.f32.mrb[0].mxu0
        %v1127 = vadd.f32 %v1042, %v1126
        %v1128 = vpop.f32.mrb[0].mxu0
        %v1129 = vpop.f32.mrb[0].mxu0
        %v1130 = vadd.f32 %v1042, %v1129
        %v1131 = vpop.f32.mrb[0].mxu0
        %1132 = vmatprep.mubr.bf16.mxu0 0
        %1133 = vmatmul.mubr.bf16.gmra.mrb[0].mxu0 %v1020
        %v1134 = vpop.f32.mrb[0].mxu0
        %v1135 = vadd.f32 %v1042, %v1134
        %v1136 = vpop.f32.mrb[0].mxu0
        %v1137 = vpop.f32.mrb[0].mxu0
        %v1138 = vadd.f32 %v1042, %v1137
        %v1139 = vpop.f32.mrb[0].mxu0
        %1140 = vdwg.mxu0
        %v1141 = vsub.f32 0.0, %v1127
        %v1142 = vsub.f32 0.0, %v1130
        %v1143 = vsub.f32 0.0, %v1135
        %v1144 = vsub.f32 0.0, %v1138
        %v1145 = vmul.f32 %v1141, 1.442695
        %v1146 = vpow.pop %v1145
        %v1147 = vmul.f32 %v1142, 1.442695
        %v1148 = vpow.pop %v1147
        %v1149 = vmul.f32 %v1143, 1.442695
        %v1150 = vpow.pop %v1149
        %v1151 = vmul.f32 %v1144, 1.442695
        %v1152 = vpow.pop %v1151
        %v1153 = vadd.f32 %v1146, 1.0
        %v1154 = vadd.f32 %v1148, 1.0
        %v1155 = vadd.f32 %v1150, 1.0
        %v1156 = vadd.f32 %v1152, 1.0
        %v1157 = vrcp.pop %v1153
        %v1158 = vrcp.pop %v1154
        %v1159 = vrcp.pop %v1155
        %v1160 = vrcp.pop %v1156
        %v1161 = vmul.f32 %v1127, %v1157
        %v1162 = vmul.f32 %v1130, %v1158
        %v1163 = vmul.f32 %v1135, %v1159
        %v1164 = vmul.f32 %v1138, %v1160
        %v1165 = vpack.c.bf16 %v1162, %v1161
        %v1166 = vpack.c.bf16 %v1164, %v1163
        %s1167 = scalar_lea.vmem %s8, 64
        %v1168 = vld [vmem:[%s1167] sm:$0xf]
        %v1169 = vld [vmem:[%s1167 + $0x4] sm:$0xf]
        %v1170 = vld [vmem:[%s1167 + $0x8] sm:$0xf]
        %v1171 = vld [vmem:[%s1167 + $0xc] sm:$0xf]
        %v1172 = vld [vmem:[%s1167 + $0x10] sm:$0xf]
        %v1173 = vld [vmem:[%s1167 + $0x14] sm:$0xf]
        %v1174 = vld [vmem:[%s1167 + $0x18] sm:$0xf]
        %v1175 = vld [vmem:[%s1167 + $0x1c] sm:$0xf]
        %v1176 = vld [vmem:[%s1167 + $0x20] sm:$0xf]
        %v1177 = vld [vmem:[%s1167 + $0x24] sm:$0xf]
        %v1178 = vld [vmem:[%s1167 + $0x28] sm:$0xf]
        %v1179 = vld [vmem:[%s1167 + $0x2c] sm:$0xf]
        %v1180 = vld [vmem:[%s1167 + $0x30] sm:$0xf]
        %v1181 = vld [vmem:[%s1167 + $0x34] sm:$0xf]
        %v1182 = vld [vmem:[%s1167 + $0x38] sm:$0xf]
        %v1183 = vld [vmem:[%s1167 + $0x3c] sm:$0xf]
        %s1184 = scalar_lea.vmem %s9, 1
        %v1185 = vld [vmem:[%s1184] sm:$0x1]
        %v1187 = vlaneseq
        %v1188 = vshrl.u32 %v1187, 7
        %v1189 = vsub.s32 0, %v1188
        %v1190 = vrot.slane %v1185, %v1189
        %v1208 = vunpack.c.l.b16 %v1168
        %v1209 = vunpack.c.l.b16 %v1169
        %v1210 = vunpack.c.l.b16 %v1170
        %v1211 = vunpack.c.l.b16 %v1171
        %v1212 = vunpack.c.l.b16 %v1172
        %v1213 = vunpack.c.l.b16 %v1173
        %v1214 = vunpack.c.l.b16 %v1174
        %v1215 = vunpack.c.l.b16 %v1175
        %v1216 = vunpack.c.l.b16 %v1176
        %v1217 = vunpack.c.l.b16 %v1177
        %v1218 = vunpack.c.l.b16 %v1178
        %v1219 = vunpack.c.l.b16 %v1179
        %v1220 = vunpack.c.l.b16 %v1180
        %v1221 = vunpack.c.l.b16 %v1181
        %v1222 = vunpack.c.l.b16 %v1182
        %v1223 = vunpack.c.l.b16 %v1183
        %v1224 = vpack.c.b16 %v1209, %v1208
        %v1225 = vpack.c.b16 %v1211, %v1210
        %v1226 = vpack.c.b16 %v1213, %v1212
        %v1227 = vpack.c.b16 %v1215, %v1214
        %v1228 = vpack.c.b16 %v1217, %v1216
        %v1229 = vpack.c.b16 %v1219, %v1218
        %v1230 = vpack.c.b16 %v1221, %v1220
        %v1231 = vpack.c.b16 %v1223, %v1222
        %1240 = vmatprep.subr.bf16.mxu0 0
        %1241 = vmatpush1.bf16.msra.mxu0 %v1224
        %1242 = vmatprep.subr.bf16.mxu0 0
        %1243 = vmatpush1.bf16.msra.mxu0 %v1225
        %1244 = vmatprep.subr.bf16.mxu0 0
        %1245 = vmatpush1.bf16.msra.mxu0 %v1226
        %1246 = vmatprep.subr.bf16.mxu0 0
        %1247 = vmatpush1.bf16.msra.mxu0 %v1227
        %1248 = vmatprep.subr.bf16.mxu0 0
        %1249 = vmatpush1.bf16.msra.mxu0 %v1228
        %1250 = vmatprep.subr.bf16.mxu0 0
        %1251 = vmatpush1.bf16.msra.mxu0 %v1229
        %1252 = vmatprep.subr.bf16.mxu0 0
        %1253 = vmatpush1.bf16.msra.mxu0 %v1230
        %1254 = vmatprep.subr.bf16.mxu0 0
        %1255 = vmatpush1.bf16.msra.mxu0 %v1231
        %1256 = vmatprep.subr.bf16.mxu0 0
        %1257 = vmatpush1.bf16.msra.mxu0 0
        %1258 = vmatprep.subr.bf16.mxu0 0
        %1259 = vmatpush1.bf16.msra.mxu0 0
        %1260 = vmatprep.subr.bf16.mxu0 0
        %1261 = vmatpush1.bf16.msra.mxu0 0
        %1262 = vmatprep.subr.bf16.mxu0 0
        %1263 = vmatpush1.bf16.msra.mxu0 0
        %1264 = vmatprep.subr.bf16.mxu0 0
        %1265 = vmatpush1.bf16.msra.mxu0 0
        %1266 = vmatprep.subr.bf16.mxu0 0
        %1267 = vmatpush1.bf16.msra.mxu0 0
        %1268 = vmatprep.subr.bf16.mxu0 0
        %1269 = vmatpush1.bf16.msra.mxu0 0
        %1270 = vmatprep.subr.bf16.mxu0 0
        %1271 = vmatpush1.bf16.msra.mxu0 0
        %1272 = vmatprep.mubr.bf16.mxu0 0
        %1273 = vmatmul.mubr.bf16.gmra.mrb[0].mxu0 %v1165
        %v1274 = vpop.f32.mrb[0].mxu0
        %v1275 = vadd.f32 %v1190, %v1274
        %v1276 = vpop.f32.mrb[0].mxu0
        %v1277 = vpop.f32.mrb[0].mxu0
        %v1278 = vadd.f32 %v1190, %v1277
        %v1279 = vpop.f32.mrb[0].mxu0
        %1280 = vmatprep.mubr.bf16.mxu0 0
        %1281 = vmatmul.mubr.bf16.gmra.mrb[0].mxu0 %v1166
        %v1282 = vpop.f32.mrb[0].mxu0
        %v1283 = vadd.f32 %v1190, %v1282
        %v1284 = vpop.f32.mrb[0].mxu0
        %v1285 = vpop.f32.mrb[0].mxu0
        %v1286 = vadd.f32 %v1190, %v1285
        %v1287 = vpop.f32.mrb[0].mxu0
        %1288 = vdwg.mxu0
        %v1289 = vsub.f32 0.0, %v1275
        %v1290 = vsub.f32 0.0, %v1278
        %v1291 = vsub.f32 0.0, %v1283
        %v1292 = vsub.f32 0.0, %v1286
        %v1293 = vmul.f32 %v1289, 1.442695
        %v1294 = vpow.pop %v1293
        %v1295 = vmul.f32 %v1290, 1.442695
        %v1296 = vpow.pop %v1295
        %v1297 = vmul.f32 %v1291, 1.442695
        %v1298 = vpow.pop %v1297
        %v1299 = vmul.f32 %v1292, 1.442695
        %v1300 = vpow.pop %v1299
        %v1301 = vadd.f32 %v1294, 1.0
        %v1302 = vadd.f32 %v1296, 1.0
        %v1303 = vadd.f32 %v1298, 1.0
        %v1304 = vadd.f32 %v1300, 1.0
        %v1305 = vrcp.pop %v1301
        %v1306 = vrcp.pop %v1302
        %v1307 = vrcp.pop %v1303
        %v1308 = vrcp.pop %v1304
        %v1309 = vmul.f32 %v1275, %v1305
        %v1310 = vmul.f32 %v1278, %v1306
        %v1311 = vmul.f32 %v1283, %v1307
        %v1312 = vmul.f32 %v1286, %v1308
        %v1313 = vld [vmem:[%s3] sm:$0x1]
        %v1314 = vld [vmem:[%s471] sm:$0xff]
        %v1315 = vld [vmem:[%s471 + $0x8] sm:$0xff]
        %v1316 = vld [vmem:[%s471 + $0x10] sm:$0xff]
        %v1317 = vld [vmem:[%s471 + $0x18] sm:$0xff]
        %v1319 = vlaneseq
        %v1320 = vshrl.u32 %v1319, 7
        %v1321 = vsub.s32 0, %v1320
        %v1322 = vrot.slane %v1313, %v1321
        %v1324 = vmul.f32 %v1322, %v1314
        %v1325 = vmul.f32 %v1322, %v1315
        %v1326 = vmul.f32 %v1322, %v1316
        %v1327 = vmul.f32 %v1322, %v1317
        %v1328 = vadd.f32 %v1324, %v1309
        %v1329 = vadd.f32 %v1325, %v1310
        %v1330 = vadd.f32 %v1326, %v1311
        %v1331 = vadd.f32 %v1327, %v1312
        %1332 = vst [vmem:[%s477] sm:$0xff] %v1328
        %1333 = vst [vmem:[%s477 + $0x8] sm:$0xff] %v1329
        %1334 = vst [vmem:[%s477 + $0x10] sm:$0xff] %v1330
        %1335 = vst [vmem:[%s477 + $0x18] sm:$0xff] %v1331
        %s1336 = smul.u32 4, %s21
        %p1337 = scmp.lt.s32.totalorder %s1336, 15
        %s1338 = scalar_select %p1337, %s1336, 15
        %s1339 = smul.addr %s1338, 8
        %s1340 = scalar_lea.vmem %s10, %s1339
        // Predicated region
        $region99: #{subnet_forward.5} parent=93 // pred_check
          %p1341 = pneg %p259
        $region100: #{subnet_forward.5} parent=93 // pred_check_branch
          %1343 = sbr.rel (%p1341) target = $region102
        $region101: #{subnet_forward.5} parent=93 // pred_region
          %s1344 = smul.u32 4, %s21
        $region102: #{subnet_forward.5} parent=93 // pred_fallthru
          _
      $region94: #{subnet_forward.5} parent=5 // pred_fallthru
        _
      %p1345 = scmp.le.s32.totalorder 2, %s16
      // Predicated region
      $region103: #{subnet_forward.5} parent=5 // pred_check
        %p1346 = pneg %p1345
      $region104: #{subnet_forward.5} parent=5 // pred_check_branch
        %1348 = sbr.rel (%p1346) target = $region106
      $region105: #{subnet_forward.5} parent=5 // pred_region
        %s1349 = ssub.s32 %s16, 2
        // Predicated region
        $region107: #{subnet_forward.5} parent=105 // pred_check
          %p1350 = pneg %p265
        $region108: #{subnet_forward.5} parent=105 // pred_check_branch
          %1352 = sbr.rel (%p1350) target = $region110
        $region109: #{subnet_forward.5} parent=105 // pred_region
          %s1353 = smul.u32 4, %s22
          %p1354 = scmp.lt.s32.totalorder %s1353, 15
          %s1355 = scalar_select %p1354, %s1353, 15
          %s1356 = smul.addr %s1355, 8
          %s1357 = scalar_lea.vmem %s10, %s1356
        $region110: #{subnet_forward.5} parent=105 // pred_fallthru
          _
      $region106: #{subnet_forward.5} parent=5 // pred_fallthru
        _
    $region6: #{subnet_forward.5} parent=1 // loop_footer
      %s20 = sadd.s32 1, %s16
    $region7: #{subnet_forward.5} parent=1 // loop_footer_branch
      %15 = sbr.rel target = $region3
    $region8: #{subnet_forward.5} parent=1 // loop_exit
      _

// kernel: subnet_forward.4
$region0: #{subnet_forward.4}
  #allocation0 [shape = 'u32[]', space=smem, size = 0x4, offset = 0x4, fixed_abs, tag = 'smem constant byte address 0x4 - core index']
  #allocation1 [shape = 'u32[144,128]{1,0:T(1,128)}', space=vmem, size = 0x12000, scoped, tag = 'internal scratch']
  %s0 = inlined_call_operand.vmem [shape: f32[512,128], index: 0, kind: input, shape index: {}]
  %s1 = inlined_call_operand.vmem [shape: f32[128,128], index: 1, kind: input, shape index: {}]
  %s2 = inlined_call_operand.vmem [shape: f32[512,128], index: 2, kind: input, shape index: {}, may-alias: {2,8}]
  %s3 = inlined_call_operand.vmem [shape: f32[1,128], index: 3, kind: input, shape index: {}]
  %s4 = inlined_call_operand.vmem [shape: bf16[128,128], index: 4, kind: input, shape index: {}]
  %s5 = inlined_call_operand.vmem [shape: f32[1,128], index: 5, kind: input, shape index: {}]
  %s6 = inlined_call_operand.vmem [shape: bf16[2,128,128], index: 6, kind: input, shape index: {}]
  %s7 = inlined_call_operand.vmem [shape: f32[2,1,128], index: 7, kind: input, shape index: {}]
  %s8 = inlined_call_operand.vmem [shape: f32[512,128], index: 8, kind: output, shape index: {}, may-alias: {2,8}]
  %s9 = sld [smem:[#allocation0]]
  $region65: #{subnet_forward.4} parent=0
    _
  %s11 = ssub.s32 1, %s9
  %s12 = scalar_select 0, %s11, %s9
  loop: start=0, step=1, limit=6
  $region2: #{subnet_forward.4} parent=0 // loop_pre_header
    _
  $region3: #{subnet_forward.4} parent=0 // loop_header
    %s14 = sphi 0, %s18
    %p15 = scmp.ge.s32.totalorder %s14, 6
    %s24 = sphi 0, %s26
    %s27 = sphi 0, %s24
    %s28 = sphi 0, %s27
    %s44 = sphi 0, %s28
    %s48 = sphi 0, %s48
    %s50 = sphi 0, %s48
    %s51 = sphi 0, %s50
    %s65 = sphi 0, %s51
    %s71 = sphi 0, %s73
    %s74 = sphi 0, %s71
    %s75 = sphi 0, %s74
    %s91 = sphi 0, %s75
    %s95 = sphi 0, %s95
    %s97 = sphi 0, %s95
    %s98 = sphi 0, %s97
    %s112 = sphi 0, %s98
    %s116 = sphi 0, %s116
    %s118 = sphi 0, %s116
    %s119 = sphi 0, %s118
    %s133 = sphi 0, %s119
    %s137 = sphi 0, %s137
    %s139 = sphi 0, %s137
    %s140 = sphi 0, %s139
    %s154 = sphi 0, %s140
    %s158 = sphi 0, %s158
    %s160 = sphi 0, %s158
    %s161 = sphi 0, %s160
    %s175 = sphi 0, %s161
    %s179 = sphi 0, %s179
    %s181 = sphi 0, %s179
    %s182 = sphi 0, %s181
    %s196 = sphi 0, %s182
    %s202 = sphi 0, %s204
    %s205 = sphi 0, %s202
    %s206 = sphi 0, %s205
    %s222 = sphi 0, %s206
  $region4: #{subnet_forward.4} parent=0 // loop_header_branch
    %17 = sbr.rel (%p15) target = $region8
  $region5: #{subnet_forward.4} parent=0 // loop_body
    %s19 = ssub.s32 %s14, 1
    %s20 = ssub.s32 %s14, 2
    %s21 = sadd.s32 %s14, 1
    %s22 = ssub.s32 %s14, %s21
    %p23 = scmp.eq.s32.totalorder %s22, 0
    %s25 = sadd.s32 %s24, 1
    %s26 = scalar_select %p23, %s24, %s25
    %p29 = pneg %p23
    %p30 = scmp.eq.s32.totalorder %s14, 3
    %p31 = por %p29, %p30
    %p32 = scmp.ne.s32.totalorder %s24, %s27
    %p33 = scmp.eq.s32.totalorder %s14, 0
    %p34 = por %p32, %p33
    %p35 = scmp.ne.s32.totalorder %s24, %s27
    %p36 = scmp.eq.s32.totalorder %s19, 3
    %p37 = por %p35, %p36
    %p38 = scmp.ne.s32.totalorder %s27, %s28
    %p39 = scmp.eq.s32.totalorder %s19, 0
    %p40 = por %p38, %p39
    %p41 = scmp.ne.s32.totalorder %s27, %s28
    %p42 = scmp.eq.s32.totalorder %s20, 3
    %p43 = por %p41, %p42
    %p45 = scmp.ne.s32.totalorder %s28, %s44
    %p46 = scmp.eq.s32.totalorder %s20, 0
    %p47 = por %p45, %p46
    %s49 = sadd.s32 %s48, 1
    %p52 = scmp.eq.s32.totalorder %s14, 3
    %p53 = scmp.ne.s32.totalorder %s48, %s50
    %p54 = scmp.eq.s32.totalorder %s14, 0
    %p55 = por %p53, %p54
    %p56 = scmp.ne.s32.totalorder %s48, %s50
    %p57 = scmp.eq.s32.totalorder %s19, 3
    %p58 = por %p56, %p57
    %p59 = scmp.ne.s32.totalorder %s50, %s51
    %p60 = scmp.eq.s32.totalorder %s19, 0
    %p61 = por %p59, %p60
    %p62 = scmp.ne.s32.totalorder %s50, %s51
    %p63 = scmp.eq.s32.totalorder %s20, 3
    %p64 = por %p62, %p63
    %p66 = scmp.ne.s32.totalorder %s51, %s65
    %p67 = scmp.eq.s32.totalorder %s20, 0
    %p68 = por %p66, %p67
    %s69 = ssub.s32 %s14, %s21
    %p70 = scmp.eq.s32.totalorder %s69, 0
    %s72 = sadd.s32 %s71, 1
    %s73 = scalar_select %p70, %s71, %s72
    %p76 = pneg %p70
    %p77 = scmp.eq.s32.totalorder %s14, 3
    %p78 = por %p76, %p77
    %p79 = scmp.ne.s32.totalorder %s71, %s74
    %p80 = scmp.eq.s32.totalorder %s14, 0
    %p81 = por %p79, %p80
    %p82 = scmp.ne.s32.totalorder %s71, %s74
    %p83 = scmp.eq.s32.totalorder %s19, 3
    %p84 = por %p82, %p83
    %p85 = scmp.ne.s32.totalorder %s74, %s75
    %p86 = scmp.eq.s32.totalorder %s19, 0
    %p87 = por %p85, %p86
    %p88 = scmp.ne.s32.totalorder %s74, %s75
    %p89 = scmp.eq.s32.totalorder %s20, 3
    %p90 = por %p88, %p89
    %p92 = scmp.ne.s32.totalorder %s75, %s91
    %p93 = scmp.eq.s32.totalorder %s20, 0
    %p94 = por %p92, %p93
    %s96 = sadd.s32 %s95, 1
    %p99 = scmp.eq.s32.totalorder %s14, 3
    %p100 = scmp.ne.s32.totalorder %s95, %s97
    %p101 = scmp.eq.s32.totalorder %s14, 0
    %p102 = por %p100, %p101
    %p103 = scmp.ne.s32.totalorder %s95, %s97
    %p104 = scmp.eq.s32.totalorder %s19, 3
    %p105 = por %p103, %p104
    %p106 = scmp.ne.s32.totalorder %s97, %s98
    %p107 = scmp.eq.s32.totalorder %s19, 0
    %p108 = por %p106, %p107
    %p109 = scmp.ne.s32.totalorder %s97, %s98
    %p110 = scmp.eq.s32.totalorder %s20, 3
    %p111 = por %p109, %p110
    %p113 = scmp.ne.s32.totalorder %s98, %s112
    %p114 = scmp.eq.s32.totalorder %s20, 0
    %p115 = por %p113, %p114
    %s117 = sadd.s32 %s116, 1
    %p120 = scmp.eq.s32.totalorder %s14, 3
    %p121 = scmp.ne.s32.totalorder %s116, %s118
    %p122 = scmp.eq.s32.totalorder %s14, 0
    %p123 = por %p121, %p122
    %p124 = scmp.ne.s32.totalorder %s116, %s118
    %p125 = scmp.eq.s32.totalorder %s19, 3
    %p126 = por %p124, %p125
    %p127 = scmp.ne.s32.totalorder %s118, %s119
    %p128 = scmp.eq.s32.totalorder %s19, 0
    %p129 = por %p127, %p128
    %p130 = scmp.ne.s32.totalorder %s118, %s119
    %p131 = scmp.eq.s32.totalorder %s20, 3
    %p132 = por %p130, %p131
    %p134 = scmp.ne.s32.totalorder %s119, %s133
    %p135 = scmp.eq.s32.totalorder %s20, 0
    %p136 = por %p134, %p135
    %s138 = sadd.s32 %s137, 1
    %p141 = scmp.eq.s32.totalorder %s14, 3
    %p142 = scmp.ne.s32.totalorder %s137, %s139
    %p143 = scmp.eq.s32.totalorder %s14, 0
    %p144 = por %p142, %p143
    %p145 = scmp.ne.s32.totalorder %s137, %s139
    %p146 = scmp.eq.s32.totalorder %s19, 3
    %p147 = por %p145, %p146
    %p148 = scmp.ne.s32.totalorder %s139, %s140
    %p149 = scmp.eq.s32.totalorder %s19, 0
    %p150 = por %p148, %p149
    %p151 = scmp.ne.s32.totalorder %s139, %s140
    %p152 = scmp.eq.s32.totalorder %s20, 3
    %p153 = por %p151, %p152
    %p155 = scmp.ne.s32.totalorder %s140, %s154
    %p156 = scmp.eq.s32.totalorder %s20, 0
    %p157 = por %p155, %p156
    %s159 = sadd.s32 %s158, 1
    %p162 = scmp.eq.s32.totalorder %s14, 3
    %p163 = scmp.ne.s32.totalorder %s158, %s160
    %p164 = scmp.eq.s32.totalorder %s14, 0
    %p165 = por %p163, %p164
    %p166 = scmp.ne.s32.totalorder %s158, %s160
    %p167 = scmp.eq.s32.totalorder %s19, 3
    %p168 = por %p166, %p167
    %p169 = scmp.ne.s32.totalorder %s160, %s161
    %p170 = scmp.eq.s32.totalorder %s19, 0
    %p171 = por %p169, %p170
    %p172 = scmp.ne.s32.totalorder %s160, %s161
    %p173 = scmp.eq.s32.totalorder %s20, 3
    %p174 = por %p172, %p173
    %p176 = scmp.ne.s32.totalorder %s161, %s175
    %p177 = scmp.eq.s32.totalorder %s20, 0
    %p178 = por %p176, %p177
    %s180 = sadd.s32 %s179, 1
    %p183 = scmp.eq.s32.totalorder %s14, 3
    %p184 = scmp.ne.s32.totalorder %s179, %s181
    %p185 = scmp.eq.s32.totalorder %s14, 0
    %p186 = por %p184, %p185
    %p187 = scmp.ne.s32.totalorder %s179, %s181
    %p188 = scmp.eq.s32.totalorder %s19, 3
    %p189 = por %p187, %p188
    %p190 = scmp.ne.s32.totalorder %s181, %s182
    %p191 = scmp.eq.s32.totalorder %s19, 0
    %p192 = por %p190, %p191
    %p193 = scmp.ne.s32.totalorder %s181, %s182
    %p194 = scmp.eq.s32.totalorder %s20, 3
    %p195 = por %p193, %p194
    %p197 = scmp.ne.s32.totalorder %s182, %s196
    %p198 = scmp.eq.s32.totalorder %s20, 0
    %p199 = por %p197, %p198
    %s200 = ssub.s32 %s14, %s21
    %p201 = scmp.eq.s32.totalorder %s200, 0
    %s203 = sadd.s32 %s202, 1
    %s204 = scalar_select %p201, %s202, %s203
    %p207 = pneg %p201
    %p208 = scmp.eq.s32.totalorder %s14, 3
    %p209 = por %p207, %p208
    %p210 = scmp.ne.s32.totalorder %s202, %s205
    %p211 = scmp.eq.s32.totalorder %s14, 0
    %p212 = por %p210, %p211
    %p213 = scmp.ne.s32.totalorder %s202, %s205
    %p214 = scmp.eq.s32.totalorder %s19, 3
    %p215 = por %p213, %p214
    %p216 = scmp.ne.s32.totalorder %s205, %s206
    %p217 = scmp.eq.s32.totalorder %s19, 0
    %p218 = por %p216, %p217
    %p219 = scmp.ne.s32.totalorder %s205, %s206
    %p220 = scmp.eq.s32.totalorder %s20, 3
    %p221 = por %p219, %p220
    %p223 = scmp.ne.s32.totalorder %s206, %s222
    %p224 = scmp.eq.s32.totalorder %s20, 0
    %p225 = por %p223, %p224
    %p226 = scmp.le.s32.totalorder 1, %s14
    %p227 = scmp.lt.s32.totalorder %s14, 5
    %p228 = pnand %p226, %p227
    %p229 = pneg %p228
    // Predicated region
    $region9: #{subnet_forward.4} parent=5 // pred_check
      _
    $region10: #{subnet_forward.4} parent=5 // pred_check_branch
      %231 = sbr.rel (%p228) target = $region12
    $region11: #{subnet_forward.4} parent=5 // pred_region
      %s232 = ssub.s32 %s14, 1
      // Predicated region
      $region13: #{subnet_forward.4} parent=11 // pred_check
        %p233 = pneg %p61
      $region14: #{subnet_forward.4} parent=11 // pred_check_branch
        %235 = sbr.rel (%p233) target = $region16
      $region15: #{subnet_forward.4} parent=11 // pred_region
        _
      $region16: #{subnet_forward.4} parent=11 // pred_fallthru
        _
      // Predicated region
      $region17: #{subnet_forward.4} parent=11 // pred_check
        %p236 = pneg %p108
      $region18: #{subnet_forward.4} parent=11 // pred_check_branch
        %238 = sbr.rel (%p236) target = $region20
      $region19: #{subnet_forward.4} parent=11 // pred_region
        _
      $region20: #{subnet_forward.4} parent=11 // pred_fallthru
        _
      // Predicated region
      $region21: #{subnet_forward.4} parent=11 // pred_check
        %p239 = pneg %p129
      $region22: #{subnet_forward.4} parent=11 // pred_check_branch
        %241 = sbr.rel (%p239) target = $region24
      $region23: #{subnet_forward.4} parent=11 // pred_region
        _
      $region24: #{subnet_forward.4} parent=11 // pred_fallthru
        _
      // Predicated region
      $region25: #{subnet_forward.4} parent=11 // pred_check
        %p242 = pneg %p150
      $region26: #{subnet_forward.4} parent=11 // pred_check_branch
        %244 = sbr.rel (%p242) target = $region28
      $region27: #{subnet_forward.4} parent=11 // pred_region
        _
      $region28: #{subnet_forward.4} parent=11 // pred_fallthru
        _
      // Predicated region
      $region29: #{subnet_forward.4} parent=11 // pred_check
        %p245 = pneg %p171
      $region30: #{subnet_forward.4} parent=11 // pred_check_branch
        %247 = sbr.rel (%p245) target = $region32
      $region31: #{subnet_forward.4} parent=11 // pred_region
        _
      $region32: #{subnet_forward.4} parent=11 // pred_fallthru
        _
      // Predicated region
      $region33: #{subnet_forward.4} parent=11 // pred_check
        %p248 = pneg %p192
      $region34: #{subnet_forward.4} parent=11 // pred_check_branch
        %250 = sbr.rel (%p248) target = $region36
      $region35: #{subnet_forward.4} parent=11 // pred_region
        _
      $region36: #{subnet_forward.4} parent=11 // pred_fallthru
        _
    $region12: #{subnet_forward.4} parent=5 // pred_fallthru
      _
    %p251 = scmp.lt.s32.totalorder %s14, 4
    // Predicated region
    $region37: #{subnet_forward.4} parent=5 // pred_check
      %p252 = pneg %p251
    $region38: #{subnet_forward.4} parent=5 // pred_check_branch
      %254 = sbr.rel (%p252) target = $region40
    $region39: #{subnet_forward.4} parent=5 // pred_region
      // Predicated region
      $region41: #{subnet_forward.4} parent=39 // pred_check
        %p255 = pneg %p34
      $region42: #{subnet_forward.4} parent=39 // pred_check_branch
        %257 = sbr.rel (%p255) target = $region44
      $region43: #{subnet_forward.4} parent=39 // pred_region
        %s258 = smul.u32 16, %s14
        %p259 = scmp.lt.s32.totalorder %s258, 63
        %s260 = scalar_select %p259, %s258, 63
        %s261 = smul.addr %s260, 8
        %s262 = scalar_lea.vmem %s0, %s261
        %s263 = smul.u32 16, %s14
      $region44: #{subnet_forward.4} parent=39 // pred_fallthru
        _
      // Predicated region
      $region45: #{subnet_forward.4} parent=39 // pred_check
        %p264 = pneg %p81
      $region46: #{subnet_forward.4} parent=39 // pred_check_branch
        %266 = sbr.rel (%p264) target = $region48
      $region47: #{subnet_forward.4} parent=39 // pred_region
        %s267 = smul.u32 16, %s14
        %p268 = scmp.lt.s32.totalorder %s267, 63
        %s269 = scalar_select %p268, %s267, 63
        %s270 = smul.addr %s269, 8
        %s271 = scalar_lea.vmem %s2, %s270
        %s272 = smul.u32 16, %s14
      $region48: #{subnet_forward.4} parent=39 // pred_fallthru
        _
    $region40: #{subnet_forward.4} parent=5 // pred_fallthru
      _
    %p273 = scmp.le.s32.totalorder 1, %s14
    %p274 = scmp.lt.s32.totalorder %s14, 5
    %p275 = pnand %p273, %p274
    %p276 = pneg %p275
    // Predicated region
    $region49: #{subnet_forward.4} parent=5 // pred_check
      _
    $region50: #{subnet_forward.4} parent=5 // pred_check_branch
      %278 = sbr.rel (%p275) target = $region52
    $region51: #{subnet_forward.4} parent=5 // pred_region
      %s279 = ssub.s32 %s14, 1
      %s280 = smul.u32 16, %s19
      %p281 = scmp.lt.s32.totalorder %s280, 63
      %s282 = scalar_select %p281, %s280, 63
      %s283 = smul.addr %s282, 8
      %s284 = scalar_lea.vmem %s0, %s283
      %p285 = pneg %p40
      %p286 = pneg %p37
      %p287 = pneg %p61
      %p288 = pneg %p58
      %s289 = smul.u32 16, %s19
      %p290 = scmp.lt.s32.totalorder %s289, 63
      %s291 = scalar_select %p290, %s289, 63
      %s292 = smul.addr %s291, 8
      %s293 = scalar_lea.vmem %s2, %s292
      %p294 = pneg %p87
      %p295 = pneg %p84
      %p296 = pneg %p108
      %p297 = pneg %p105
      %p298 = pneg %p129
      %p299 = pneg %p126
      %p300 = pneg %p150
      %p301 = pneg %p147
      %p302 = pneg %p171
      %p303 = pneg %p168
      %p304 = pneg %p192
      %p305 = pneg %p189
      %p306 = pneg %p218
      %p307 = pneg %p215
      %s308 = smul.u32 16, %s19
      %p309 = scmp.lt.s32.totalorder %s308, 63
      %s310 = scalar_select %p309, %s308, 63
      %s311 = smul.addr %s310, 8
      %s312 = scalar_lea.vmem %s8, %s311
      %s313 = smul.u32 16, %s19
      %p314 = scmp.lt.s32.totalorder %s313, 63
      %s315 = scalar_select %p314, %s313, 63
      %s316 = smul.addr %s315, 8
      %s317 = scalar_lea.vmem %s0, %s316
      %s318 = smul.u32 16, %s19
      %s319 = smul.u32 16, %s19
      %p320 = scmp.lt.s32.totalorder %s319, 63
      %s321 = scalar_select %p320, %s319, 63
      %s322 = smul.addr %s321, 8
      %s323 = scalar_lea.vmem %s2, %s322
      %s324 = smul.u32 16, %s19
      %s325 = smul.u32 16, %s19
      %p326 = scmp.lt.s32.totalorder %s325, 63
      %s327 = scalar_select %p326, %s325, 63
      %s328 = smul.addr %s327, 8
      %s329 = scalar_lea.vmem %s8, %s328
      %s330 = smul.u32 16, %s19
      %v332 = vld [vmem:[%s317] sm:$0xff]
      %v333 = vld [vmem:[%s317 + $0x8] sm:$0xff]
      %v334 = vld [vmem:[%s317 + $0x10] sm:$0xff]
      %v335 = vld [vmem:[%s317 + $0x18] sm:$0xff]
      %v336 = vld [vmem:[%s317 + $0x20] sm:$0xff]
      %v337 = vld [vmem:[%s317 + $0x28] sm:$0xff]
      %v338 = vld [vmem:[%s317 + $0x30] sm:$0xff]
      %v339 = vld [vmem:[%s317 + $0x38] sm:$0xff]
      %v340 = vld [vmem:[%s317 + $0x40] sm:$0xff]
      %v341 = vld [vmem:[%s317 + $0x48] sm:$0xff]
      %v342 = vld [vmem:[%s317 + $0x50] sm:$0xff]
      %v343 = vld [vmem:[%s317 + $0x58] sm:$0xff]
      %v344 = vld [vmem:[%s317 + $0x60] sm:$0xff]
      %v345 = vld [vmem:[%s317 + $0x68] sm:$0xff]
      %v346 = vld [vmem:[%s317 + $0x70] sm:$0xff]
      %v347 = vld [vmem:[%s317 + $0x78] sm:$0xff]
      %v348 = vld [vmem:[%s1] sm:$0xff]
      %v349 = vld [vmem:[%s1 + $0x8] sm:$0xff]
      %v350 = vld [vmem:[%s1 + $0x10] sm:$0xff]
      %v351 = vld [vmem:[%s1 + $0x18] sm:$0xff]
      %v352 = vld [vmem:[%s1 + $0x20] sm:$0xff]
      %v353 = vld [vmem:[%s1 + $0x28] sm:$0xff]
      %v354 = vld [vmem:[%s1 + $0x30] sm:$0xff]
      %v355 = vld [vmem:[%s1 + $0x38] sm:$0xff]
      %v356 = vld [vmem:[%s1 + $0x40] sm:$0xff]
      %v357 = vld [vmem:[%s1 + $0x48] sm:$0xff]
      %v358 = vld [vmem:[%s1 + $0x50] sm:$0xff]
      %v359 = vld [vmem:[%s1 + $0x58] sm:$0xff]
      %v360 = vld [vmem:[%s1 + $0x60] sm:$0xff]
      %v361 = vld [vmem:[%s1 + $0x68] sm:$0xff]
      %v362 = vld [vmem:[%s1 + $0x70] sm:$0xff]
      %v363 = vld [vmem:[%s1 + $0x78] sm:$0xff]
      %v364 = vpack.c.bf16 %v349, %v348
      %v365 = vpack.c.bf16 %v351, %v350
      %v366 = vpack.c.bf16 %v353, %v352
      %v367 = vpack.c.bf16 %v355, %v354
      %v368 = vpack.c.bf16 %v357, %v356
      %v369 = vpack.c.bf16 %v359, %v358
      %v370 = vpack.c.bf16 %v361, %v360
      %v371 = vpack.c.bf16 %v363, %v362
      %v372 = vld [vmem:[%s4] sm:$0xf]
      %v373 = vld [vmem:[%s4 + $0x4] sm:$0xf]
      %v374 = vld [vmem:[%s4 + $0x8] sm:$0xf]
      %v375 = vld [vmem:[%s4 + $0xc] sm:$0xf]
      %v376 = vld [vmem:[%s4 + $0x10] sm:$0xf]
      %v377 = vld [vmem:[%s4 + $0x14] sm:$0xf]
      %v378 = vld [vmem:[%s4 + $0x18] sm:$0xf]
      %v379 = vld [vmem:[%s4 + $0x1c] sm:$0xf]
      %v380 = vld [vmem:[%s4 + $0x20] sm:$0xf]
      %v381 = vld [vmem:[%s4 + $0x24] sm:$0xf]
      %v382 = vld [vmem:[%s4 + $0x28] sm:$0xf]
      %v383 = vld [vmem:[%s4 + $0x2c] sm:$0xf]
      %v384 = vld [vmem:[%s4 + $0x30] sm:$0xf]
      %v385 = vld [vmem:[%s4 + $0x34] sm:$0xf]
      %v386 = vld [vmem:[%s4 + $0x38] sm:$0xf]
      %v387 = vld [vmem:[%s4 + $0x3c] sm:$0xf]
      %v388 = vld [vmem:[%s5] sm:$0x1]
      %v390 = vlaneseq
      %v391 = vshrl.u32 %v390, 7
      %v392 = vsub.s32 0, %v391
      %v393 = vrot.slane %v388, %v392
      %v411 = vunpack.c.l.b16 %v372
      %v412 = vunpack.c.l.b16 %v373
      %v413 = vunpack.c.l.b16 %v374
      %v414 = vunpack.c.l.b16 %v375
      %v415 = vunpack.c.l.b16 %v376
      %v416 = vunpack.c.l.b16 %v377
      %v417 = vunpack.c.l.b16 %v378
      %v418 = vunpack.c.l.b16 %v379
      %v419 = vunpack.c.l.b16 %v380
      %v420 = vunpack.c.l.b16 %v381
      %v421 = vunpack.c.l.b16 %v382
      %v422 = vunpack.c.l.b16 %v383
      %v423 = vunpack.c.l.b16 %v384
      %v424 = vunpack.c.l.b16 %v385
      %v425 = vunpack.c.l.b16 %v386
      %v426 = vunpack.c.l.b16 %v387
      %v427 = vpack.c.b16 %v412, %v411
      %v428 = vpack.c.b16 %v414, %v413
      %v429 = vpack.c.b16 %v416, %v415
      %v430 = vpack.c.b16 %v418, %v417
      %v431 = vpack.c.b16 %v420, %v419
      %v432 = vpack.c.b16 %v422, %v421
      %v433 = vpack.c.b16 %v424, %v423
      %v434 = vpack.c.b16 %v426, %v425
      %443 = vmatprep.subr.bf16.mxu0 0
      %444 = vmatpush1.bf16.msra.mxu0 %v427
      %445 = vmatprep.subr.bf16.mxu0 0
      %446 = vmatpush1.bf16.msra.mxu0 %v428
      %447 = vmatprep.subr.bf16.mxu0 0
      %448 = vmatpush1.bf16.msra.mxu0 %v429
      %449 = vmatprep.subr.bf16.mxu0 0
      %450 = vmatpush1.bf16.msra.mxu0 %v430
      %451 = vmatprep.subr.bf16.mxu0 0
      %452 = vmatpush1.bf16.msra.mxu0 %v431
      %453 = vmatprep.subr.bf16.mxu0 0
      %454 = vmatpush1.bf16.msra.mxu0 %v432
      %455 = vmatprep.subr.bf16.mxu0 0
      %456 = vmatpush1.bf16.msra.mxu0 %v433
      %457 = vmatprep.subr.bf16.mxu0 0
      %458 = vmatpush1.bf16.msra.mxu0 %v434
      %459 = vmatprep.subr.bf16.mxu0 0
      %460 = vmatpush1.bf16.msra.mxu0 0
      %461 = vmatprep.subr.bf16.mxu0 0
      %462 = vmatpush1.bf16.msra.mxu0 0
      %463 = vmatprep.subr.bf16.mxu0 0
      %464 = vmatpush1.bf16.msra.mxu0 0
      %465 = vmatprep.subr.bf16.mxu0 0
      %466 = vmatpush1.bf16.msra.mxu0 0
      %467 = vmatprep.subr.bf16.mxu0 0
      %468 = vmatpush1.bf16.msra.mxu0 0
      %469 = vmatprep.subr.bf16.mxu0 0
      %470 = vmatpush1.bf16.msra.mxu0 0
      %471 = vmatprep.subr.bf16.mxu0 0
      %472 = vmatpush1.bf16.msra.mxu0 0
      %473 = vmatprep.subr.bf16.mxu0 0
      %474 = vmatpush1.bf16.msra.mxu0 0
      %475 = vmatprep.mubr.bf16.mxu0 0
      %476 = vmatmul.mubr.bf16.gmra.mrb[0].mxu0 %v364
      %v477 = vpop.f32.mrb[0].mxu0
      %v478 = vadd.f32 %v393, %v477
      %v479 = vpop.f32.mrb[0].mxu0
      %v480 = vpop.f32.mrb[0].mxu0
      %v481 = vadd.f32 %v393, %v480
      %v482 = vpop.f32.mrb[0].mxu0
      %483 = vmatprep.mubr.bf16.mxu0 0
      %484 = vmatmul.mubr.bf16.gmra.mrb[0].mxu0 %v365
      %v485 = vpop.f32.mrb[0].mxu0
      %v486 = vadd.f32 %v393, %v485
      %v487 = vpop.f32.mrb[0].mxu0
      %v488 = vpop.f32.mrb[0].mxu0
      %v489 = vadd.f32 %v393, %v488
      %v490 = vpop.f32.mrb[0].mxu0
      %491 = vmatprep.mubr.bf16.mxu0 0
      %492 = vmatmul.mubr.bf16.gmra.mrb[0].mxu0 %v366
      %v493 = vpop.f32.mrb[0].mxu0
      %v494 = vadd.f32 %v393, %v493
      %v495 = vpop.f32.mrb[0].mxu0
      %v496 = vpop.f32.mrb[0].mxu0
      %v497 = vadd.f32 %v393, %v496
      %v498 = vpop.f32.mrb[0].mxu0
      %499 = vmatprep.mubr.bf16.mxu0 0
      %500 = vmatmul.mubr.bf16.gmra.mrb[0].mxu0 %v367
      %v501 = vpop.f32.mrb[0].mxu0
      %v502 = vadd.f32 %v393, %v501
      %v503 = vpop.f32.mrb[0].mxu0
      %v504 = vpop.f32.mrb[0].mxu0
      %v505 = vadd.f32 %v393, %v504
      %v506 = vpop.f32.mrb[0].mxu0
      %507 = vmatprep.mubr.bf16.mxu0 0
      %508 = vmatmul.mubr.bf16.gmra.mrb[0].mxu0 %v368
      %v509 = vpop.f32.mrb[0].mxu0
      %v510 = vadd.f32 %v393, %v509
      %v511 = vpop.f32.mrb[0].mxu0
      %v512 = vpop.f32.mrb[0].mxu0
      %v513 = vadd.f32 %v393, %v512
      %v514 = vpop.f32.mrb[0].mxu0
      %515 = vmatprep.mubr.bf16.mxu0 0
      %516 = vmatmul.mubr.bf16.gmra.mrb[0].mxu0 %v369
      %v517 = vpop.f32.mrb[0].mxu0
      %v518 = vadd.f32 %v393, %v517
      %v519 = vpop.f32.mrb[0].mxu0
      %v520 = vpop.f32.mrb[0].mxu0
      %v521 = vadd.f32 %v393, %v520
      %v522 = vpop.f32.mrb[0].mxu0
      %523 = vmatprep.mubr.bf16.mxu0 0
      %524 = vmatmul.mubr.bf16.gmra.mrb[0].mxu0 %v370
      %v525 = vpop.f32.mrb[0].mxu0
      %v526 = vadd.f32 %v393, %v525
      %v527 = vpop.f32.mrb[0].mxu0
      %v528 = vpop.f32.mrb[0].mxu0
      %v529 = vadd.f32 %v393, %v528
      %v530 = vpop.f32.mrb[0].mxu0
      %531 = vmatprep.mubr.bf16.mxu0 0
      %532 = vmatmul.mubr.bf16.gmra.mrb[0].mxu0 %v371
      %v533 = vpop.f32.mrb[0].mxu0
      %v534 = vadd.f32 %v393, %v533
      %v535 = vpop.f32.mrb[0].mxu0
      %v536 = vpop.f32.mrb[0].mxu0
      %v537 = vadd.f32 %v393, %v536
      %v538 = vpop.f32.mrb[0].mxu0
      %539 = vdwg.mxu0
      %v540 = vsub.f32 0.0, %v478
      %v541 = vsub.f32 0.0, %v481
      %v542 = vsub.f32 0.0, %v486
      %v543 = vsub.f32 0.0, %v489
      %v544 = vsub.f32 0.0, %v494
      %v545 = vsub.f32 0.0, %v497
      %v546 = vsub.f32 0.0, %v502
      %v547 = vsub.f32 0.0, %v505
      %v548 = vsub.f32 0.0, %v510
      %v549 = vsub.f32 0.0, %v513
      %v550 = vsub.f32 0.0, %v518
      %v551 = vsub.f32 0.0, %v521
      %v552 = vsub.f32 0.0, %v526
      %v553 = vsub.f32 0.0, %v529
      %v554 = vsub.f32 0.0, %v534
      %v555 = vsub.f32 0.0, %v537
      %v556 = vmul.f32 %v540, 1.442695
      %v557 = vpow.pop %v556
      %v558 = vmul.f32 %v541, 1.442695
      %v559 = vpow.pop %v558
      %v560 = vmul.f32 %v542, 1.442695
      %v561 = vpow.pop %v560
      %v562 = vmul.f32 %v543, 1.442695
      %v563 = vpow.pop %v562
      %v564 = vmul.f32 %v544, 1.442695
      %v565 = vpow.pop %v564
      %v566 = vmul.f32 %v545, 1.442695
      %v567 = vpow.pop %v566
      %v568 = vmul.f32 %v546, 1.442695
      %v569 = vpow.pop %v568
      %v570 = vmul.f32 %v547, 1.442695
      %v571 = vpow.pop %v570
      %v572 = vmul.f32 %v548, 1.442695
      %v573 = vpow.pop %v572
      %v574 = vmul.f32 %v549, 1.442695
      %v575 = vpow.pop %v574
      %v576 = vmul.f32 %v550, 1.442695
      %v577 = vpow.pop %v576
      %v578 = vmul.f32 %v551, 1.442695
      %v579 = vpow.pop %v578
      %v580 = vmul.f32 %v552, 1.442695
      %v581 = vpow.pop %v580
      %v582 = vmul.f32 %v553, 1.442695
      %v583 = vpow.pop %v582
      %v584 = vmul.f32 %v554, 1.442695
      %v585 = vpow.pop %v584
      %v586 = vmul.f32 %v555, 1.442695
      %v587 = vpow.pop %v586
      %v588 = vadd.f32 %v557, 1.0
      %v589 = vadd.f32 %v559, 1.0
      %v590 = vadd.f32 %v561, 1.0
      %v591 = vadd.f32 %v563, 1.0
      %v592 = vadd.f32 %v565, 1.0
      %v593 = vadd.f32 %v567, 1.0
      %v594 = vadd.f32 %v569, 1.0
      %v595 = vadd.f32 %v571, 1.0
      %v596 = vadd.f32 %v573, 1.0
      %v597 = vadd.f32 %v575, 1.0
      %v598 = vadd.f32 %v577, 1.0
      %v599 = vadd.f32 %v579, 1.0
      %v600 = vadd.f32 %v581, 1.0
      %v601 = vadd.f32 %v583, 1.0
      %v602 = vadd.f32 %v585, 1.0
      %v603 = vadd.f32 %v587, 1.0
      %v604 = vrcp.pop %v588
      %v605 = vrcp.pop %v589
      %v606 = vrcp.pop %v590
      %v607 = vrcp.pop %v591
      %v608 = vrcp.pop %v592
      %v609 = vrcp.pop %v593
      %v610 = vrcp.pop %v594
      %v611 = vrcp.pop %v595
      %v612 = vrcp.pop %v596
      %v613 = vrcp.pop %v597
      %v614 = vrcp.pop %v598
      %v615 = vrcp.pop %v599
      %v616 = vrcp.pop %v600
      %v617 = vrcp.pop %v601
      %v618 = vrcp.pop %v602
      %v619 = vrcp.pop %v603
      %v620 = vmul.f32 %v478, %v604
      %v621 = vmul.f32 %v481, %v605
      %v622 = vmul.f32 %v486, %v606
      %v623 = vmul.f32 %v489, %v607
      %v624 = vmul.f32 %v494, %v608
      %v625 = vmul.f32 %v497, %v609
      %v626 = vmul.f32 %v502, %v610
      %v627 = vmul.f32 %v505, %v611
      %v628 = vmul.f32 %v510, %v612
      %v629 = vmul.f32 %v513, %v613
      %v630 = vmul.f32 %v518, %v614
      %v631 = vmul.f32 %v521, %v615
      %v632 = vmul.f32 %v526, %v616
      %v633 = vmul.f32 %v529, %v617
      %v634 = vmul.f32 %v534, %v618
      %v635 = vmul.f32 %v537, %v619
      %v636 = vadd.f32 %v332, %v620
      %v637 = vadd.f32 %v333, %v621
      %v638 = vadd.f32 %v334, %v622
      %v639 = vadd.f32 %v335, %v623
      %v640 = vadd.f32 %v336, %v624
      %v641 = vadd.f32 %v337, %v625
      %v642 = vadd.f32 %v338, %v626
      %v643 = vadd.f32 %v339, %v627
      %v644 = vadd.f32 %v340, %v628
      %v645 = vadd.f32 %v341, %v629
      %v646 = vadd.f32 %v342, %v630
      %v647 = vadd.f32 %v343, %v631
      %v648 = vadd.f32 %v344, %v632
      %v649 = vadd.f32 %v345, %v633
      %v650 = vadd.f32 %v346, %v634
      %v651 = vadd.f32 %v347, %v635
      %v652 = vpack.c.bf16 %v637, %v636
      %v653 = vpack.c.bf16 %v639, %v638
      %v654 = vpack.c.bf16 %v641, %v640
      %v655 = vpack.c.bf16 %v643, %v642
      %v656 = vpack.c.bf16 %v645, %v644
      %v657 = vpack.c.bf16 %v647, %v646
      %v658 = vpack.c.bf16 %v649, %v648
      %v659 = vpack.c.bf16 %v651, %v650
      %v660 = vld [vmem:[%s6] sm:$0xf]
      %v661 = vld [vmem:[%s6 + $0x4] sm:$0xf]
      %v662 = vld [vmem:[%s6 + $0x8] sm:$0xf]
      %v663 = vld [vmem:[%s6 + $0xc] sm:$0xf]
      %v664 = vld [vmem:[%s6 + $0x10] sm:$0xf]
      %v665 = vld [vmem:[%s6 + $0x14] sm:$0xf]
      %v666 = vld [vmem:[%s6 + $0x18] sm:$0xf]
      %v667 = vld [vmem:[%s6 + $0x1c] sm:$0xf]
      %v668 = vld [vmem:[%s6 + $0x20] sm:$0xf]
      %v669 = vld [vmem:[%s6 + $0x24] sm:$0xf]
      %v670 = vld [vmem:[%s6 + $0x28] sm:$0xf]
      %v671 = vld [vmem:[%s6 + $0x2c] sm:$0xf]
      %v672 = vld [vmem:[%s6 + $0x30] sm:$0xf]
      %v673 = vld [vmem:[%s6 + $0x34] sm:$0xf]
      %v674 = vld [vmem:[%s6 + $0x38] sm:$0xf]
      %v675 = vld [vmem:[%s6 + $0x3c] sm:$0xf]
      %v676 = vld [vmem:[%s7] sm:$0x1]
      %v678 = vlaneseq
      %v679 = vshrl.u32 %v678, 7
      %v680 = vsub.s32 0, %v679
      %v681 = vrot.slane %v676, %v680
      %v699 = vunpack.c.l.b16 %v660
      %v700 = vunpack.c.l.b16 %v661
      %v701 = vunpack.c.l.b16 %v662
      %v702 = vunpack.c.l.b16 %v663
      %v703 = vunpack.c.l.b16 %v664
      %v704 = vunpack.c.l.b16 %v665
      %v705 = vunpack.c.l.b16 %v666
      %v706 = vunpack.c.l.b16 %v667
      %v707 = vunpack.c.l.b16 %v668
      %v708 = vunpack.c.l.b16 %v669
      %v709 = vunpack.c.l.b16 %v670
      %v710 = vunpack.c.l.b16 %v671
      %v711 = vunpack.c.l.b16 %v672
      %v712 = vunpack.c.l.b16 %v673
      %v713 = vunpack.c.l.b16 %v674
      %v714 = vunpack.c.l.b16 %v675
      %v715 = vpack.c.b16 %v700, %v699
      %v716 = vpack.c.b16 %v702, %v701
      %v717 = vpack.c.b16 %v704, %v703
      %v718 = vpack.c.b16 %v706, %v705
      %v719 = vpack.c.b16 %v708, %v707
      %v720 = vpack.c.b16 %v710, %v709
      %v721 = vpack.c.b16 %v712, %v711
      %v722 = vpack.c.b16 %v714, %v713
      %731 = vmatprep.subr.bf16.mxu0 0
      %732 = vmatpush1.bf16.msra.mxu0 %v715
      %733 = vmatprep.subr.bf16.mxu0 0
      %734 = vmatpush1.bf16.msra.mxu0 %v716
      %735 = vmatprep.subr.bf16.mxu0 0
      %736 = vmatpush1.bf16.msra.mxu0 %v717
      %737 = vmatprep.subr.bf16.mxu0 0
      %738 = vmatpush1.bf16.msra.mxu0 %v718
      %739 = vmatprep.subr.bf16.mxu0 0
      %740 = vmatpush1.bf16.msra.mxu0 %v719
      %741 = vmatprep.subr.bf16.mxu0 0
      %742 = vmatpush1.bf16.msra.mxu0 %v720
      %743 = vmatprep.subr.bf16.mxu0 0
      %744 = vmatpush1.bf16.msra.mxu0 %v721
      %745 = vmatprep.subr.bf16.mxu0 0
      %746 = vmatpush1.bf16.msra.mxu0 %v722
      %747 = vmatprep.subr.bf16.mxu0 0
      %748 = vmatpush1.bf16.msra.mxu0 0
      %749 = vmatprep.subr.bf16.mxu0 0
      %750 = vmatpush1.bf16.msra.mxu0 0
      %751 = vmatprep.subr.bf16.mxu0 0
      %752 = vmatpush1.bf16.msra.mxu0 0
      %753 = vmatprep.subr.bf16.mxu0 0
      %754 = vmatpush1.bf16.msra.mxu0 0
      %755 = vmatprep.subr.bf16.mxu0 0
      %756 = vmatpush1.bf16.msra.mxu0 0
      %757 = vmatprep.subr.bf16.mxu0 0
      %758 = vmatpush1.bf16.msra.mxu0 0
      %759 = vmatprep.subr.bf16.mxu0 0
      %760 = vmatpush1.bf16.msra.mxu0 0
      %761 = vmatprep.subr.bf16.mxu0 0
      %762 = vmatpush1.bf16.msra.mxu0 0
      %763 = vmatprep.mubr.bf16.mxu0 0
      %764 = vmatmul.mubr.bf16.gmra.mrb[0].mxu0 %v652
      %v765 = vpop.f32.mrb[0].mxu0
      %v766 = vadd.f32 %v681, %v765
      %v767 = vpop.f32.mrb[0].mxu0
      %v768 = vpop.f32.mrb[0].mxu0
      %v769 = vadd.f32 %v681, %v768
      %v770 = vpop.f32.mrb[0].mxu0
      %771 = vmatprep.mubr.bf16.mxu0 0
      %772 = vmatmul.mubr.bf16.gmra.mrb[0].mxu0 %v653
      %v773 = vpop.f32.mrb[0].mxu0
      %v774 = vadd.f32 %v681, %v773
      %v775 = vpop.f32.mrb[0].mxu0
      %v776 = vpop.f32.mrb[0].mxu0
      %v777 = vadd.f32 %v681, %v776
      %v778 = vpop.f32.mrb[0].mxu0
      %779 = vmatprep.mubr.bf16.mxu0 0
      %780 = vmatmul.mubr.bf16.gmra.mrb[0].mxu0 %v654
      %v781 = vpop.f32.mrb[0].mxu0
      %v782 = vadd.f32 %v681, %v781
      %v783 = vpop.f32.mrb[0].mxu0
      %v784 = vpop.f32.mrb[0].mxu0
      %v785 = vadd.f32 %v681, %v784
      %v786 = vpop.f32.mrb[0].mxu0
      %787 = vmatprep.mubr.bf16.mxu0 0
      %788 = vmatmul.mubr.bf16.gmra.mrb[0].mxu0 %v655
      %v789 = vpop.f32.mrb[0].mxu0
      %v790 = vadd.f32 %v681, %v789
      %v791 = vpop.f32.mrb[0].mxu0
      %v792 = vpop.f32.mrb[0].mxu0
      %v793 = vadd.f32 %v681, %v792
      %v794 = vpop.f32.mrb[0].mxu0
      %795 = vmatprep.mubr.bf16.mxu0 0
      %796 = vmatmul.mubr.bf16.gmra.mrb[0].mxu0 %v656
      %v797 = vpop.f32.mrb[0].mxu0
      %v798 = vadd.f32 %v681, %v797
      %v799 = vpop.f32.mrb[0].mxu0
      %v800 = vpop.f32.mrb[0].mxu0
      %v801 = vadd.f32 %v681, %v800
      %v802 = vpop.f32.mrb[0].mxu0
      %803 = vmatprep.mubr.bf16.mxu0 0
      %804 = vmatmul.mubr.bf16.gmra.mrb[0].mxu0 %v657
      %v805 = vpop.f32.mrb[0].mxu0
      %v806 = vadd.f32 %v681, %v805
      %v807 = vpop.f32.mrb[0].mxu0
      %v808 = vpop.f32.mrb[0].mxu0
      %v809 = vadd.f32 %v681, %v808
      %v810 = vpop.f32.mrb[0].mxu0
      %811 = vmatprep.mubr.bf16.mxu0 0
      %812 = vmatmul.mubr.bf16.gmra.mrb[0].mxu0 %v658
      %v813 = vpop.f32.mrb[0].mxu0
      %v814 = vadd.f32 %v681, %v813
      %v815 = vpop.f32.mrb[0].mxu0
      %v816 = vpop.f32.mrb[0].mxu0
      %v817 = vadd.f32 %v681, %v816
      %v818 = vpop.f32.mrb[0].mxu0
      %819 = vmatprep.mubr.bf16.mxu0 0
      %820 = vmatmul.mubr.bf16.gmra.mrb[0].mxu0 %v659
      %v821 = vpop.f32.mrb[0].mxu0
      %v822 = vadd.f32 %v681, %v821
      %v823 = vpop.f32.mrb[0].mxu0
      %v824 = vpop.f32.mrb[0].mxu0
      %v825 = vadd.f32 %v681, %v824
      %v826 = vpop.f32.mrb[0].mxu0
      %827 = vdwg.mxu0
      %v828 = vsub.f32 0.0, %v766
      %v829 = vsub.f32 0.0, %v769
      %v830 = vsub.f32 0.0, %v774
      %v831 = vsub.f32 0.0, %v777
      %v832 = vsub.f32 0.0, %v782
      %v833 = vsub.f32 0.0, %v785
      %v834 = vsub.f32 0.0, %v790
      %v835 = vsub.f32 0.0, %v793
      %v836 = vsub.f32 0.0, %v798
      %v837 = vsub.f32 0.0, %v801
      %v838 = vsub.f32 0.0, %v806
      %v839 = vsub.f32 0.0, %v809
      %v840 = vsub.f32 0.0, %v814
      %v841 = vsub.f32 0.0, %v817
      %v842 = vsub.f32 0.0, %v822
      %v843 = vsub.f32 0.0, %v825
      %v844 = vmul.f32 %v828, 1.442695
      %v845 = vpow.pop %v844
      %v846 = vmul.f32 %v829, 1.442695
      %v847 = vpow.pop %v846
      %v848 = vmul.f32 %v830, 1.442695
      %v849 = vpow.pop %v848
      %v850 = vmul.f32 %v831, 1.442695
      %v851 = vpow.pop %v850
      %v852 = vmul.f32 %v832, 1.442695
      %v853 = vpow.pop %v852
      %v854 = vmul.f32 %v833, 1.442695
      %v855 = vpow.pop %v854
      %v856 = vmul.f32 %v834, 1.442695
      %v857 = vpow.pop %v856
      %v858 = vmul.f32 %v835, 1.442695
      %v859 = vpow.pop %v858
      %v860 = vmul.f32 %v836, 1.442695
      %v861 = vpow.pop %v860
      %v862 = vmul.f32 %v837, 1.442695
      %v863 = vpow.pop %v862
      %v864 = vmul.f32 %v838, 1.442695
      %v865 = vpow.pop %v864
      %v866 = vmul.f32 %v839, 1.442695
      %v867 = vpow.pop %v866
      %v868 = vmul.f32 %v840, 1.442695
      %v869 = vpow.pop %v868
      %v870 = vmul.f32 %v841, 1.442695
      %v871 = vpow.pop %v870
      %v872 = vmul.f32 %v842, 1.442695
      %v873 = vpow.pop %v872
      %v874 = vmul.f32 %v843, 1.442695
      %v875 = vpow.pop %v874
      %v876 = vadd.f32 %v845, 1.0
      %v877 = vadd.f32 %v847, 1.0
      %v878 = vadd.f32 %v849, 1.0
      %v879 = vadd.f32 %v851, 1.0
      %v880 = vadd.f32 %v853, 1.0
      %v881 = vadd.f32 %v855, 1.0
      %v882 = vadd.f32 %v857, 1.0
      %v883 = vadd.f32 %v859, 1.0
      %v884 = vadd.f32 %v861, 1.0
      %v885 = vadd.f32 %v863, 1.0
      %v886 = vadd.f32 %v865, 1.0
      %v887 = vadd.f32 %v867, 1.0
      %v888 = vadd.f32 %v869, 1.0
      %v889 = vadd.f32 %v871, 1.0
      %v890 = vadd.f32 %v873, 1.0
      %v891 = vadd.f32 %v875, 1.0
      %v892 = vrcp.pop %v876
      %v893 = vrcp.pop %v877
      %v894 = vrcp.pop %v878
      %v895 = vrcp.pop %v879
      %v896 = vrcp.pop %v880
      %v897 = vrcp.pop %v881
      %v898 = vrcp.pop %v882
      %v899 = vrcp.pop %v883
      %v900 = vrcp.pop %v884
      %v901 = vrcp.pop %v885
      %v902 = vrcp.pop %v886
      %v903 = vrcp.pop %v887
      %v904 = vrcp.pop %v888
      %v905 = vrcp.pop %v889
      %v906 = vrcp.pop %v890
      %v907 = vrcp.pop %v891
      %v908 = vmul.f32 %v766, %v892
      %v909 = vmul.f32 %v769, %v893
      %v910 = vmul.f32 %v774, %v894
      %v911 = vmul.f32 %v777, %v895
      %v912 = vmul.f32 %v782, %v896
      %v913 = vmul.f32 %v785, %v897
      %v914 = vmul.f32 %v790, %v898
      %v915 = vmul.f32 %v793, %v899
      %v916 = vmul.f32 %v798, %v900
      %v917 = vmul.f32 %v801, %v901
      %v918 = vmul.f32 %v806, %v902
      %v919 = vmul.f32 %v809, %v903
      %v920 = vmul.f32 %v814, %v904
      %v921 = vmul.f32 %v817, %v905
      %v922 = vmul.f32 %v822, %v906
      %v923 = vmul.f32 %v825, %v907
      %v924 = vpack.c.bf16 %v909, %v908
      %v925 = vpack.c.bf16 %v911, %v910
      %v926 = vpack.c.bf16 %v913, %v912
      %v927 = vpack.c.bf16 %v915, %v914
      %v928 = vpack.c.bf16 %v917, %v916
      %v929 = vpack.c.bf16 %v919, %v918
      %v930 = vpack.c.bf16 %v921, %v920
      %v931 = vpack.c.bf16 %v923, %v922
      %s932 = scalar_lea.vmem %s6, 64
      %v933 = vld [vmem:[%s932] sm:$0xf]
      %v934 = vld [vmem:[%s932 + $0x4] sm:$0xf]
      %v935 = vld [vmem:[%s932 + $0x8] sm:$0xf]
      %v936 = vld [vmem:[%s932 + $0xc] sm:$0xf]
      %v937 = vld [vmem:[%s932 + $0x10] sm:$0xf]
      %v938 = vld [vmem:[%s932 + $0x14] sm:$0xf]
      %v939 = vld [vmem:[%s932 + $0x18] sm:$0xf]
      %v940 = vld [vmem:[%s932 + $0x1c] sm:$0xf]
      %v941 = vld [vmem:[%s932 + $0x20] sm:$0xf]
      %v942 = vld [vmem:[%s932 + $0x24] sm:$0xf]
      %v943 = vld [vmem:[%s932 + $0x28] sm:$0xf]
      %v944 = vld [vmem:[%s932 + $0x2c] sm:$0xf]
      %v945 = vld [vmem:[%s932 + $0x30] sm:$0xf]
      %v946 = vld [vmem:[%s932 + $0x34] sm:$0xf]
      %v947 = vld [vmem:[%s932 + $0x38] sm:$0xf]
      %v948 = vld [vmem:[%s932 + $0x3c] sm:$0xf]
      %s949 = scalar_lea.vmem %s7, 1
      %v950 = vld [vmem:[%s949] sm:$0x1]
      %v952 = vlaneseq
      %v953 = vshrl.u32 %v952, 7
      %v954 = vsub.s32 0, %v953
      %v955 = vrot.slane %v950, %v954
      %v973 = vunpack.c.l.b16 %v933
      %v974 = vunpack.c.l.b16 %v934
      %v975 = vunpack.c.l.b16 %v935
      %v976 = vunpack.c.l.b16 %v936
      %v977 = vunpack.c.l.b16 %v937
      %v978 = vunpack.c.l.b16 %v938
      %v979 = vunpack.c.l.b16 %v939
      %v980 = vunpack.c.l.b16 %v940
      %v981 = vunpack.c.l.b16 %v941
      %v982 = vunpack.c.l.b16 %v942
      %v983 = vunpack.c.l.b16 %v943
      %v984 = vunpack.c.l.b16 %v944
      %v985 = vunpack.c.l.b16 %v945
      %v986 = vunpack.c.l.b16 %v946
      %v987 = vunpack.c.l.b16 %v947
      %v988 = vunpack.c.l.b16 %v948
      %v989 = vpack.c.b16 %v974, %v973
      %v990 = vpack.c.b16 %v976, %v975
      %v991 = vpack.c.b16 %v978, %v977
      %v992 = vpack.c.b16 %v980, %v979
      %v993 = vpack.c.b16 %v982, %v981
      %v994 = vpack.c.b16 %v984, %v983
      %v995 = vpack.c.b16 %v986, %v985
      %v996 = vpack.c.b16 %v988, %v987
      %1005 = vmatprep.subr.bf16.mxu0 0
      %1006 = vmatpush1.bf16.msra.mxu0 %v989
      %1007 = vmatprep.subr.bf16.mxu0 0
      %1008 = vmatpush1.bf16.msra.mxu0 %v990
      %1009 = vmatprep.subr.bf16.mxu0 0
      %1010 = vmatpush1.bf16.msra.mxu0 %v991
      %1011 = vmatprep.subr.bf16.mxu0 0
      %1012 = vmatpush1.bf16.msra.mxu0 %v992
      %1013 = vmatprep.subr.bf16.mxu0 0
      %1014 = vmatpush1.bf16.msra.mxu0 %v993
      %1015 = vmatprep.subr.bf16.mxu0 0
      %1016 = vmatpush1.bf16.msra.mxu0 %v994
      %1017 = vmatprep.subr.bf16.mxu0 0
      %1018 = vmatpush1.bf16.msra.mxu0 %v995
      %1019 = vmatprep.subr.bf16.mxu0 0
      %1020 = vmatpush1.bf16.msra.mxu0 %v996
      %1021 = vmatprep.subr.bf16.mxu0 0
      %1022 = vmatpush1.bf16.msra.mxu0 0
      %1023 = vmatprep.subr.bf16.mxu0 0
      %1024 = vmatpush1.bf16.msra.mxu0 0
      %1025 = vmatprep.subr.bf16.mxu0 0
      %1026 = vmatpush1.bf16.msra.mxu0 0
      %1027 = vmatprep.subr.bf16.mxu0 0
      %1028 = vmatpush1.bf16.msra.mxu0 0
      %1029 = vmatprep.subr.bf16.mxu0 0
      %1030 = vmatpush1.bf16.msra.mxu0 0
      %1031 = vmatprep.subr.bf16.mxu0 0
      %1032 = vmatpush1.bf16.msra.mxu0 0
      %1033 = vmatprep.subr.bf16.mxu0 0
      %1034 = vmatpush1.bf16.msra.mxu0 0
      %1035 = vmatprep.subr.bf16.mxu0 0
      %1036 = vmatpush1.bf16.msra.mxu0 0
      %1037 = vmatprep.mubr.bf16.mxu0 0
      %1038 = vmatmul.mubr.bf16.gmra.mrb[0].mxu0 %v924
      %v1039 = vpop.f32.mrb[0].mxu0
      %v1040 = vadd.f32 %v955, %v1039
      %v1041 = vpop.f32.mrb[0].mxu0
      %v1042 = vpop.f32.mrb[0].mxu0
      %v1043 = vadd.f32 %v955, %v1042
      %v1044 = vpop.f32.mrb[0].mxu0
      %1045 = vmatprep.mubr.bf16.mxu0 0
      %1046 = vmatmul.mubr.bf16.gmra.mrb[0].mxu0 %v925
      %v1047 = vpop.f32.mrb[0].mxu0
      %v1048 = vadd.f32 %v955, %v1047
      %v1049 = vpop.f32.mrb[0].mxu0
      %v1050 = vpop.f32.mrb[0].mxu0
      %v1051 = vadd.f32 %v955, %v1050
      %v1052 = vpop.f32.mrb[0].mxu0
      %1053 = vmatprep.mubr.bf16.mxu0 0
      %1054 = vmatmul.mubr.bf16.gmra.mrb[0].mxu0 %v926
      %v1055 = vpop.f32.mrb[0].mxu0
      %v1056 = vadd.f32 %v955, %v1055
      %v1057 = vpop.f32.mrb[0].mxu0
      %v1058 = vpop.f32.mrb[0].mxu0
      %v1059 = vadd.f32 %v955, %v1058
      %v1060 = vpop.f32.mrb[0].mxu0
      %1061 = vmatprep.mubr.bf16.mxu0 0
      %1062 = vmatmul.mubr.bf16.gmra.mrb[0].mxu0 %v927
      %v1063 = vpop.f32.mrb[0].mxu0
      %v1064 = vadd.f32 %v955, %v1063
      %v1065 = vpop.f32.mrb[0].mxu0
      %v1066 = vpop.f32.mrb[0].mxu0
      %v1067 = vadd.f32 %v955, %v1066
      %v1068 = vpop.f32.mrb[0].mxu0
      %1069 = vmatprep.mubr.bf16.mxu0 0
      %1070 = vmatmul.mubr.bf16.gmra.mrb[0].mxu0 %v928
      %v1071 = vpop.f32.mrb[0].mxu0
      %v1072 = vadd.f32 %v955, %v1071
      %v1073 = vpop.f32.mrb[0].mxu0
      %v1074 = vpop.f32.mrb[0].mxu0
      %v1075 = vadd.f32 %v955, %v1074
      %v1076 = vpop.f32.mrb[0].mxu0
      %1077 = vmatprep.mubr.bf16.mxu0 0
      %1078 = vmatmul.mubr.bf16.gmra.mrb[0].mxu0 %v929
      %v1079 = vpop.f32.mrb[0].mxu0
      %v1080 = vadd.f32 %v955, %v1079
      %v1081 = vpop.f32.mrb[0].mxu0
      %v1082 = vpop.f32.mrb[0].mxu0
      %v1083 = vadd.f32 %v955, %v1082
      %v1084 = vpop.f32.mrb[0].mxu0
      %1085 = vmatprep.mubr.bf16.mxu0 0
      %1086 = vmatmul.mubr.bf16.gmra.mrb[0].mxu0 %v930
      %v1087 = vpop.f32.mrb[0].mxu0
      %v1088 = vadd.f32 %v955, %v1087
      %v1089 = vpop.f32.mrb[0].mxu0
      %v1090 = vpop.f32.mrb[0].mxu0
      %v1091 = vadd.f32 %v955, %v1090
      %v1092 = vpop.f32.mrb[0].mxu0
      %1093 = vmatprep.mubr.bf16.mxu0 0
      %1094 = vmatmul.mubr.bf16.gmra.mrb[0].mxu0 %v931
      %v1095 = vpop.f32.mrb[0].mxu0
      %v1096 = vadd.f32 %v955, %v1095
      %v1097 = vpop.f32.mrb[0].mxu0
      %v1098 = vpop.f32.mrb[0].mxu0
      %v1099 = vadd.f32 %v955, %v1098
      %v1100 = vpop.f32.mrb[0].mxu0
      %1101 = vdwg.mxu0
      %v1102 = vsub.f32 0.0, %v1040
      %v1103 = vsub.f32 0.0, %v1043
      %v1104 = vsub.f32 0.0, %v1048
      %v1105 = vsub.f32 0.0, %v1051
      %v1106 = vsub.f32 0.0, %v1056
      %v1107 = vsub.f32 0.0, %v1059
      %v1108 = vsub.f32 0.0, %v1064
      %v1109 = vsub.f32 0.0, %v1067
      %v1110 = vsub.f32 0.0, %v1072
      %v1111 = vsub.f32 0.0, %v1075
      %v1112 = vsub.f32 0.0, %v1080
      %v1113 = vsub.f32 0.0, %v1083
      %v1114 = vsub.f32 0.0, %v1088
      %v1115 = vsub.f32 0.0, %v1091
      %v1116 = vsub.f32 0.0, %v1096
      %v1117 = vsub.f32 0.0, %v1099
      %v1118 = vmul.f32 %v1102, 1.442695
      %v1119 = vpow.pop %v1118
      %v1120 = vmul.f32 %v1103, 1.442695
      %v1121 = vpow.pop %v1120
      %v1122 = vmul.f32 %v1104, 1.442695
      %v1123 = vpow.pop %v1122
      %v1124 = vmul.f32 %v1105, 1.442695
      %v1125 = vpow.pop %v1124
      %v1126 = vmul.f32 %v1106, 1.442695
      %v1127 = vpow.pop %v1126
      %v1128 = vmul.f32 %v1107, 1.442695
      %v1129 = vpow.pop %v1128
      %v1130 = vmul.f32 %v1108, 1.442695
      %v1131 = vpow.pop %v1130
      %v1132 = vmul.f32 %v1109, 1.442695
      %v1133 = vpow.pop %v1132
      %v1134 = vmul.f32 %v1110, 1.442695
      %v1135 = vpow.pop %v1134
      %v1136 = vmul.f32 %v1111, 1.442695
      %v1137 = vpow.pop %v1136
      %v1138 = vmul.f32 %v1112, 1.442695
      %v1139 = vpow.pop %v1138
      %v1140 = vmul.f32 %v1113, 1.442695
      %v1141 = vpow.pop %v1140
      %v1142 = vmul.f32 %v1114, 1.442695
      %v1143 = vpow.pop %v1142
      %v1144 = vmul.f32 %v1115, 1.442695
      %v1145 = vpow.pop %v1144
      %v1146 = vmul.f32 %v1116, 1.442695
      %v1147 = vpow.pop %v1146
      %v1148 = vmul.f32 %v1117, 1.442695
      %v1149 = vpow.pop %v1148
      %v1150 = vadd.f32 %v1119, 1.0
      %v1151 = vadd.f32 %v1121, 1.0
      %v1152 = vadd.f32 %v1123, 1.0
      %v1153 = vadd.f32 %v1125, 1.0
      %v1154 = vadd.f32 %v1127, 1.0
      %v1155 = vadd.f32 %v1129, 1.0
      %v1156 = vadd.f32 %v1131, 1.0
      %v1157 = vadd.f32 %v1133, 1.0
      %v1158 = vadd.f32 %v1135, 1.0
      %v1159 = vadd.f32 %v1137, 1.0
      %v1160 = vadd.f32 %v1139, 1.0
      %v1161 = vadd.f32 %v1141, 1.0
      %v1162 = vadd.f32 %v1143, 1.0
      %v1163 = vadd.f32 %v1145, 1.0
      %v1164 = vadd.f32 %v1147, 1.0
      %v1165 = vadd.f32 %v1149, 1.0
      %v1166 = vrcp.pop %v1150
      %v1167 = vrcp.pop %v1151
      %v1168 = vrcp.pop %v1152
      %v1169 = vrcp.pop %v1153
      %v1170 = vrcp.pop %v1154
      %v1171 = vrcp.pop %v1155
      %v1172 = vrcp.pop %v1156
      %v1173 = vrcp.pop %v1157
      %v1174 = vrcp.pop %v1158
      %v1175 = vrcp.pop %v1159
      %v1176 = vrcp.pop %v1160
      %v1177 = vrcp.pop %v1161
      %v1178 = vrcp.pop %v1162
      %v1179 = vrcp.pop %v1163
      %v1180 = vrcp.pop %v1164
      %v1181 = vrcp.pop %v1165
      %v1182 = vmul.f32 %v1040, %v1166
      %v1183 = vmul.f32 %v1043, %v1167
      %v1184 = vmul.f32 %v1048, %v1168
      %v1185 = vmul.f32 %v1051, %v1169
      %v1186 = vmul.f32 %v1056, %v1170
      %v1187 = vmul.f32 %v1059, %v1171
      %v1188 = vmul.f32 %v1064, %v1172
      %v1189 = vmul.f32 %v1067, %v1173
      %v1190 = vmul.f32 %v1072, %v1174
      %v1191 = vmul.f32 %v1075, %v1175
      %v1192 = vmul.f32 %v1080, %v1176
      %v1193 = vmul.f32 %v1083, %v1177
      %v1194 = vmul.f32 %v1088, %v1178
      %v1195 = vmul.f32 %v1091, %v1179
      %v1196 = vmul.f32 %v1096, %v1180
      %v1197 = vmul.f32 %v1099, %v1181
      %v1198 = vld [vmem:[%s3] sm:$0x1]
      %v1199 = vld [vmem:[%s323] sm:$0xff]
      %v1200 = vld [vmem:[%s323 + $0x8] sm:$0xff]
      %v1201 = vld [vmem:[%s323 + $0x10] sm:$0xff]
      %v1202 = vld [vmem:[%s323 + $0x18] sm:$0xff]
      %v1203 = vld [vmem:[%s323 + $0x20] sm:$0xff]
      %v1204 = vld [vmem:[%s323 + $0x28] sm:$0xff]
      %v1205 = vld [vmem:[%s323 + $0x30] sm:$0xff]
      %v1206 = vld [vmem:[%s323 + $0x38] sm:$0xff]
      %v1207 = vld [vmem:[%s323 + $0x40] sm:$0xff]
      %v1208 = vld [vmem:[%s323 + $0x48] sm:$0xff]
      %v1209 = vld [vmem:[%s323 + $0x50] sm:$0xff]
      %v1210 = vld [vmem:[%s323 + $0x58] sm:$0xff]
      %v1211 = vld [vmem:[%s323 + $0x60] sm:$0xff]
      %v1212 = vld [vmem:[%s323 + $0x68] sm:$0xff]
      %v1213 = vld [vmem:[%s323 + $0x70] sm:$0xff]
      %v1214 = vld [vmem:[%s323 + $0x78] sm:$0xff]
      %v1216 = vlaneseq
      %v1217 = vshrl.u32 %v1216, 7
      %v1218 = vsub.s32 0, %v1217
      %v1219 = vrot.slane %v1198, %v1218
      %v1221 = vmul.f32 %v1219, %v1199
      %v1222 = vmul.f32 %v1219, %v1200
      %v1223 = vmul.f32 %v1219, %v1201
      %v1224 = vmul.f32 %v1219, %v1202
      %v1225 = vmul.f32 %v1219, %v1203
      %v1226 = vmul.f32 %v1219, %v1204
      %v1227 = vmul.f32 %v1219, %v1205
      %v1228 = vmul.f32 %v1219, %v1206
      %v1229 = vmul.f32 %v1219, %v1207
      %v1230 = vmul.f32 %v1219, %v1208
      %v1231 = vmul.f32 %v1219, %v1209
      %v1232 = vmul.f32 %v1219, %v1210
      %v1233 = vmul.f32 %v1219, %v1211
      %v1234 = vmul.f32 %v1219, %v1212
      %v1235 = vmul.f32 %v1219, %v1213
      %v1236 = vmul.f32 %v1219, %v1214
      %v1237 = vadd.f32 %v1221, %v1182
      %v1238 = vadd.f32 %v1222, %v1183
      %v1239 = vadd.f32 %v1223, %v1184
      %v1240 = vadd.f32 %v1224, %v1185
      %v1241 = vadd.f32 %v1225, %v1186
      %v1242 = vadd.f32 %v1226, %v1187
      %v1243 = vadd.f32 %v1227, %v1188
      %v1244 = vadd.f32 %v1228, %v1189
      %v1245 = vadd.f32 %v1229, %v1190
      %v1246 = vadd.f32 %v1230, %v1191
      %v1247 = vadd.f32 %v1231, %v1192
      %v1248 = vadd.f32 %v1232, %v1193
      %v1249 = vadd.f32 %v1233, %v1194
      %v1250 = vadd.f32 %v1234, %v1195
      %v1251 = vadd.f32 %v1235, %v1196
      %v1252 = vadd.f32 %v1236, %v1197
      %1253 = vst [vmem:[%s329] sm:$0xff] %v1237
      %1254 = vst [vmem:[%s329 + $0x8] sm:$0xff] %v1238
      %1255 = vst [vmem:[%s329 + $0x10] sm:$0xff] %v1239
      %1256 = vst [vmem:[%s329 + $0x18] sm:$0xff] %v1240
      %1257 = vst [vmem:[%s329 + $0x20] sm:$0xff] %v1241
      %1258 = vst [vmem:[%s329 + $0x28] sm:$0xff] %v1242
      %1259 = vst [vmem:[%s329 + $0x30] sm:$0xff] %v1243
      %1260 = vst [vmem:[%s329 + $0x38] sm:$0xff] %v1244
      %1261 = vst [vmem:[%s329 + $0x40] sm:$0xff] %v1245
      %1262 = vst [vmem:[%s329 + $0x48] sm:$0xff] %v1246
      %1263 = vst [vmem:[%s329 + $0x50] sm:$0xff] %v1247
      %1264 = vst [vmem:[%s329 + $0x58] sm:$0xff] %v1248
      %1265 = vst [vmem:[%s329 + $0x60] sm:$0xff] %v1249
      %1266 = vst [vmem:[%s329 + $0x68] sm:$0xff] %v1250
      %1267 = vst [vmem:[%s329 + $0x70] sm:$0xff] %v1251
      %1268 = vst [vmem:[%s329 + $0x78] sm:$0xff] %v1252
      %s1269 = smul.u32 16, %s19
      %p1270 = scmp.lt.s32.totalorder %s1269, 63
      %s1271 = scalar_select %p1270, %s1269, 63
      %s1272 = smul.addr %s1271, 8
      %s1273 = scalar_lea.vmem %s8, %s1272
      // Predicated region
      $region53: #{subnet_forward.4} parent=51 // pred_check
        %p1274 = pneg %p215
      $region54: #{subnet_forward.4} parent=51 // pred_check_branch
        %1276 = sbr.rel (%p1274) target = $region56
      $region55: #{subnet_forward.4} parent=51 // pred_region
        %s1277 = smul.u32 16, %s19
      $region56: #{subnet_forward.4} parent=51 // pred_fallthru
        _
    $region52: #{subnet_forward.4} parent=5 // pred_fallthru
      _
    %p1278 = scmp.le.s32.totalorder 2, %s14
    // Predicated region
    $region57: #{subnet_forward.4} parent=5 // pred_check
      %p1279 = pneg %p1278
    $region58: #{subnet_forward.4} parent=5 // pred_check_branch
      %1281 = sbr.rel (%p1279) target = $region60
    $region59: #{subnet_forward.4} parent=5 // pred_region
      %s1282 = ssub.s32 %s14, 2
      // Predicated region
      $region61: #{subnet_forward.4} parent=59 // pred_check
        %p1283 = pneg %p221
      $region62: #{subnet_forward.4} parent=59 // pred_check_branch
        %1285 = sbr.rel (%p1283) target = $region64
      $region63: #{subnet_forward.4} parent=59 // pred_region
        %s1286 = smul.u32 16, %s20
        %p1287 = scmp.lt.s32.totalorder %s1286, 63
        %s1288 = scalar_select %p1287, %s1286, 63
        %s1289 = smul.addr %s1288, 8
        %s1290 = scalar_lea.vmem %s8, %s1289
      $region64: #{subnet_forward.4} parent=59 // pred_fallthru
        _
    $region60: #{subnet_forward.4} parent=5 // pred_fallthru
      _
  $region6: #{subnet_forward.4} parent=0 // loop_footer
    %s18 = sadd.s32 1, %s14
  $region7: #{subnet_forward.4} parent=0 // loop_footer_branch
    %13 = sbr.rel target = $region3
  $region8: #{subnet_forward.4} parent=0 // loop_exit
    _

// kernel: subnet_forward.6
$region0: #{subnet_forward.6}
  #allocation0 [shape = 'u32[]', space=smem, size = 0x4, offset = 0x4, fixed_abs, tag = 'smem constant byte address 0x4 - core index']
  #allocation1 [shape = 'u32[144,128]{1,0:T(1,128)}', space=vmem, size = 0x12000, scoped, tag = 'internal scratch']
  %s0 = inlined_call_operand.vmem [shape: f32[4,32,128], index: 0, kind: input, shape index: {}]
  %s1 = inlined_call_operand.vmem [shape: f32[8,128], index: 1, kind: input, shape index: {}]
  %s2 = inlined_call_operand.vmem [shape: f32[32,128], index: 2, kind: input, shape index: {}, may-alias: {2,10}]
  %s3 = inlined_call_operand.vmem [shape: f32[1,128], index: 3, kind: input, shape index: {}]
  %s4 = inlined_call_operand.vmem [shape: bf16[128,128], index: 4, kind: input, shape index: {}]
  %s5 = inlined_call_operand.vmem [shape: f32[1,128], index: 5, kind: input, shape index: {}]
  %s6 = inlined_call_operand.vmem [shape: bf16[512,128], index: 6, kind: input, shape index: {}]
  %s7 = inlined_call_operand.vmem [shape: f32[1,128], index: 7, kind: input, shape index: {}]
  %s8 = inlined_call_operand.vmem [shape: bf16[2,128,128], index: 8, kind: input, shape index: {}]
  %s9 = inlined_call_operand.vmem [shape: f32[2,1,128], index: 9, kind: input, shape index: {}]
  %s10 = inlined_call_operand.vmem [shape: f32[32,128], index: 10, kind: output, shape index: {}, may-alias: {2,10}]
  %s11 = sld [smem:[#allocation0]]
  $region111: #{subnet_forward.6} parent=0
    _
  %s13 = ssub.s32 1, %s11
  %s14 = scalar_select 0, %s13, %s11
  $region1: #{subnet_forward.6} parent=0
    #allocation2 [shape = 'u8[32768]{0}', space=vmem, size = 0x8000, scoped, tag = 'input window, operand 0']
    loop: start=0, step=1, limit=6
    $region2: #{subnet_forward.6} parent=1 // loop_pre_header
      _
    $region3: #{subnet_forward.6} parent=1 // loop_header
      %s16 = sphi 0, %s20
      %p17 = scmp.ge.s32.totalorder %s16, 6
      %s26 = sphi 0, %s28
      %s29 = sphi 0, %s26
      %s30 = sphi 0, %s29
      %s46 = sphi 0, %s30
      %s50 = sphi 0, %s50
      %s52 = sphi 0, %s50
      %s53 = sphi 0, %s52
      %s67 = sphi 0, %s53
      %s73 = sphi 0, %s75
      %s76 = sphi 0, %s73
      %s77 = sphi 0, %s76
      %s93 = sphi 0, %s77
      %s97 = sphi 0, %s97
      %s99 = sphi 0, %s97
      %s100 = sphi 0, %s99
      %s114 = sphi 0, %s100
      %s118 = sphi 0, %s118
      %s120 = sphi 0, %s118
      %s121 = sphi 0, %s120
      %s135 = sphi 0, %s121
      %s139 = sphi 0, %s139
      %s141 = sphi 0, %s139
      %s142 = sphi 0, %s141
      %s156 = sphi 0, %s142
      %s160 = sphi 0, %s160
      %s162 = sphi 0, %s160
      %s163 = sphi 0, %s162
      %s177 = sphi 0, %s163
      %s181 = sphi 0, %s181
      %s183 = sphi 0, %s181
      %s184 = sphi 0, %s183
      %s198 = sphi 0, %s184
      %s202 = sphi 0, %s202
      %s204 = sphi 0, %s202
      %s205 = sphi 0, %s204
      %s219 = sphi 0, %s205
      %s223 = sphi 0, %s223
      %s225 = sphi 0, %s223
      %s226 = sphi 0, %s225
      %s240 = sphi 0, %s226
      %s246 = sphi 0, %s248
      %s249 = sphi 0, %s246
      %s250 = sphi 0, %s249
      %s266 = sphi 0, %s250
    $region4: #{subnet_forward.6} parent=1 // loop_header_branch
      %19 = sbr.rel (%p17) target = $region8
    $region5: #{subnet_forward.6} parent=1 // loop_body
      %s21 = ssub.s32 %s16, 1
      %s22 = ssub.s32 %s16, 2
      %s23 = sadd.s32 %s16, 1
      %s24 = ssub.s32 %s16, %s23
      %p25 = scmp.eq.s32.totalorder %s24, 0
      %s27 = sadd.s32 %s26, 1
      %s28 = scalar_select %p25, %s26, %s27
      %p31 = pneg %p25
      %p32 = scmp.eq.s32.totalorder %s16, 3
      %p33 = por %p31, %p32
      %p34 = scmp.ne.s32.totalorder %s26, %s29
      %p35 = scmp.eq.s32.totalorder %s16, 0
      %p36 = por %p34, %p35
      %p37 = scmp.ne.s32.totalorder %s26, %s29
      %p38 = scmp.eq.s32.totalorder %s21, 3
      %p39 = por %p37, %p38
      %p40 = scmp.ne.s32.totalorder %s29, %s30
      %p41 = scmp.eq.s32.totalorder %s21, 0
      %p42 = por %p40, %p41
      %p43 = scmp.ne.s32.totalorder %s29, %s30
      %p44 = scmp.eq.s32.totalorder %s22, 3
      %p45 = por %p43, %p44
      %p47 = scmp.ne.s32.totalorder %s30, %s46
      %p48 = scmp.eq.s32.totalorder %s22, 0
      %p49 = por %p47, %p48
      %s51 = sadd.s32 %s50, 1
      %p54 = scmp.eq.s32.totalorder %s16, 3
      %p55 = scmp.ne.s32.totalorder %s50, %s52
      %p56 = scmp.eq.s32.totalorder %s16, 0
      %p57 = por %p55, %p56
      %p58 = scmp.ne.s32.totalorder %s50, %s52
      %p59 = scmp.eq.s32.totalorder %s21, 3
      %p60 = por %p58, %p59
      %p61 = scmp.ne.s32.totalorder %s52, %s53
      %p62 = scmp.eq.s32.totalorder %s21, 0
      %p63 = por %p61, %p62
      %p64 = scmp.ne.s32.totalorder %s52, %s53
      %p65 = scmp.eq.s32.totalorder %s22, 3
      %p66 = por %p64, %p65
      %p68 = scmp.ne.s32.totalorder %s53, %s67
      %p69 = scmp.eq.s32.totalorder %s22, 0
      %p70 = por %p68, %p69
      %s71 = ssub.s32 %s16, %s23
      %p72 = scmp.eq.s32.totalorder %s71, 0
      %s74 = sadd.s32 %s73, 1
      %s75 = scalar_select %p72, %s73, %s74
      %p78 = pneg %p72
      %p79 = scmp.eq.s32.totalorder %s16, 3
      %p80 = por %p78, %p79
      %p81 = scmp.ne.s32.totalorder %s73, %s76
      %p82 = scmp.eq.s32.totalorder %s16, 0
      %p83 = por %p81, %p82
      %p84 = scmp.ne.s32.totalorder %s73, %s76
      %p85 = scmp.eq.s32.totalorder %s21, 3
      %p86 = por %p84, %p85
      %p87 = scmp.ne.s32.totalorder %s76, %s77
      %p88 = scmp.eq.s32.totalorder %s21, 0
      %p89 = por %p87, %p88
      %p90 = scmp.ne.s32.totalorder %s76, %s77
      %p91 = scmp.eq.s32.totalorder %s22, 3
      %p92 = por %p90, %p91
      %p94 = scmp.ne.s32.totalorder %s77, %s93
      %p95 = scmp.eq.s32.totalorder %s22, 0
      %p96 = por %p94, %p95
      %s98 = sadd.s32 %s97, 1
      %p101 = scmp.eq.s32.totalorder %s16, 3
      %p102 = scmp.ne.s32.totalorder %s97, %s99
      %p103 = scmp.eq.s32.totalorder %s16, 0
      %p104 = por %p102, %p103
      %p105 = scmp.ne.s32.totalorder %s97, %s99
      %p106 = scmp.eq.s32.totalorder %s21, 3
      %p107 = por %p105, %p106
      %p108 = scmp.ne.s32.totalorder %s99, %s100
      %p109 = scmp.eq.s32.totalorder %s21, 0
      %p110 = por %p108, %p109
      %p111 = scmp.ne.s32.totalorder %s99, %s100
      %p112 = scmp.eq.s32.totalorder %s22, 3
      %p113 = por %p111, %p112
      %p115 = scmp.ne.s32.totalorder %s100, %s114
      %p116 = scmp.eq.s32.totalorder %s22, 0
      %p117 = por %p115, %p116
      %s119 = sadd.s32 %s118, 1
      %p122 = scmp.eq.s32.totalorder %s16, 3
      %p123 = scmp.ne.s32.totalorder %s118, %s120
      %p124 = scmp.eq.s32.totalorder %s16, 0
      %p125 = por %p123, %p124
      %p126 = scmp.ne.s32.totalorder %s118, %s120
      %p127 = scmp.eq.s32.totalorder %s21, 3
      %p128 = por %p126, %p127
      %p129 = scmp.ne.s32.totalorder %s120, %s121
      %p130 = scmp.eq.s32.totalorder %s21, 0
      %p131 = por %p129, %p130
      %p132 = scmp.ne.s32.totalorder %s120, %s121
      %p133 = scmp.eq.s32.totalorder %s22, 3
      %p134 = por %p132, %p133
      %p136 = scmp.ne.s32.totalorder %s121, %s135
      %p137 = scmp.eq.s32.totalorder %s22, 0
      %p138 = por %p136, %p137
      %s140 = sadd.s32 %s139, 1
      %p143 = scmp.eq.s32.totalorder %s16, 3
      %p144 = scmp.ne.s32.totalorder %s139, %s141
      %p145 = scmp.eq.s32.totalorder %s16, 0
      %p146 = por %p144, %p145
      %p147 = scmp.ne.s32.totalorder %s139, %s141
      %p148 = scmp.eq.s32.totalorder %s21, 3
      %p149 = por %p147, %p148
      %p150 = scmp.ne.s32.totalorder %s141, %s142
      %p151 = scmp.eq.s32.totalorder %s21, 0
      %p152 = por %p150, %p151
      %p153 = scmp.ne.s32.totalorder %s141, %s142
      %p154 = scmp.eq.s32.totalorder %s22, 3
      %p155 = por %p153, %p154
      %p157 = scmp.ne.s32.totalorder %s142, %s156
      %p158 = scmp.eq.s32.totalorder %s22, 0
      %p159 = por %p157, %p158
      %s161 = sadd.s32 %s160, 1
      %p164 = scmp.eq.s32.totalorder %s16, 3
      %p165 = scmp.ne.s32.totalorder %s160, %s162
      %p166 = scmp.eq.s32.totalorder %s16, 0
      %p167 = por %p165, %p166
      %p168 = scmp.ne.s32.totalorder %s160, %s162
      %p169 = scmp.eq.s32.totalorder %s21, 3
      %p170 = por %p168, %p169
      %p171 = scmp.ne.s32.totalorder %s162, %s163
      %p172 = scmp.eq.s32.totalorder %s21, 0
      %p173 = por %p171, %p172
      %p174 = scmp.ne.s32.totalorder %s162, %s163
      %p175 = scmp.eq.s32.totalorder %s22, 3
      %p176 = por %p174, %p175
      %p178 = scmp.ne.s32.totalorder %s163, %s177
      %p179 = scmp.eq.s32.totalorder %s22, 0
      %p180 = por %p178, %p179
      %s182 = sadd.s32 %s181, 1
      %p185 = scmp.eq.s32.totalorder %s16, 3
      %p186 = scmp.ne.s32.totalorder %s181, %s183
      %p187 = scmp.eq.s32.totalorder %s16, 0
      %p188 = por %p186, %p187
      %p189 = scmp.ne.s32.totalorder %s181, %s183
      %p190 = scmp.eq.s32.totalorder %s21, 3
      %p191 = por %p189, %p190
      %p192 = scmp.ne.s32.totalorder %s183, %s184
      %p193 = scmp.eq.s32.totalorder %s21, 0
      %p194 = por %p192, %p193
      %p195 = scmp.ne.s32.totalorder %s183, %s184
      %p196 = scmp.eq.s32.totalorder %s22, 3
      %p197 = por %p195, %p196
      %p199 = scmp.ne.s32.totalorder %s184, %s198
      %p200 = scmp.eq.s32.totalorder %s22, 0
      %p201 = por %p199, %p200
      %s203 = sadd.s32 %s202, 1
      %p206 = scmp.eq.s32.totalorder %s16, 3
      %p207 = scmp.ne.s32.totalorder %s202, %s204
      %p208 = scmp.eq.s32.totalorder %s16, 0
      %p209 = por %p207, %p208
      %p210 = scmp.ne.s32.totalorder %s202, %s204
      %p211 = scmp.eq.s32.totalorder %s21, 3
      %p212 = por %p210, %p211
      %p213 = scmp.ne.s32.totalorder %s204, %s205
      %p214 = scmp.eq.s32.totalorder %s21, 0
      %p215 = por %p213, %p214
      %p216 = scmp.ne.s32.totalorder %s204, %s205
      %p217 = scmp.eq.s32.totalorder %s22, 3
      %p218 = por %p216, %p217
      %p220 = scmp.ne.s32.totalorder %s205, %s219
      %p221 = scmp.eq.s32.totalorder %s22, 0
      %p222 = por %p220, %p221
      %s224 = sadd.s32 %s223, 1
      %p227 = scmp.eq.s32.totalorder %s16, 3
      %p228 = scmp.ne.s32.totalorder %s223, %s225
      %p229 = scmp.eq.s32.totalorder %s16, 0
      %p230 = por %p228, %p229
      %p231 = scmp.ne.s32.totalorder %s223, %s225
      %p232 = scmp.eq.s32.totalorder %s21, 3
      %p233 = por %p231, %p232
      %p234 = scmp.ne.s32.totalorder %s225, %s226
      %p235 = scmp.eq.s32.totalorder %s21, 0
      %p236 = por %p234, %p235
      %p237 = scmp.ne.s32.totalorder %s225, %s226
      %p238 = scmp.eq.s32.totalorder %s22, 3
      %p239 = por %p237, %p238
      %p241 = scmp.ne.s32.totalorder %s226, %s240
      %p242 = scmp.eq.s32.totalorder %s22, 0
      %p243 = por %p241, %p242
      %s244 = ssub.s32 %s16, %s23
      %p245 = scmp.eq.s32.totalorder %s244, 0
      %s247 = sadd.s32 %s246, 1
      %s248 = scalar_select %p245, %s246, %s247
      %p251 = pneg %p245
      %p252 = scmp.eq.s32.totalorder %s16, 3
      %p253 = por %p251, %p252
      %p254 = scmp.ne.s32.totalorder %s246, %s249
      %p255 = scmp.eq.s32.totalorder %s16, 0
      %p256 = por %p254, %p255
      %p257 = scmp.ne.s32.totalorder %s246, %s249
      %p258 = scmp.eq.s32.totalorder %s21, 3
      %p259 = por %p257, %p258
      %p260 = scmp.ne.s32.totalorder %s249, %s250
      %p261 = scmp.eq.s32.totalorder %s21, 0
      %p262 = por %p260, %p261
      %p263 = scmp.ne.s32.totalorder %s249, %s250
      %p264 = scmp.eq.s32.totalorder %s22, 3
      %p265 = por %p263, %p264
      %p267 = scmp.ne.s32.totalorder %s250, %s266
      %p268 = scmp.eq.s32.totalorder %s22, 0
      %p269 = por %p267, %p268
      %p270 = scmp.le.s32.totalorder 1, %s16
      %p271 = scmp.lt.s32.totalorder %s16, 5
      %p272 = pnand %p270, %p271
      %p273 = pneg %p272
      // Predicated region
      $region9: #{subnet_forward.6} parent=5 // pred_check
        _
      $region10: #{subnet_forward.6} parent=5 // pred_check_branch
        %275 = sbr.rel (%p272) target = $region12
      $region11: #{subnet_forward.6} parent=5 // pred_region
        %s276 = ssub.s32 %s16, 1
        // Predicated region
        $region13: #{subnet_forward.6} parent=11 // pred_check
          %p277 = pneg %p63
        $region14: #{subnet_forward.6} parent=11 // pred_check_branch
          %279 = sbr.rel (%p277) target = $region16
        $region15: #{subnet_forward.6} parent=11 // pred_region
          _
        $region16: #{subnet_forward.6} parent=11 // pred_fallthru
          _
        // Predicated region
        $region17: #{subnet_forward.6} parent=11 // pred_check
          %p280 = pneg %p110
        $region18: #{subnet_forward.6} parent=11 // pred_check_branch
          %282 = sbr.rel (%p280) target = $region20
        $region19: #{subnet_forward.6} parent=11 // pred_region
          _
        $region20: #{subnet_forward.6} parent=11 // pred_fallthru
          _
        // Predicated region
        $region21: #{subnet_forward.6} parent=11 // pred_check
          %p283 = pneg %p131
        $region22: #{subnet_forward.6} parent=11 // pred_check_branch
          %285 = sbr.rel (%p283) target = $region24
        $region23: #{subnet_forward.6} parent=11 // pred_region
          _
        $region24: #{subnet_forward.6} parent=11 // pred_fallthru
          _
        // Predicated region
        $region25: #{subnet_forward.6} parent=11 // pred_check
          %p286 = pneg %p152
        $region26: #{subnet_forward.6} parent=11 // pred_check_branch
          %288 = sbr.rel (%p286) target = $region28
        $region27: #{subnet_forward.6} parent=11 // pred_region
          _
        $region28: #{subnet_forward.6} parent=11 // pred_fallthru
          _
        // Predicated region
        $region29: #{subnet_forward.6} parent=11 // pred_check
          %p289 = pneg %p173
        $region30: #{subnet_forward.6} parent=11 // pred_check_branch
          %291 = sbr.rel (%p289) target = $region32
        $region31: #{subnet_forward.6} parent=11 // pred_region
          _
        $region32: #{subnet_forward.6} parent=11 // pred_fallthru
          _
        // Predicated region
        $region33: #{subnet_forward.6} parent=11 // pred_check
          %p292 = pneg %p194
        $region34: #{subnet_forward.6} parent=11 // pred_check_branch
          %294 = sbr.rel (%p292) target = $region36
        $region35: #{subnet_forward.6} parent=11 // pred_region
          _
        $region36: #{subnet_forward.6} parent=11 // pred_fallthru
          _
        // Predicated region
        $region37: #{subnet_forward.6} parent=11 // pred_check
          %p295 = pneg %p215
        $region38: #{subnet_forward.6} parent=11 // pred_check_branch
          %297 = sbr.rel (%p295) target = $region40
        $region39: #{subnet_forward.6} parent=11 // pred_region
          _
        $region40: #{subnet_forward.6} parent=11 // pred_fallthru
          _
        // Predicated region
        $region41: #{subnet_forward.6} parent=11 // pred_check
          %p298 = pneg %p236
        $region42: #{subnet_forward.6} parent=11 // pred_check_branch
          %300 = sbr.rel (%p298) target = $region44
        $region43: #{subnet_forward.6} parent=11 // pred_region
          _
        $region44: #{subnet_forward.6} parent=11 // pred_fallthru
          _
      $region12: #{subnet_forward.6} parent=5 // pred_fallthru
        _
      %p301 = scmp.lt.s32.totalorder %s16, 4
      // Predicated region
      $region45: #{subnet_forward.6} parent=5 // pred_check
        %p302 = pneg %p301
      $region46: #{subnet_forward.6} parent=5 // pred_check_branch
        %304 = sbr.rel (%p302) target = $region48
      $region47: #{subnet_forward.6} parent=5 // pred_region
        // Predicated region
        $region49: #{subnet_forward.6} parent=47 // pred_check
          %p305 = pneg %p36
        $region50: #{subnet_forward.6} parent=47 // pred_check_branch
          %307 = sbr.rel (%p305) target = $region52
        $region51: #{subnet_forward.6} parent=47 // pred_region
          %s308 = sand.u32 %s26, 1
          %s309 = sand.u32 %s26, 1
          %s310 = smul.addr %s309, 32
          %s311 = scalar_lea.vmem [#allocation2], %s310
          %s312 = smul.addr %s16, 8
          %s313 = scalar_lea.vmem %s0, %s312
          // Predicated region
          $region53: #{subnet_forward.6} parent=51 // pred_check
            _
          $region54: #{subnet_forward.6} parent=51 // pred_check_branch
            %315 = sbr.rel (0) target = $region56
          $region55: #{subnet_forward.6} parent=51 // pred_region
            // Predicated region
            $region57: #{subnet_forward.6} parent=55 // pred_check
              _
            $region58: #{subnet_forward.6} parent=55 // pred_check_branch
              %317 = sbr.rel (0) target = $region60
            $region59: #{subnet_forward.6} parent=55 // pred_region
              // Predicated region
              $region72: #{subnet_forward.6} parent=59 // pred_check
                _
              $region73: #{subnet_forward.6} parent=59 // pred_check_branch
                %338 = sbr.rel (0) target = $region75
              $region74: #{subnet_forward.6} parent=59 // pred_region
                loop: start=0, step=1, limit=1
                $region76: #{subnet_forward.6} parent=74 // loop_pre_header
                  _
                $region77: #{subnet_forward.6} parent=74 // loop_header
                  %s340 = sphi 0, %s344
                  %p341 = scmp.ge.s32.totalorder %s340, 1
                  %s345 = sphi %s313, %s313
                  %s346 = sphi %s311, %s311
                $region78: #{subnet_forward.6} parent=74 // loop_header_branch
                  %343 = sbr.rel (%p341) target = $region82
                $region79: #{subnet_forward.6} parent=74 // loop_body
                  %v347 = vld [vmem:[%s345] sm:$0xff]
                  %348 = vst [vmem:[%s346] sm:$0xff] %v347
                  %v349 = vld [vmem:[%s345 + $0x20] sm:$0xff]
                  %350 = vst [vmem:[%s346 + $0x8] sm:$0xff] %v349
                  %v351 = vld [vmem:[%s345 + $0x40] sm:$0xff]
                  %352 = vst [vmem:[%s346 + $0x10] sm:$0xff] %v351
                  %v353 = vld [vmem:[%s345 + $0x60] sm:$0xff]
                  %354 = vst [vmem:[%s346 + $0x18] sm:$0xff] %v353
                $region80: #{subnet_forward.6} parent=74 // loop_footer
                  %s344 = sadd.s32 1, %s340
                $region81: #{subnet_forward.6} parent=74 // loop_footer_branch
                  %339 = sbr.rel target = $region77
                $region82: #{subnet_forward.6} parent=74 // loop_exit
                  _
              $region75: #{subnet_forward.6} parent=59 // pred_fallthru
                _
              // Predicated region
              $region83: #{subnet_forward.6} parent=59 // pred_check
                _
              $region84: #{subnet_forward.6} parent=59 // pred_check_branch
                %356 = sbr.rel target = $region86
              $region85: #{subnet_forward.6} parent=59 // pred_region
                _
              $region86: #{subnet_forward.6} parent=59 // pred_fallthru
                _
            $region60: #{subnet_forward.6} parent=55 // pred_fallthru
              _
            // Predicated region
            $region61: #{subnet_forward.6} parent=55 // pred_check
              _
            $region62: #{subnet_forward.6} parent=55 // pred_check_branch
              %319 = sbr.rel target = $region64
            $region63: #{subnet_forward.6} parent=55 // pred_region
              loop: start=0, step=1, limit=1
              $region65: #{subnet_forward.6} parent=63 // loop_pre_header
                _
              $region66: #{subnet_forward.6} parent=63 // loop_header
                %s322 = sphi 0, %s326
                %p323 = scmp.ge.s32.totalorder %s322, 1
                %s327 = sphi %s313, %s313
                %s328 = sphi %s311, %s311
              $region67: #{subnet_forward.6} parent=63 // loop_header_branch
                %325 = sbr.rel (%p323) target = $region71
              $region68: #{subnet_forward.6} parent=63 // loop_body
                %v329 = vld [vmem:[%s327] sm:$0xff]
                %330 = vst [vmem:[%s328] sm:$0xff] %v329
                %v331 = vld [vmem:[%s327 + $0x20] sm:$0xff]
                %332 = vst [vmem:[%s328 + $0x8] sm:$0xff] %v331
                %v333 = vld [vmem:[%s327 + $0x40] sm:$0xff]
                %334 = vst [vmem:[%s328 + $0x10] sm:$0xff] %v333
                %v335 = vld [vmem:[%s327 + $0x60] sm:$0xff]
                %336 = vst [vmem:[%s328 + $0x18] sm:$0xff] %v335
              $region69: #{subnet_forward.6} parent=63 // loop_footer
                %s326 = sadd.s32 1, %s322
              $region70: #{subnet_forward.6} parent=63 // loop_footer_branch
                %321 = sbr.rel target = $region66
              $region71: #{subnet_forward.6} parent=63 // loop_exit
                _
            $region64: #{subnet_forward.6} parent=55 // pred_fallthru
              _
          $region56: #{subnet_forward.6} parent=51 // pred_fallthru
            _
          %357 = vnop
        $region52: #{subnet_forward.6} parent=47 // pred_fallthru
          _
        // Predicated region
        $region87: #{subnet_forward.6} parent=47 // pred_check
          %p358 = pneg %p83
        $region88: #{subnet_forward.6} parent=47 // pred_check_branch
          %360 = sbr.rel (%p358) target = $region90
        $region89: #{subnet_forward.6} parent=47 // pred_region
          %p361 = scmp.lt.s32.totalorder %s16, 3
          %s362 = scalar_select %p361, %s16, 3
          %s363 = smul.addr %s362, 8
          %s364 = scalar_lea.vmem %s2, %s363
        $region90: #{subnet_forward.6} parent=47 // pred_fallthru
          _
      $region48: #{subnet_forward.6} parent=5 // pred_fallthru
        _
      %p365 = scmp.le.s32.totalorder 1, %s16
      %p366 = scmp.lt.s32.totalorder %s16, 5
      %p367 = pnand %p365, %p366
      %p368 = pneg %p367
      // Predicated region
      $region91: #{subnet_forward.6} parent=5 // pred_check
        _
      $region92: #{subnet_forward.6} parent=5 // pred_check_branch
        %370 = sbr.rel (%p367) target = $region94
      $region93: #{subnet_forward.6} parent=5 // pred_region
        %s371 = ssub.s32 %s16, 1
        %s372 = sand.u32 %s29, 1
        %s373 = sand.u32 %s29, 1
        %s374 = smul.addr %s373, 32
        %s375 = scalar_lea.vmem [#allocation2], %s374
        // Predicated region
        $region95: #{subnet_forward.6} parent=93 // pred_check
          %p376 = pneg %p42
        $region96: #{subnet_forward.6} parent=93 // pred_check_branch
          %378 = sbr.rel (%p376) target = $region98
        $region97: #{subnet_forward.6} parent=93 // pred_region
          _
        $region98: #{subnet_forward.6} parent=93 // pred_fallthru
          _
        %s379 = sand.u32 %s29, 1
        %s380 = sand.u32 %s29, 1
        %s381 = smul.addr %s380, 32
        %s382 = scalar_lea.vmem [#allocation2], %s381
        %p383 = pneg %p42
        %p384 = pneg %p39
        %p385 = pneg %p63
        %p386 = pneg %p60
        %p387 = scmp.lt.s32.totalorder %s21, 3
        %s388 = scalar_select %p387, %s21, 3
        %s389 = smul.addr %s388, 8
        %s390 = scalar_lea.vmem %s2, %s389
        %p391 = pneg %p89
        %p392 = pneg %p86
        %p393 = pneg %p110
        %p394 = pneg %p107
        %p395 = pneg %p131
        %p396 = pneg %p128
        %p397 = pneg %p152
        %p398 = pneg %p149
        %p399 = pneg %p173
        %p400 = pneg %p170
        %p401 = pneg %p194
        %p402 = pneg %p191
        %p403 = pneg %p215
        %p404 = pneg %p212
        %p405 = pneg %p236
        %p406 = pneg %p233
        %p407 = pneg %p262
        %p408 = pneg %p259
        %p409 = scmp.lt.s32.totalorder %s21, 3
        %s410 = scalar_select %p409, %s21, 3
        %s411 = smul.addr %s410, 8
        %s412 = scalar_lea.vmem %s10, %s411
        %p413 = scmp.lt.s32.totalorder %s21, 3
        %s414 = scalar_select %p413, %s21, 3
        %s415 = smul.addr %s414, 8
        %s416 = scalar_lea.vmem %s2, %s415
        %p417 = scmp.lt.s32.totalorder %s21, 3
        %s418 = scalar_select %p417, %s21, 3
        %s419 = smul.addr %s418, 8
        %s420 = scalar_lea.vmem %s10, %s419
        %v422 = vld [vmem:[%s375] sm:$0xff]
        %v423 = vld [vmem:[%s375 + $0x8] sm:$0xff]
        %v424 = vld [vmem:[%s375 + $0x10] sm:$0xff]
        %v425 = vld [vmem:[%s375 + $0x18] sm:$0xff]
        %v426 = vpack.c.bf16 %v422, %v422
        %v427 = vpack.c.bf16 %v423, %v423
        %v428 = vpack.c.bf16 %v424, %v424
        %v429 = vpack.c.bf16 %v425, %v425
        %v430 = vld [vmem:[%s6] sm:$0xf]
        %v431 = vld [vmem:[%s6 + $0x4] sm:$0xf]
        %v432 = vld [vmem:[%s6 + $0x8] sm:$0xf]
        %v433 = vld [vmem:[%s6 + $0xc] sm:$0xf]
        %v434 = vld [vmem:[%s6 + $0x10] sm:$0xf]
        %v435 = vld [vmem:[%s6 + $0x14] sm:$0xf]
        %v436 = vld [vmem:[%s6 + $0x18] sm:$0xf]
        %v437 = vld [vmem:[%s6 + $0x1c] sm:$0xf]
        %v438 = vld [vmem:[%s6 + $0x20] sm:$0xf]
        %v439 = vld [vmem:[%s6 + $0x24] sm:$0xf]
        %v440 = vld [vmem:[%s6 + $0x28] sm:$0xf]
        %v441 = vld [vmem:[%s6 + $0x2c] sm:$0xf]
        %v442 = vld [vmem:[%s6 + $0x30] sm:$0xf]
        %v443 = vld [vmem:[%s6 + $0x34] sm:$0xf]
        %v444 = vld [vmem:[%s6 + $0x38] sm:$0xf]
        %v445 = vld [vmem:[%s6 + $0x3c] sm:$0xf]
        %v446 = vld [vmem:[%s6 + $0x40] sm:$0xf]
        %v447 = vld [vmem:[%s6 + $0x44] sm:$0xf]
        %v448 = vld [vmem:[%s6 + $0x48] sm:$0xf]
        %v449 = vld [vmem:[%s6 + $0x4c] sm:$0xf]
        %v450 = vld [vmem:[%s6 + $0x50] sm:$0xf]
        %v451 = vld [vmem:[%s6 + $0x54] sm:$0xf]
        %v452 = vld [vmem:[%s6 + $0x58] sm:$0xf]
        %v453 = vld [vmem:[%s6 + $0x5c] sm:$0xf]
        %v454 = vld [vmem:[%s6 + $0x60] sm:$0xf]
        %v455 = vld [vmem:[%s6 + $0x64] sm:$0xf]
        %v456 = vld [vmem:[%s6 + $0x68] sm:$0xf]
        %v457 = vld [vmem:[%s6 + $0x6c] sm:$0xf]
        %v458 = vld [vmem:[%s6 + $0x70] sm:$0xf]
        %v459 = vld [vmem:[%s6 + $0x74] sm:$0xf]
        %v460 = vld [vmem:[%s6 + $0x78] sm:$0xf]
        %v461 = vld [vmem:[%s6 + $0x7c] sm:$0xf]
        %v462 = vld [vmem:[%s6 + $0x80] sm:$0xf]
        %v463 = vld [vmem:[%s6 + $0x84] sm:$0xf]
        %v464 = vld [vmem:[%s6 + $0x88] sm:$0xf]
        %v465 = vld [vmem:[%s6 + $0x8c] sm:$0xf]
        %v466 = vld [vmem:[%s6 + $0x90] sm:$0xf]
        %v467 = vld [vmem:[%s6 + $0x94] sm:$0xf]
        %v468 = vld [vmem:[%s6 + $0x98] sm:$0xf]
        %v469 = vld [vmem:[%s6 + $0x9c] sm:$0xf]
        %v470 = vld [vmem:[%s6 + $0xa0] sm:$0xf]
        %v471 = vld [vmem:[%s6 + $0xa4] sm:$0xf]
        %v472 = vld [vmem:[%s6 + $0xa8] sm:$0xf]
        %v473 = vld [vmem:[%s6 + $0xac] sm:$0xf]
        %v474 = vld [vmem:[%s6 + $0xb0] sm:$0xf]
        %v475 = vld [vmem:[%s6 + $0xb4] sm:$0xf]
        %v476 = vld [vmem:[%s6 + $0xb8] sm:$0xf]
        %v477 = vld [vmem:[%s6 + $0xbc] sm:$0xf]
        %v478 = vld [vmem:[%s6 + $0xc0] sm:$0xf]
        %v479 = vld [vmem:[%s6 + $0xc4] sm:$0xf]
        %v480 = vld [vmem:[%s6 + $0xc8] sm:$0xf]
        %v481 = vld [vmem:[%s6 + $0xcc] sm:$0xf]
        %v482 = vld [vmem:[%s6 + $0xd0] sm:$0xf]
        %v483 = vld [vmem:[%s6 + $0xd4] sm:$0xf]
        %v484 = vld [vmem:[%s6 + $0xd8] sm:$0xf]
        %v485 = vld [vmem:[%s6 + $0xdc] sm:$0xf]
        %v486 = vld [vmem:[%s6 + $0xe0] sm:$0xf]
        %v487 = vld [vmem:[%s6 + $0xe4] sm:$0xf]
        %v488 = vld [vmem:[%s6 + $0xe8] sm:$0xf]
        %v489 = vld [vmem:[%s6 + $0xec] sm:$0xf]
        %v490 = vld [vmem:[%s6 + $0xf0] sm:$0xf]
        %v491 = vld [vmem:[%s6 + $0xf4] sm:$0xf]
        %v492 = vld [vmem:[%s6 + $0xf8] sm:$0xf]
        %v493 = vld [vmem:[%s6 + $0xfc] sm:$0xf]
        %v494 = vld [vmem:[%s7] sm:$0x1]
        %v496 = vlaneseq
        %v497 = vshrl.u32 %v496, 7
        %v498 = vsub.s32 0, %v497
        %v499 = vrot.slane %v494, %v498
        %v565 = vunpack.c.l.b16 %v430
        %v566 = vunpack.c.l.b16 %v431
        %v567 = vunpack.c.l.b16 %v432
        %v568 = vunpack.c.l.b16 %v433
        %v569 = vunpack.c.l.b16 %v434
        %v570 = vunpack.c.l.b16 %v435
        %v571 = vunpack.c.l.b16 %v436
        %v572 = vunpack.c.l.b16 %v437
        %v573 = vunpack.c.l.b16 %v438
        %v574 = vunpack.c.l.b16 %v439
        %v575 = vunpack.c.l.b16 %v440
        %v576 = vunpack.c.l.b16 %v441
        %v577 = vunpack.c.l.b16 %v442
        %v578 = vunpack.c.l.b16 %v443
        %v579 = vunpack.c.l.b16 %v444
        %v580 = vunpack.c.l.b16 %v445
        %v581 = vunpack.c.l.b16 %v446
        %v582 = vunpack.c.l.b16 %v447
        %v583 = vunpack.c.l.b16 %v448
        %v584 = vunpack.c.l.b16 %v449
        %v585 = vunpack.c.l.b16 %v450
        %v586 = vunpack.c.l.b16 %v451
        %v587 = vunpack.c.l.b16 %v452
        %v588 = vunpack.c.l.b16 %v453
        %v589 = vunpack.c.l.b16 %v454
        %v590 = vunpack.c.l.b16 %v455
        %v591 = vunpack.c.l.b16 %v456
        %v592 = vunpack.c.l.b16 %v457
        %v593 = vunpack.c.l.b16 %v458
        %v594 = vunpack.c.l.b16 %v459
        %v595 = vunpack.c.l.b16 %v460
        %v596 = vunpack.c.l.b16 %v461
        %v597 = vunpack.c.l.b16 %v462
        %v598 = vunpack.c.l.b16 %v463
        %v599 = vunpack.c.l.b16 %v464
        %v600 = vunpack.c.l.b16 %v465
        %v601 = vunpack.c.l.b16 %v466
        %v602 = vunpack.c.l.b16 %v467
        %v603 = vunpack.c.l.b16 %v468
        %v604 = vunpack.c.l.b16 %v469
        %v605 = vunpack.c.l.b16 %v470
        %v606 = vunpack.c.l.b16 %v471
        %v607 = vunpack.c.l.b16 %v472
        %v608 = vunpack.c.l.b16 %v473
        %v609 = vunpack.c.l.b16 %v474
        %v610 = vunpack.c.l.b16 %v475
        %v611 = vunpack.c.l.b16 %v476
        %v612 = vunpack.c.l.b16 %v477
        %v613 = vunpack.c.l.b16 %v478
        %v614 = vunpack.c.l.b16 %v479
        %v615 = vunpack.c.l.b16 %v480
        %v616 = vunpack.c.l.b16 %v481
        %v617 = vunpack.c.l.b16 %v482
        %v618 = vunpack.c.l.b16 %v483
        %v619 = vunpack.c.l.b16 %v484
        %v620 = vunpack.c.l.b16 %v485
        %v621 = vunpack.c.l.b16 %v486
        %v622 = vunpack.c.l.b16 %v487
        %v623 = vunpack.c.l.b16 %v488
        %v624 = vunpack.c.l.b16 %v489
        %v625 = vunpack.c.l.b16 %v490
        %v626 = vunpack.c.l.b16 %v491
        %v627 = vunpack.c.l.b16 %v492
        %v628 = vunpack.c.l.b16 %v493
        %v629 = vpack.c.b16 %v566, %v565
        %v630 = vpack.c.b16 %v568, %v567
        %v631 = vpack.c.b16 %v570, %v569
        %v632 = vpack.c.b16 %v572, %v571
        %v633 = vpack.c.b16 %v574, %v573
        %v634 = vpack.c.b16 %v576, %v575
        %v635 = vpack.c.b16 %v578, %v577
        %v636 = vpack.c.b16 %v580, %v579
        %v637 = vpack.c.b16 %v582, %v581
        %v638 = vpack.c.b16 %v584, %v583
        %v639 = vpack.c.b16 %v586, %v585
        %v640 = vpack.c.b16 %v588, %v587
        %v641 = vpack.c.b16 %v590, %v589
        %v642 = vpack.c.b16 %v592, %v591
        %v643 = vpack.c.b16 %v594, %v593
        %v644 = vpack.c.b16 %v596, %v595
        %v645 = vpack.c.b16 %v598, %v597
        %v646 = vpack.c.b16 %v600, %v599
        %v647 = vpack.c.b16 %v602, %v601
        %v648 = vpack.c.b16 %v604, %v603
        %v649 = vpack.c.b16 %v606, %v605
        %v650 = vpack.c.b16 %v608, %v607
        %v651 = vpack.c.b16 %v610, %v609
        %v652 = vpack.c.b16 %v612, %v611
        %v653 = vpack.c.b16 %v614, %v613
        %v654 = vpack.c.b16 %v616, %v615
        %v655 = vpack.c.b16 %v618, %v617
        %v656 = vpack.c.b16 %v620, %v619
        %v657 = vpack.c.b16 %v622, %v621
        %v658 = vpack.c.b16 %v624, %v623
        %v659 = vpack.c.b16 %v626, %v625
        %v660 = vpack.c.b16 %v628, %v627
        %693 = vmatprep.subr.bf16.mxu0 0
        %694 = vmatpush1.bf16.msra.mxu0 %v629
        %695 = vmatprep.subr.bf16.mxu0 0
        %696 = vmatpush1.bf16.msra.mxu0 %v630
        %697 = vmatprep.subr.bf16.mxu0 0
        %698 = vmatpush1.bf16.msra.mxu0 %v631
        %699 = vmatprep.subr.bf16.mxu0 0
        %700 = vmatpush1.bf16.msra.mxu0 %v632
        %701 = vmatprep.subr.bf16.mxu0 0
        %702 = vmatpush1.bf16.msra.mxu0 %v633
        %703 = vmatprep.subr.bf16.mxu0 0
        %704 = vmatpush1.bf16.msra.mxu0 %v634
        %705 = vmatprep.subr.bf16.mxu0 0
        %706 = vmatpush1.bf16.msra.mxu0 %v635
        %707 = vmatprep.subr.bf16.mxu0 0
        %708 = vmatpush1.bf16.msra.mxu0 %v636
        %709 = vmatprep.subr.bf16.mxu0 0
        %710 = vmatpush1.bf16.msra.mxu0 %v637
        %711 = vmatprep.subr.bf16.mxu0 0
        %712 = vmatpush1.bf16.msra.mxu0 %v638
        %713 = vmatprep.subr.bf16.mxu0 0
        %714 = vmatpush1.bf16.msra.mxu0 %v639
        %715 = vmatprep.subr.bf16.mxu0 0
        %716 = vmatpush1.bf16.msra.mxu0 %v640
        %717 = vmatprep.subr.bf16.mxu0 0
        %718 = vmatpush1.bf16.msra.mxu0 %v641
        %719 = vmatprep.subr.bf16.mxu0 0
        %720 = vmatpush1.bf16.msra.mxu0 %v642
        %721 = vmatprep.subr.bf16.mxu0 0
        %722 = vmatpush1.bf16.msra.mxu0 %v643
        %723 = vmatprep.subr.bf16.mxu0 0
        %724 = vmatpush1.bf16.msra.mxu0 %v644
        %725 = vmatprep.mubr.bf16.mxu0 %v427
        %726 = vmatmul.mubr.bf16.gmra.mrb[0].mxu0 %v426
        %v727 = vpop.f32.mrb[0].mxu0
        %v728 = vadd.f32 %v499, %v727
        %v729 = vpop.f32.mrb[0].mxu0
        %v730 = vpop.f32.mrb[0].mxu0
        %v731 = vpop.f32.mrb[0].mxu0
        %732 = vdwg.mxu0
        %733 = vmatprep.subr.bf16.mxu0 0
        %734 = vmatpush1.bf16.msra.mxu0 %v645
        %735 = vmatprep.subr.bf16.mxu0 0
        %736 = vmatpush1.bf16.msra.mxu0 %v646
        %737 = vmatprep.subr.bf16.mxu0 0
        %738 = vmatpush1.bf16.msra.mxu0 %v647
        %739 = vmatprep.subr.bf16.mxu0 0
        %740 = vmatpush1.bf16.msra.mxu0 %v648
        %741 = vmatprep.subr.bf16.mxu0 0
        %742 = vmatpush1.bf16.msra.mxu0 %v649
        %743 = vmatprep.subr.bf16.mxu0 0
        %744 = vmatpush1.bf16.msra.mxu0 %v650
        %745 = vmatprep.subr.bf16.mxu0 0
        %746 = vmatpush1.bf16.msra.mxu0 %v651
        %747 = vmatprep.subr.bf16.mxu0 0
        %748 = vmatpush1.bf16.msra.mxu0 %v652
        %749 = vmatprep.subr.bf16.mxu0 0
        %750 = vmatpush1.bf16.msra.mxu0 %v653
        %751 = vmatprep.subr.bf16.mxu0 0
        %752 = vmatpush1.bf16.msra.mxu0 %v654
        %753 = vmatprep.subr.bf16.mxu0 0
        %754 = vmatpush1.bf16.msra.mxu0 %v655
        %755 = vmatprep.subr.bf16.mxu0 0
        %756 = vmatpush1.bf16.msra.mxu0 %v656
        %757 = vmatprep.subr.bf16.mxu0 0
        %758 = vmatpush1.bf16.msra.mxu0 %v657
        %759 = vmatprep.subr.bf16.mxu0 0
        %760 = vmatpush1.bf16.msra.mxu0 %v658
        %761 = vmatprep.subr.bf16.mxu0 0
        %762 = vmatpush1.bf16.msra.mxu0 %v659
        %763 = vmatprep.subr.bf16.mxu0 0
        %764 = vmatpush1.bf16.msra.mxu0 %v660
        %765 = vmatprep.mubr.bf16.mxu0 %v429
        %766 = vmatmul.mubr.bf16.gmra.mrb[0].mxu0 %v428
        %v767 = vpop.f32.mrb[0].mxu0
        %v768 = vadd.f32 %v728, %v767
        %v769 = vpop.f32.mrb[0].mxu0
        %v770 = vpop.f32.mrb[0].mxu0
        %v771 = vpop.f32.mrb[0].mxu0
        %772 = vdwg.mxu0
        %v773 = vld [vmem:[%s1] sm:$0xff]
        %v774 = vpack.c.bf16 %v773, %v773
        %v775 = vld [vmem:[%s4] sm:$0xf]
        %v776 = vld [vmem:[%s4 + $0x4] sm:$0xf]
        %v777 = vld [vmem:[%s4 + $0x8] sm:$0xf]
        %v778 = vld [vmem:[%s4 + $0xc] sm:$0xf]
        %v779 = vld [vmem:[%s4 + $0x10] sm:$0xf]
        %v780 = vld [vmem:[%s4 + $0x14] sm:$0xf]
        %v781 = vld [vmem:[%s4 + $0x18] sm:$0xf]
        %v782 = vld [vmem:[%s4 + $0x1c] sm:$0xf]
        %v783 = vld [vmem:[%s4 + $0x20] sm:$0xf]
        %v784 = vld [vmem:[%s4 + $0x24] sm:$0xf]
        %v785 = vld [vmem:[%s4 + $0x28] sm:$0xf]
        %v786 = vld [vmem:[%s4 + $0x2c] sm:$0xf]
        %v787 = vld [vmem:[%s4 + $0x30] sm:$0xf]
        %v788 = vld [vmem:[%s4 + $0x34] sm:$0xf]
        %v789 = vld [vmem:[%s4 + $0x38] sm:$0xf]
        %v790 = vld [vmem:[%s4 + $0x3c] sm:$0xf]
        %v791 = vld [vmem:[%s5] sm:$0x1]
        %v793 = vlaneseq
        %v794 = vshrl.u32 %v793, 7
        %v795 = vsub.s32 0, %v794
        %v796 = vrot.slane %v791, %v795
        %v814 = vunpack.c.l.b16 %v775
        %v815 = vunpack.c.l.b16 %v776
        %v816 = vunpack.c.l.b16 %v777
        %v817 = vunpack.c.l.b16 %v778
        %v818 = vunpack.c.l.b16 %v779
        %v819 = vunpack.c.l.b16 %v780
        %v820 = vunpack.c.l.b16 %v781
        %v821 = vunpack.c.l.b16 %v782
        %v822 = vunpack.c.l.b16 %v783
        %v823 = vunpack.c.l.b16 %v784
        %v824 = vunpack.c.l.b16 %v785
        %v825 = vunpack.c.l.b16 %v786
        %v826 = vunpack.c.l.b16 %v787
        %v827 = vunpack.c.l.b16 %v788
        %v828 = vunpack.c.l.b16 %v789
        %v829 = vunpack.c.l.b16 %v790
        %v830 = vpack.c.b16 %v815, %v814
        %v831 = vpack.c.b16 %v817, %v816
        %v832 = vpack.c.b16 %v819, %v818
        %v833 = vpack.c.b16 %v821, %v820
        %v834 = vpack.c.b16 %v823, %v822
        %v835 = vpack.c.b16 %v825, %v824
        %v836 = vpack.c.b16 %v827, %v826
        %v837 = vpack.c.b16 %v829, %v828
        %846 = vmatprep.subr.bf16.mxu0 0
        %847 = vmatpush1.bf16.msra.mxu0 %v830
        %848 = vmatprep.subr.bf16.mxu0 0
        %849 = vmatpush1.bf16.msra.mxu0 %v831
        %850 = vmatprep.subr.bf16.mxu0 0
        %851 = vmatpush1.bf16.msra.mxu0 %v832
        %852 = vmatprep.subr.bf16.mxu0 0
        %853 = vmatpush1.bf16.msra.mxu0 %v833
        %854 = vmatprep.subr.bf16.mxu0 0
        %855 = vmatpush1.bf16.msra.mxu0 %v834
        %856 = vmatprep.subr.bf16.mxu0 0
        %857 = vmatpush1.bf16.msra.mxu0 %v835
        %858 = vmatprep.subr.bf16.mxu0 0
        %859 = vmatpush1.bf16.msra.mxu0 %v836
        %860 = vmatprep.subr.bf16.mxu0 0
        %861 = vmatpush1.bf16.msra.mxu0 %v837
        %862 = vmatprep.subr.bf16.mxu0 0
        %863 = vmatpush1.bf16.msra.mxu0 0
        %864 = vmatprep.subr.bf16.mxu0 0
        %865 = vmatpush1.bf16.msra.mxu0 0
        %866 = vmatprep.subr.bf16.mxu0 0
        %867 = vmatpush1.bf16.msra.mxu0 0
        %868 = vmatprep.subr.bf16.mxu0 0
        %869 = vmatpush1.bf16.msra.mxu0 0
        %870 = vmatprep.subr.bf16.mxu0 0
        %871 = vmatpush1.bf16.msra.mxu0 0
        %872 = vmatprep.subr.bf16.mxu0 0
        %873 = vmatpush1.bf16.msra.mxu0 0
        %874 = vmatprep.subr.bf16.mxu0 0
        %875 = vmatpush1.bf16.msra.mxu0 0
        %876 = vmatprep.subr.bf16.mxu0 0
        %877 = vmatpush1.bf16.msra.mxu0 0
        %878 = vmatprep.mubr.bf16.mxu0 0
        %879 = vmatmul.mubr.bf16.gmra.mrb[0].mxu0 %v774
        %v880 = vpop.f32.mrb[0].mxu0
        %v881 = vadd.f32 %v796, %v880
        %v882 = vpop.f32.mrb[0].mxu0
        %v883 = vpop.f32.mrb[0].mxu0
        %v884 = vpop.f32.mrb[0].mxu0
        %885 = vdwg.mxu0
        %v886 = vsub.f32 0.0, %v881
        %v887 = vmul.f32 %v886, 1.442695
        %v888 = vpow.pop %v887
        %v889 = vadd.f32 %v888, 1.0
        %v890 = vrcp.pop %v889
        %v891 = vmul.f32 %v881, %v890
        %v892 = vadd.f32 %v768, %v891
        %v893 = vpack.c.bf16 %v892, %v892
        %v894 = vld [vmem:[%s8] sm:$0xf]
        %v895 = vld [vmem:[%s8 + $0x4] sm:$0xf]
        %v896 = vld [vmem:[%s8 + $0x8] sm:$0xf]
        %v897 = vld [vmem:[%s8 + $0xc] sm:$0xf]
        %v898 = vld [vmem:[%s8 + $0x10] sm:$0xf]
        %v899 = vld [vmem:[%s8 + $0x14] sm:$0xf]
        %v900 = vld [vmem:[%s8 + $0x18] sm:$0xf]
        %v901 = vld [vmem:[%s8 + $0x1c] sm:$0xf]
        %v902 = vld [vmem:[%s8 + $0x20] sm:$0xf]
        %v903 = vld [vmem:[%s8 + $0x24] sm:$0xf]
        %v904 = vld [vmem:[%s8 + $0x28] sm:$0xf]
        %v905 = vld [vmem:[%s8 + $0x2c] sm:$0xf]
        %v906 = vld [vmem:[%s8 + $0x30] sm:$0xf]
        %v907 = vld [vmem:[%s8 + $0x34] sm:$0xf]
        %v908 = vld [vmem:[%s8 + $0x38] sm:$0xf]
        %v909 = vld [vmem:[%s8 + $0x3c] sm:$0xf]
        %v910 = vld [vmem:[%s9] sm:$0x1]
        %v912 = vlaneseq
        %v913 = vshrl.u32 %v912, 7
        %v914 = vsub.s32 0, %v913
        %v915 = vrot.slane %v910, %v914
        %v933 = vunpack.c.l.b16 %v894
        %v934 = vunpack.c.l.b16 %v895
        %v935 = vunpack.c.l.b16 %v896
        %v936 = vunpack.c.l.b16 %v897
        %v937 = vunpack.c.l.b16 %v898
        %v938 = vunpack.c.l.b16 %v899
        %v939 = vunpack.c.l.b16 %v900
        %v940 = vunpack.c.l.b16 %v901
        %v941 = vunpack.c.l.b16 %v902
        %v942 = vunpack.c.l.b16 %v903
        %v943 = vunpack.c.l.b16 %v904
        %v944 = vunpack.c.l.b16 %v905
        %v945 = vunpack.c.l.b16 %v906
        %v946 = vunpack.c.l.b16 %v907
        %v947 = vunpack.c.l.b16 %v908
        %v948 = vunpack.c.l.b16 %v909
        %v949 = vpack.c.b16 %v934, %v933
        %v950 = vpack.c.b16 %v936, %v935
        %v951 = vpack.c.b16 %v938, %v937
        %v952 = vpack.c.b16 %v940, %v939
        %v953 = vpack.c.b16 %v942, %v941
        %v954 = vpack.c.b16 %v944, %v943
        %v955 = vpack.c.b16 %v946, %v945
        %v956 = vpack.c.b16 %v948, %v947
        %965 = vmatprep.subr.bf16.mxu0 0
        %966 = vmatpush1.bf16.msra.mxu0 %v949
        %967 = vmatprep.subr.bf16.mxu0 0
        %968 = vmatpush1.bf16.msra.mxu0 %v950
        %969 = vmatprep.subr.bf16.mxu0 0
        %970 = vmatpush1.bf16.msra.mxu0 %v951
        %971 = vmatprep.subr.bf16.mxu0 0
        %972 = vmatpush1.bf16.msra.mxu0 %v952
        %973 = vmatprep.subr.bf16.mxu0 0
        %974 = vmatpush1.bf16.msra.mxu0 %v953
        %975 = vmatprep.subr.bf16.mxu0 0
        %976 = vmatpush1.bf16.msra.mxu0 %v954
        %977 = vmatprep.subr.bf16.mxu0 0
        %978 = vmatpush1.bf16.msra.mxu0 %v955
        %979 = vmatprep.subr.bf16.mxu0 0
        %980 = vmatpush1.bf16.msra.mxu0 %v956
        %981 = vmatprep.subr.bf16.mxu0 0
        %982 = vmatpush1.bf16.msra.mxu0 0
        %983 = vmatprep.subr.bf16.mxu0 0
        %984 = vmatpush1.bf16.msra.mxu0 0
        %985 = vmatprep.subr.bf16.mxu0 0
        %986 = vmatpush1.bf16.msra.mxu0 0
        %987 = vmatprep.subr.bf16.mxu0 0
        %988 = vmatpush1.bf16.msra.mxu0 0
        %989 = vmatprep.subr.bf16.mxu0 0
        %990 = vmatpush1.bf16.msra.mxu0 0
        %991 = vmatprep.subr.bf16.mxu0 0
        %992 = vmatpush1.bf16.msra.mxu0 0
        %993 = vmatprep.subr.bf16.mxu0 0
        %994 = vmatpush1.bf16.msra.mxu0 0
        %995 = vmatprep.subr.bf16.mxu0 0
        %996 = vmatpush1.bf16.msra.mxu0 0
        %997 = vmatprep.mubr.bf16.mxu0 0
        %998 = vmatmul.mubr.bf16.gmra.mrb[0].mxu0 %v893
        %v999 = vpop.f32.mrb[0].mxu0
        %v1000 = vadd.f32 %v915, %v999
        %v1001 = vpop.f32.mrb[0].mxu0
        %v1002 = vpop.f32.mrb[0].mxu0
        %v1003 = vpop.f32.mrb[0].mxu0
        %1004 = vdwg.mxu0
        %v1005 = vsub.f32 0.0, %v1000
        %v1006 = vmul.f32 %v1005, 1.442695
        %v1007 = vpow.pop %v1006
        %v1008 = vadd.f32 %v1007, 1.0
        %v1009 = vrcp.pop %v1008
        %v1010 = vmul.f32 %v1000, %v1009
        %v1011 = vpack.c.bf16 %v1010, %v1010
        %s1012 = scalar_lea.vmem %s8, 64
        %v1013 = vld [vmem:[%s1012] sm:$0xf]
        %v1014 = vld [vmem:[%s1012 + $0x4] sm:$0xf]
        %v1015 = vld [vmem:[%s1012 + $0x8] sm:$0xf]
        %v1016 = vld [vmem:[%s1012 + $0xc] sm:$0xf]
        %v1017 = vld [vmem:[%s1012 + $0x10] sm:$0xf]
        %v1018 = vld [vmem:[%s1012 + $0x14] sm:$0xf]
        %v1019 = vld [vmem:[%s1012 + $0x18] sm:$0xf]
        %v1020 = vld [vmem:[%s1012 + $0x1c] sm:$0xf]
        %v1021 = vld [vmem:[%s1012 + $0x20] sm:$0xf]
        %v1022 = vld [vmem:[%s1012 + $0x24] sm:$0xf]
        %v1023 = vld [vmem:[%s1012 + $0x28] sm:$0xf]
        %v1024 = vld [vmem:[%s1012 + $0x2c] sm:$0xf]
        %v1025 = vld [vmem:[%s1012 + $0x30] sm:$0xf]
        %v1026 = vld [vmem:[%s1012 + $0x34] sm:$0xf]
        %v1027 = vld [vmem:[%s1012 + $0x38] sm:$0xf]
        %v1028 = vld [vmem:[%s1012 + $0x3c] sm:$0xf]
        %s1029 = scalar_lea.vmem %s9, 1
        %v1030 = vld [vmem:[%s1029] sm:$0x1]
        %v1032 = vlaneseq
        %v1033 = vshrl.u32 %v1032, 7
        %v1034 = vsub.s32 0, %v1033
        %v1035 = vrot.slane %v1030, %v1034
        %v1053 = vunpack.c.l.b16 %v1013
        %v1054 = vunpack.c.l.b16 %v1014
        %v1055 = vunpack.c.l.b16 %v1015
        %v1056 = vunpack.c.l.b16 %v1016
        %v1057 = vunpack.c.l.b16 %v1017
        %v1058 = vunpack.c.l.b16 %v1018
        %v1059 = vunpack.c.l.b16 %v1019
        %v1060 = vunpack.c.l.b16 %v1020
        %v1061 = vunpack.c.l.b16 %v1021
        %v1062 = vunpack.c.l.b16 %v1022
        %v1063 = vunpack.c.l.b16 %v1023
        %v1064 = vunpack.c.l.b16 %v1024
        %v1065 = vunpack.c.l.b16 %v1025
        %v1066 = vunpack.c.l.b16 %v1026
        %v1067 = vunpack.c.l.b16 %v1027
        %v1068 = vunpack.c.l.b16 %v1028
        %v1069 = vpack.c.b16 %v1054, %v1053
        %v1070 = vpack.c.b16 %v1056, %v1055
        %v1071 = vpack.c.b16 %v1058, %v1057
        %v1072 = vpack.c.b16 %v1060, %v1059
        %v1073 = vpack.c.b16 %v1062, %v1061
        %v1074 = vpack.c.b16 %v1064, %v1063
        %v1075 = vpack.c.b16 %v1066, %v1065
        %v1076 = vpack.c.b16 %v1068, %v1067
        %1085 = vmatprep.subr.bf16.mxu0 0
        %1086 = vmatpush1.bf16.msra.mxu0 %v1069
        %1087 = vmatprep.subr.bf16.mxu0 0
        %1088 = vmatpush1.bf16.msra.mxu0 %v1070
        %1089 = vmatprep.subr.bf16.mxu0 0
        %1090 = vmatpush1.bf16.msra.mxu0 %v1071
        %1091 = vmatprep.subr.bf16.mxu0 0
        %1092 = vmatpush1.bf16.msra.mxu0 %v1072
        %1093 = vmatprep.subr.bf16.mxu0 0
        %1094 = vmatpush1.bf16.msra.mxu0 %v1073
        %1095 = vmatprep.subr.bf16.mxu0 0
        %1096 = vmatpush1.bf16.msra.mxu0 %v1074
        %1097 = vmatprep.subr.bf16.mxu0 0
        %1098 = vmatpush1.bf16.msra.mxu0 %v1075
        %1099 = vmatprep.subr.bf16.mxu0 0
        %1100 = vmatpush1.bf16.msra.mxu0 %v1076
        %1101 = vmatprep.subr.bf16.mxu0 0
        %1102 = vmatpush1.bf16.msra.mxu0 0
        %1103 = vmatprep.subr.bf16.mxu0 0
        %1104 = vmatpush1.bf16.msra.mxu0 0
        %1105 = vmatprep.subr.bf16.mxu0 0
        %1106 = vmatpush1.bf16.msra.mxu0 0
        %1107 = vmatprep.subr.bf16.mxu0 0
        %1108 = vmatpush1.bf16.msra.mxu0 0
        %1109 = vmatprep.subr.bf16.mxu0 0
        %1110 = vmatpush1.bf16.msra.mxu0 0
        %1111 = vmatprep.subr.bf16.mxu0 0
        %1112 = vmatpush1.bf16.msra.mxu0 0
        %1113 = vmatprep.subr.bf16.mxu0 0
        %1114 = vmatpush1.bf16.msra.mxu0 0
        %1115 = vmatprep.subr.bf16.mxu0 0
        %1116 = vmatpush1.bf16.msra.mxu0 0
        %1117 = vmatprep.mubr.bf16.mxu0 0
        %1118 = vmatmul.mubr.bf16.gmra.mrb[0].mxu0 %v1011
        %v1119 = vpop.f32.mrb[0].mxu0
        %v1120 = vadd.f32 %v1035, %v1119
        %v1121 = vpop.f32.mrb[0].mxu0
        %v1122 = vpop.f32.mrb[0].mxu0
        %v1123 = vpop.f32.mrb[0].mxu0
        %1124 = vdwg.mxu0
        %v1125 = vsub.f32 0.0, %v1120
        %v1126 = vmul.f32 %v1125, 1.442695
        %v1127 = vpow.pop %v1126
        %v1128 = vadd.f32 %v1127, 1.0
        %v1129 = vrcp.pop %v1128
        %v1130 = vmul.f32 %v1120, %v1129
        %v1131 = vld [vmem:[%s3] sm:$0x1]
        %v1132 = vld [vmem:[%s416] sm:$0xff]
        %v1134 = vlaneseq
        %v1135 = vshrl.u32 %v1134, 7
        %v1136 = vsub.s32 0, %v1135
        %v1137 = vrot.slane %v1131, %v1136
        %v1139 = vmul.f32 %v1137, %v1132
        %v1140 = vadd.f32 %v1139, %v1130
        %1141 = vst [vmem:[%s420] sm:$0xff] %v1140
        %p1142 = scmp.lt.s32.totalorder %s21, 3
        %s1143 = scalar_select %p1142, %s21, 3
        %s1144 = smul.addr %s1143, 8
        %s1145 = scalar_lea.vmem %s10, %s1144
        // Predicated region
        $region99: #{subnet_forward.6} parent=93 // pred_check
          %p1146 = pneg %p259
        $region100: #{subnet_forward.6} parent=93 // pred_check_branch
          %1148 = sbr.rel (%p1146) target = $region102
        $region101: #{subnet_forward.6} parent=93 // pred_region
          _
        $region102: #{subnet_forward.6} parent=93 // pred_fallthru
          _
      $region94: #{subnet_forward.6} parent=5 // pred_fallthru
        _
      %p1149 = scmp.le.s32.totalorder 2, %s16
      // Predicated region
      $region103: #{subnet_forward.6} parent=5 // pred_check
        %p1150 = pneg %p1149
      $region104: #{subnet_forward.6} parent=5 // pred_check_branch
        %1152 = sbr.rel (%p1150) target = $region106
      $region105: #{subnet_forward.6} parent=5 // pred_region
        %s1153 = ssub.s32 %s16, 2
        // Predicated region
        $region107: #{subnet_forward.6} parent=105 // pred_check
          %p1154 = pneg %p265
        $region108: #{subnet_forward.6} parent=105 // pred_check_branch
          %1156 = sbr.rel (%p1154) target = $region110
        $region109: #{subnet_forward.6} parent=105 // pred_region
          %p1157 = scmp.lt.s32.totalorder %s22, 3
          %s1158 = scalar_select %p1157, %s22, 3
          %s1159 = smul.addr %s1158, 8
          %s1160 = scalar_lea.vmem %s10, %s1159
        $region110: #{subnet_forward.6} parent=105 // pred_fallthru
          _
      $region106: #{subnet_forward.6} parent=5 // pred_fallthru
        _
    $region6: #{subnet_forward.6} parent=1 // loop_footer
      %s20 = sadd.s32 1, %s16
    $region7: #{subnet_forward.6} parent=1 // loop_footer_branch
      %15 = sbr.rel target = $region3
    $region8: #{subnet_forward.6} parent=1 // loop_exit
      _

// kernel: subnet_forward.7
$region0: #{subnet_forward.7}
  #allocation0 [shape = 'u32[]', space=smem, size = 0x4, offset = 0x4, fixed_abs, tag = 'smem constant byte address 0x4 - core index']
  #allocation1 [shape = 'u32[144,128]{1,0:T(1,128)}', space=vmem, size = 0x12000, scoped, tag = 'internal scratch']
  %s0 = inlined_call_operand.vmem [shape: f32[4,8,128], index: 0, kind: input, shape index: {}]
  %s1 = inlined_call_operand.vmem [shape: f32[8,128], index: 1, kind: input, shape index: {}, may-alias: {1,7}]
  %s2 = inlined_call_operand.vmem [shape: f32[1,128], index: 2, kind: input, shape index: {}]
  %s3 = inlined_call_operand.vmem [shape: bf16[512,128], index: 3, kind: input, shape index: {}]
  %s4 = inlined_call_operand.vmem [shape: f32[1,128], index: 4, kind: input, shape index: {}]
  %s5 = inlined_call_operand.vmem [shape: bf16[2,128,128], index: 5, kind: input, shape index: {}]
  %s6 = inlined_call_operand.vmem [shape: f32[2,1,128], index: 6, kind: input, shape index: {}]
  %s7 = inlined_call_operand.vmem [shape: f32[8,128], index: 7, kind: output, shape index: {}, may-alias: {1,7}]
  %s8 = sld [smem:[#allocation0]]
  $region38: #{subnet_forward.7} parent=0
    _
  %s10 = ssub.s32 1, %s8
  %s11 = scalar_select 0, %s10, %s8
  // Predicated region
  $region2: #{subnet_forward.7} parent=0 // pred_check
    _
  $region3: #{subnet_forward.7} parent=0 // pred_check_branch
    %13 = sbr.rel (0) target = $region5
  $region4: #{subnet_forward.7} parent=0 // pred_region
    _
  $region5: #{subnet_forward.7} parent=0 // pred_fallthru
    _
  // Predicated region
  $region6: #{subnet_forward.7} parent=0 // pred_check
    _
  $region7: #{subnet_forward.7} parent=0 // pred_check_branch
    %15 = sbr.rel (0) target = $region9
  $region8: #{subnet_forward.7} parent=0 // pred_region
    _
  $region9: #{subnet_forward.7} parent=0 // pred_fallthru
    _
  // Predicated region
  $region10: #{subnet_forward.7} parent=0 // pred_check
    _
  $region11: #{subnet_forward.7} parent=0 // pred_check_branch
    %17 = sbr.rel (0) target = $region13
  $region12: #{subnet_forward.7} parent=0 // pred_region
    _
  $region13: #{subnet_forward.7} parent=0 // pred_fallthru
    _
  // Predicated region
  $region14: #{subnet_forward.7} parent=0 // pred_check
    _
  $region15: #{subnet_forward.7} parent=0 // pred_check_branch
    %19 = sbr.rel (0) target = $region17
  $region16: #{subnet_forward.7} parent=0 // pred_region
    _
  $region17: #{subnet_forward.7} parent=0 // pred_fallthru
    _
  // Predicated region
  $region18: #{subnet_forward.7} parent=0 // pred_check
    _
  $region19: #{subnet_forward.7} parent=0 // pred_check_branch
    %21 = sbr.rel (0) target = $region21
  $region20: #{subnet_forward.7} parent=0 // pred_region
    _
  $region21: #{subnet_forward.7} parent=0 // pred_fallthru
    _
  // Predicated region
  $region22: #{subnet_forward.7} parent=0 // pred_check
    _
  $region23: #{subnet_forward.7} parent=0 // pred_check_branch
    %23 = sbr.rel (0) target = $region25
  $region24: #{subnet_forward.7} parent=0 // pred_region
    _
  $region25: #{subnet_forward.7} parent=0 // pred_fallthru
    _
  // Predicated region
  $region26: #{subnet_forward.7} parent=0 // pred_check
    _
  $region27: #{subnet_forward.7} parent=0 // pred_check_branch
    %25 = sbr.rel (0) target = $region29
  $region28: #{subnet_forward.7} parent=0 // pred_region
    _
  $region29: #{subnet_forward.7} parent=0 // pred_fallthru
    _
  %v27 = vld [vmem:[%s0] sm:$0xff]
  %v28 = vld [vmem:[%s0 + $0x8] sm:$0xff]
  %v29 = vld [vmem:[%s0 + $0x10] sm:$0xff]
  %v30 = vld [vmem:[%s0 + $0x18] sm:$0xff]
  %v31 = vpack.c.bf16 %v27, %v27
  %v32 = vpack.c.bf16 %v28, %v28
  %v33 = vpack.c.bf16 %v29, %v29
  %v34 = vpack.c.bf16 %v30, %v30
  %v35 = vld [vmem:[%s3] sm:$0xf]
  %v36 = vld [vmem:[%s3 + $0x4] sm:$0xf]
  %v37 = vld [vmem:[%s3 + $0x8] sm:$0xf]
  %v38 = vld [vmem:[%s3 + $0xc] sm:$0xf]
  %v39 = vld [vmem:[%s3 + $0x10] sm:$0xf]
  %v40 = vld [vmem:[%s3 + $0x14] sm:$0xf]
  %v41 = vld [vmem:[%s3 + $0x18] sm:$0xf]
  %v42 = vld [vmem:[%s3 + $0x1c] sm:$0xf]
  %v43 = vld [vmem:[%s3 + $0x20] sm:$0xf]
  %v44 = vld [vmem:[%s3 + $0x24] sm:$0xf]
  %v45 = vld [vmem:[%s3 + $0x28] sm:$0xf]
  %v46 = vld [vmem:[%s3 + $0x2c] sm:$0xf]
  %v47 = vld [vmem:[%s3 + $0x30] sm:$0xf]
  %v48 = vld [vmem:[%s3 + $0x34] sm:$0xf]
  %v49 = vld [vmem:[%s3 + $0x38] sm:$0xf]
  %v50 = vld [vmem:[%s3 + $0x3c] sm:$0xf]
  %v51 = vld [vmem:[%s3 + $0x40] sm:$0xf]
  %v52 = vld [vmem:[%s3 + $0x44] sm:$0xf]
  %v53 = vld [vmem:[%s3 + $0x48] sm:$0xf]
  %v54 = vld [vmem:[%s3 + $0x4c] sm:$0xf]
  %v55 = vld [vmem:[%s3 + $0x50] sm:$0xf]
  %v56 = vld [vmem:[%s3 + $0x54] sm:$0xf]
  %v57 = vld [vmem:[%s3 + $0x58] sm:$0xf]
  %v58 = vld [vmem:[%s3 + $0x5c] sm:$0xf]
  %v59 = vld [vmem:[%s3 + $0x60] sm:$0xf]
  %v60 = vld [vmem:[%s3 + $0x64] sm:$0xf]
  %v61 = vld [vmem:[%s3 + $0x68] sm:$0xf]
  %v62 = vld [vmem:[%s3 + $0x6c] sm:$0xf]
  %v63 = vld [vmem:[%s3 + $0x70] sm:$0xf]
  %v64 = vld [vmem:[%s3 + $0x74] sm:$0xf]
  %v65 = vld [vmem:[%s3 + $0x78] sm:$0xf]
  %v66 = vld [vmem:[%s3 + $0x7c] sm:$0xf]
  %v67 = vld [vmem:[%s3 + $0x80] sm:$0xf]
  %v68 = vld [vmem:[%s3 + $0x84] sm:$0xf]
  %v69 = vld [vmem:[%s3 + $0x88] sm:$0xf]
  %v70 = vld [vmem:[%s3 + $0x8c] sm:$0xf]
  %v71 = vld [vmem:[%s3 + $0x90] sm:$0xf]
  %v72 = vld [vmem:[%s3 + $0x94] sm:$0xf]
  %v73 = vld [vmem:[%s3 + $0x98] sm:$0xf]
  %v74 = vld [vmem:[%s3 + $0x9c] sm:$0xf]
  %v75 = vld [vmem:[%s3 + $0xa0] sm:$0xf]
  %v76 = vld [vmem:[%s3 + $0xa4] sm:$0xf]
  %v77 = vld [vmem:[%s3 + $0xa8] sm:$0xf]
  %v78 = vld [vmem:[%s3 + $0xac] sm:$0xf]
  %v79 = vld [vmem:[%s3 + $0xb0] sm:$0xf]
  %v80 = vld [vmem:[%s3 + $0xb4] sm:$0xf]
  %v81 = vld [vmem:[%s3 + $0xb8] sm:$0xf]
  %v82 = vld [vmem:[%s3 + $0xbc] sm:$0xf]
  %v83 = vld [vmem:[%s3 + $0xc0] sm:$0xf]
  %v84 = vld [vmem:[%s3 + $0xc4] sm:$0xf]
  %v85 = vld [vmem:[%s3 + $0xc8] sm:$0xf]
  %v86 = vld [vmem:[%s3 + $0xcc] sm:$0xf]
  %v87 = vld [vmem:[%s3 + $0xd0] sm:$0xf]
  %v88 = vld [vmem:[%s3 + $0xd4] sm:$0xf]
  %v89 = vld [vmem:[%s3 + $0xd8] sm:$0xf]
  %v90 = vld [vmem:[%s3 + $0xdc] sm:$0xf]
  %v91 = vld [vmem:[%s3 + $0xe0] sm:$0xf]
  %v92 = vld [vmem:[%s3 + $0xe4] sm:$0xf]
  %v93 = vld [vmem:[%s3 + $0xe8] sm:$0xf]
  %v94 = vld [vmem:[%s3 + $0xec] sm:$0xf]
  %v95 = vld [vmem:[%s3 + $0xf0] sm:$0xf]
  %v96 = vld [vmem:[%s3 + $0xf4] sm:$0xf]
  %v97 = vld [vmem:[%s3 + $0xf8] sm:$0xf]
  %v98 = vld [vmem:[%s3 + $0xfc] sm:$0xf]
  %v99 = vld [vmem:[%s4] sm:$0x1]
  %v101 = vlaneseq
  %v102 = vshrl.u32 %v101, 7
  %v103 = vsub.s32 0, %v102
  %v104 = vrot.slane %v99, %v103
  %v170 = vunpack.c.l.b16 %v35
  %v171 = vunpack.c.l.b16 %v36
  %v172 = vunpack.c.l.b16 %v37
  %v173 = vunpack.c.l.b16 %v38
  %v174 = vunpack.c.l.b16 %v39
  %v175 = vunpack.c.l.b16 %v40
  %v176 = vunpack.c.l.b16 %v41
  %v177 = vunpack.c.l.b16 %v42
  %v178 = vunpack.c.l.b16 %v43
  %v179 = vunpack.c.l.b16 %v44
  %v180 = vunpack.c.l.b16 %v45
  %v181 = vunpack.c.l.b16 %v46
  %v182 = vunpack.c.l.b16 %v47
  %v183 = vunpack.c.l.b16 %v48
  %v184 = vunpack.c.l.b16 %v49
  %v185 = vunpack.c.l.b16 %v50
  %v186 = vunpack.c.l.b16 %v51
  %v187 = vunpack.c.l.b16 %v52
  %v188 = vunpack.c.l.b16 %v53
  %v189 = vunpack.c.l.b16 %v54
  %v190 = vunpack.c.l.b16 %v55
  %v191 = vunpack.c.l.b16 %v56
  %v192 = vunpack.c.l.b16 %v57
  %v193 = vunpack.c.l.b16 %v58
  %v194 = vunpack.c.l.b16 %v59
  %v195 = vunpack.c.l.b16 %v60
  %v196 = vunpack.c.l.b16 %v61
  %v197 = vunpack.c.l.b16 %v62
  %v198 = vunpack.c.l.b16 %v63
  %v199 = vunpack.c.l.b16 %v64
  %v200 = vunpack.c.l.b16 %v65
  %v201 = vunpack.c.l.b16 %v66
  %v202 = vunpack.c.l.b16 %v67
  %v203 = vunpack.c.l.b16 %v68
  %v204 = vunpack.c.l.b16 %v69
  %v205 = vunpack.c.l.b16 %v70
  %v206 = vunpack.c.l.b16 %v71
  %v207 = vunpack.c.l.b16 %v72
  %v208 = vunpack.c.l.b16 %v73
  %v209 = vunpack.c.l.b16 %v74
  %v210 = vunpack.c.l.b16 %v75
  %v211 = vunpack.c.l.b16 %v76
  %v212 = vunpack.c.l.b16 %v77
  %v213 = vunpack.c.l.b16 %v78
  %v214 = vunpack.c.l.b16 %v79
  %v215 = vunpack.c.l.b16 %v80
  %v216 = vunpack.c.l.b16 %v81
  %v217 = vunpack.c.l.b16 %v82
  %v218 = vunpack.c.l.b16 %v83
  %v219 = vunpack.c.l.b16 %v84
  %v220 = vunpack.c.l.b16 %v85
  %v221 = vunpack.c.l.b16 %v86
  %v222 = vunpack.c.l.b16 %v87
  %v223 = vunpack.c.l.b16 %v88
  %v224 = vunpack.c.l.b16 %v89
  %v225 = vunpack.c.l.b16 %v90
  %v226 = vunpack.c.l.b16 %v91
  %v227 = vunpack.c.l.b16 %v92
  %v228 = vunpack.c.l.b16 %v93
  %v229 = vunpack.c.l.b16 %v94
  %v230 = vunpack.c.l.b16 %v95
  %v231 = vunpack.c.l.b16 %v96
  %v232 = vunpack.c.l.b16 %v97
  %v233 = vunpack.c.l.b16 %v98
  %v234 = vpack.c.b16 %v171, %v170
  %v235 = vpack.c.b16 %v173, %v172
  %v236 = vpack.c.b16 %v175, %v174
  %v237 = vpack.c.b16 %v177, %v176
  %v238 = vpack.c.b16 %v179, %v178
  %v239 = vpack.c.b16 %v181, %v180
  %v240 = vpack.c.b16 %v183, %v182
  %v241 = vpack.c.b16 %v185, %v184
  %v242 = vpack.c.b16 %v187, %v186
  %v243 = vpack.c.b16 %v189, %v188
  %v244 = vpack.c.b16 %v191, %v190
  %v245 = vpack.c.b16 %v193, %v192
  %v246 = vpack.c.b16 %v195, %v194
  %v247 = vpack.c.b16 %v197, %v196
  %v248 = vpack.c.b16 %v199, %v198
  %v249 = vpack.c.b16 %v201, %v200
  %v250 = vpack.c.b16 %v203, %v202
  %v251 = vpack.c.b16 %v205, %v204
  %v252 = vpack.c.b16 %v207, %v206
  %v253 = vpack.c.b16 %v209, %v208
  %v254 = vpack.c.b16 %v211, %v210
  %v255 = vpack.c.b16 %v213, %v212
  %v256 = vpack.c.b16 %v215, %v214
  %v257 = vpack.c.b16 %v217, %v216
  %v258 = vpack.c.b16 %v219, %v218
  %v259 = vpack.c.b16 %v221, %v220
  %v260 = vpack.c.b16 %v223, %v222
  %v261 = vpack.c.b16 %v225, %v224
  %v262 = vpack.c.b16 %v227, %v226
  %v263 = vpack.c.b16 %v229, %v228
  %v264 = vpack.c.b16 %v231, %v230
  %v265 = vpack.c.b16 %v233, %v232
  %298 = vmatprep.subr.bf16.mxu0 0
  %299 = vmatpush1.bf16.msra.mxu0 %v234
  %300 = vmatprep.subr.bf16.mxu0 0
  %301 = vmatpush1.bf16.msra.mxu0 %v235
  %302 = vmatprep.subr.bf16.mxu0 0
  %303 = vmatpush1.bf16.msra.mxu0 %v236
  %304 = vmatprep.subr.bf16.mxu0 0
  %305 = vmatpush1.bf16.msra.mxu0 %v237
  %306 = vmatprep.subr.bf16.mxu0 0
  %307 = vmatpush1.bf16.msra.mxu0 %v238
  %308 = vmatprep.subr.bf16.mxu0 0
  %309 = vmatpush1.bf16.msra.mxu0 %v239
  %310 = vmatprep.subr.bf16.mxu0 0
  %311 = vmatpush1.bf16.msra.mxu0 %v240
  %312 = vmatprep.subr.bf16.mxu0 0
  %313 = vmatpush1.bf16.msra.mxu0 %v241
  %314 = vmatprep.subr.bf16.mxu0 0
  %315 = vmatpush1.bf16.msra.mxu0 %v242
  %316 = vmatprep.subr.bf16.mxu0 0
  %317 = vmatpush1.bf16.msra.mxu0 %v243
  %318 = vmatprep.subr.bf16.mxu0 0
  %319 = vmatpush1.bf16.msra.mxu0 %v244
  %320 = vmatprep.subr.bf16.mxu0 0
  %321 = vmatpush1.bf16.msra.mxu0 %v245
  %322 = vmatprep.subr.bf16.mxu0 0
  %323 = vmatpush1.bf16.msra.mxu0 %v246
  %324 = vmatprep.subr.bf16.mxu0 0
  %325 = vmatpush1.bf16.msra.mxu0 %v247
  %326 = vmatprep.subr.bf16.mxu0 0
  %327 = vmatpush1.bf16.msra.mxu0 %v248
  %328 = vmatprep.subr.bf16.mxu0 0
  %329 = vmatpush1.bf16.msra.mxu0 %v249
  %330 = vmatprep.mubr.bf16.mxu0 %v32
  %331 = vmatmul.mubr.bf16.gmra.mrb[0].mxu0 %v31
  %v332 = vpop.f32.mrb[0].mxu0
  %v333 = vadd.f32 %v104, %v332
  %v334 = vpop.f32.mrb[0].mxu0
  %v335 = vpop.f32.mrb[0].mxu0
  %v336 = vpop.f32.mrb[0].mxu0
  %337 = vdwg.mxu0
  %338 = vmatprep.subr.bf16.mxu0 0
  %339 = vmatpush1.bf16.msra.mxu0 %v250
  %340 = vmatprep.subr.bf16.mxu0 0
  %341 = vmatpush1.bf16.msra.mxu0 %v251
  %342 = vmatprep.subr.bf16.mxu0 0
  %343 = vmatpush1.bf16.msra.mxu0 %v252
  %344 = vmatprep.subr.bf16.mxu0 0
  %345 = vmatpush1.bf16.msra.mxu0 %v253
  %346 = vmatprep.subr.bf16.mxu0 0
  %347 = vmatpush1.bf16.msra.mxu0 %v254
  %348 = vmatprep.subr.bf16.mxu0 0
  %349 = vmatpush1.bf16.msra.mxu0 %v255
  %350 = vmatprep.subr.bf16.mxu0 0
  %351 = vmatpush1.bf16.msra.mxu0 %v256
  %352 = vmatprep.subr.bf16.mxu0 0
  %353 = vmatpush1.bf16.msra.mxu0 %v257
  %354 = vmatprep.subr.bf16.mxu0 0
  %355 = vmatpush1.bf16.msra.mxu0 %v258
  %356 = vmatprep.subr.bf16.mxu0 0
  %357 = vmatpush1.bf16.msra.mxu0 %v259
  %358 = vmatprep.subr.bf16.mxu0 0
  %359 = vmatpush1.bf16.msra.mxu0 %v260
  %360 = vmatprep.subr.bf16.mxu0 0
  %361 = vmatpush1.bf16.msra.mxu0 %v261
  %362 = vmatprep.subr.bf16.mxu0 0
  %363 = vmatpush1.bf16.msra.mxu0 %v262
  %364 = vmatprep.subr.bf16.mxu0 0
  %365 = vmatpush1.bf16.msra.mxu0 %v263
  %366 = vmatprep.subr.bf16.mxu0 0
  %367 = vmatpush1.bf16.msra.mxu0 %v264
  %368 = vmatprep.subr.bf16.mxu0 0
  %369 = vmatpush1.bf16.msra.mxu0 %v265
  %370 = vmatprep.mubr.bf16.mxu0 %v34
  %371 = vmatmul.mubr.bf16.gmra.mrb[0].mxu0 %v33
  %v372 = vpop.f32.mrb[0].mxu0
  %v373 = vadd.f32 %v333, %v372
  %v374 = vpop.f32.mrb[0].mxu0
  %v375 = vpop.f32.mrb[0].mxu0
  %v376 = vpop.f32.mrb[0].mxu0
  %377 = vdwg.mxu0
  %v378 = vpack.c.bf16 %v373, %v373
  %v379 = vld [vmem:[%s5] sm:$0xf]
  %v380 = vld [vmem:[%s5 + $0x4] sm:$0xf]
  %v381 = vld [vmem:[%s5 + $0x8] sm:$0xf]
  %v382 = vld [vmem:[%s5 + $0xc] sm:$0xf]
  %v383 = vld [vmem:[%s5 + $0x10] sm:$0xf]
  %v384 = vld [vmem:[%s5 + $0x14] sm:$0xf]
  %v385 = vld [vmem:[%s5 + $0x18] sm:$0xf]
  %v386 = vld [vmem:[%s5 + $0x1c] sm:$0xf]
  %v387 = vld [vmem:[%s5 + $0x20] sm:$0xf]
  %v388 = vld [vmem:[%s5 + $0x24] sm:$0xf]
  %v389 = vld [vmem:[%s5 + $0x28] sm:$0xf]
  %v390 = vld [vmem:[%s5 + $0x2c] sm:$0xf]
  %v391 = vld [vmem:[%s5 + $0x30] sm:$0xf]
  %v392 = vld [vmem:[%s5 + $0x34] sm:$0xf]
  %v393 = vld [vmem:[%s5 + $0x38] sm:$0xf]
  %v394 = vld [vmem:[%s5 + $0x3c] sm:$0xf]
  %v395 = vld [vmem:[%s6] sm:$0x1]
  %v397 = vlaneseq
  %v398 = vshrl.u32 %v397, 7
  %v399 = vsub.s32 0, %v398
  %v400 = vrot.slane %v395, %v399
  %v418 = vunpack.c.l.b16 %v379
  %v419 = vunpack.c.l.b16 %v380
  %v420 = vunpack.c.l.b16 %v381
  %v421 = vunpack.c.l.b16 %v382
  %v422 = vunpack.c.l.b16 %v383
  %v423 = vunpack.c.l.b16 %v384
  %v424 = vunpack.c.l.b16 %v385
  %v425 = vunpack.c.l.b16 %v386
  %v426 = vunpack.c.l.b16 %v387
  %v427 = vunpack.c.l.b16 %v388
  %v428 = vunpack.c.l.b16 %v389
  %v429 = vunpack.c.l.b16 %v390
  %v430 = vunpack.c.l.b16 %v391
  %v431 = vunpack.c.l.b16 %v392
  %v432 = vunpack.c.l.b16 %v393
  %v433 = vunpack.c.l.b16 %v394
  %v434 = vpack.c.b16 %v419, %v418
  %v435 = vpack.c.b16 %v421, %v420
  %v436 = vpack.c.b16 %v423, %v422
  %v437 = vpack.c.b16 %v425, %v424
  %v438 = vpack.c.b16 %v427, %v426
  %v439 = vpack.c.b16 %v429, %v428
  %v440 = vpack.c.b16 %v431, %v430
  %v441 = vpack.c.b16 %v433, %v432
  %450 = vmatprep.subr.bf16.mxu0 0
  %451 = vmatpush1.bf16.msra.mxu0 %v434
  %452 = vmatprep.subr.bf16.mxu0 0
  %453 = vmatpush1.bf16.msra.mxu0 %v435
  %454 = vmatprep.subr.bf16.mxu0 0
  %455 = vmatpush1.bf16.msra.mxu0 %v436
  %456 = vmatprep.subr.bf16.mxu0 0
  %457 = vmatpush1.bf16.msra.mxu0 %v437
  %458 = vmatprep.subr.bf16.mxu0 0
  %459 = vmatpush1.bf16.msra.mxu0 %v438
  %460 = vmatprep.subr.bf16.mxu0 0
  %461 = vmatpush1.bf16.msra.mxu0 %v439
  %462 = vmatprep.subr.bf16.mxu0 0
  %463 = vmatpush1.bf16.msra.mxu0 %v440
  %464 = vmatprep.subr.bf16.mxu0 0
  %465 = vmatpush1.bf16.msra.mxu0 %v441
  %466 = vmatprep.subr.bf16.mxu0 0
  %467 = vmatpush1.bf16.msra.mxu0 0
  %468 = vmatprep.subr.bf16.mxu0 0
  %469 = vmatpush1.bf16.msra.mxu0 0
  %470 = vmatprep.subr.bf16.mxu0 0
  %471 = vmatpush1.bf16.msra.mxu0 0
  %472 = vmatprep.subr.bf16.mxu0 0
  %473 = vmatpush1.bf16.msra.mxu0 0
  %474 = vmatprep.subr.bf16.mxu0 0
  %475 = vmatpush1.bf16.msra.mxu0 0
  %476 = vmatprep.subr.bf16.mxu0 0
  %477 = vmatpush1.bf16.msra.mxu0 0
  %478 = vmatprep.subr.bf16.mxu0 0
  %479 = vmatpush1.bf16.msra.mxu0 0
  %480 = vmatprep.subr.bf16.mxu0 0
  %481 = vmatpush1.bf16.msra.mxu0 0
  %482 = vmatprep.mubr.bf16.mxu0 0
  %483 = vmatmul.mubr.bf16.gmra.mrb[0].mxu0 %v378
  %v484 = vpop.f32.mrb[0].mxu0
  %v485 = vadd.f32 %v400, %v484
  %v486 = vpop.f32.mrb[0].mxu0
  %v487 = vpop.f32.mrb[0].mxu0
  %v488 = vpop.f32.mrb[0].mxu0
  %489 = vdwg.mxu0
  %v490 = vsub.f32 0.0, %v485
  %v491 = vmul.f32 %v490, 1.442695
  %v492 = vpow.pop %v491
  %v493 = vadd.f32 %v492, 1.0
  %v494 = vrcp.pop %v493
  %v495 = vmul.f32 %v485, %v494
  %v496 = vpack.c.bf16 %v495, %v495
  %s497 = scalar_lea.vmem %s5, 64
  %v498 = vld [vmem:[%s497] sm:$0xf]
  %v499 = vld [vmem:[%s497 + $0x4] sm:$0xf]
  %v500 = vld [vmem:[%s497 + $0x8] sm:$0xf]
  %v501 = vld [vmem:[%s497 + $0xc] sm:$0xf]
  %v502 = vld [vmem:[%s497 + $0x10] sm:$0xf]
  %v503 = vld [vmem:[%s497 + $0x14] sm:$0xf]
  %v504 = vld [vmem:[%s497 + $0x18] sm:$0xf]
  %v505 = vld [vmem:[%s497 + $0x1c] sm:$0xf]
  %v506 = vld [vmem:[%s497 + $0x20] sm:$0xf]
  %v507 = vld [vmem:[%s497 + $0x24] sm:$0xf]
  %v508 = vld [vmem:[%s497 + $0x28] sm:$0xf]
  %v509 = vld [vmem:[%s497 + $0x2c] sm:$0xf]
  %v510 = vld [vmem:[%s497 + $0x30] sm:$0xf]
  %v511 = vld [vmem:[%s497 + $0x34] sm:$0xf]
  %v512 = vld [vmem:[%s497 + $0x38] sm:$0xf]
  %v513 = vld [vmem:[%s497 + $0x3c] sm:$0xf]
  %s514 = scalar_lea.vmem %s6, 1
  %v515 = vld [vmem:[%s514] sm:$0x1]
  %v517 = vlaneseq
  %v518 = vshrl.u32 %v517, 7
  %v519 = vsub.s32 0, %v518
  %v520 = vrot.slane %v515, %v519
  %v538 = vunpack.c.l.b16 %v498
  %v539 = vunpack.c.l.b16 %v499
  %v540 = vunpack.c.l.b16 %v500
  %v541 = vunpack.c.l.b16 %v501
  %v542 = vunpack.c.l.b16 %v502
  %v543 = vunpack.c.l.b16 %v503
  %v544 = vunpack.c.l.b16 %v504
  %v545 = vunpack.c.l.b16 %v505
  %v546 = vunpack.c.l.b16 %v506
  %v547 = vunpack.c.l.b16 %v507
  %v548 = vunpack.c.l.b16 %v508
  %v549 = vunpack.c.l.b16 %v509
  %v550 = vunpack.c.l.b16 %v510
  %v551 = vunpack.c.l.b16 %v511
  %v552 = vunpack.c.l.b16 %v512
  %v553 = vunpack.c.l.b16 %v513
  %v554 = vpack.c.b16 %v539, %v538
  %v555 = vpack.c.b16 %v541, %v540
  %v556 = vpack.c.b16 %v543, %v542
  %v557 = vpack.c.b16 %v545, %v544
  %v558 = vpack.c.b16 %v547, %v546
  %v559 = vpack.c.b16 %v549, %v548
  %v560 = vpack.c.b16 %v551, %v550
  %v561 = vpack.c.b16 %v553, %v552
  %570 = vmatprep.subr.bf16.mxu0 0
  %571 = vmatpush1.bf16.msra.mxu0 %v554
  %572 = vmatprep.subr.bf16.mxu0 0
  %573 = vmatpush1.bf16.msra.mxu0 %v555
  %574 = vmatprep.subr.bf16.mxu0 0
  %575 = vmatpush1.bf16.msra.mxu0 %v556
  %576 = vmatprep.subr.bf16.mxu0 0
  %577 = vmatpush1.bf16.msra.mxu0 %v557
  %578 = vmatprep.subr.bf16.mxu0 0
  %579 = vmatpush1.bf16.msra.mxu0 %v558
  %580 = vmatprep.subr.bf16.mxu0 0
  %581 = vmatpush1.bf16.msra.mxu0 %v559
  %582 = vmatprep.subr.bf16.mxu0 0
  %583 = vmatpush1.bf16.msra.mxu0 %v560
  %584 = vmatprep.subr.bf16.mxu0 0
  %585 = vmatpush1.bf16.msra.mxu0 %v561
  %586 = vmatprep.subr.bf16.mxu0 0
  %587 = vmatpush1.bf16.msra.mxu0 0
  %588 = vmatprep.subr.bf16.mxu0 0
  %589 = vmatpush1.bf16.msra.mxu0 0
  %590 = vmatprep.subr.bf16.mxu0 0
  %591 = vmatpush1.bf16.msra.mxu0 0
  %592 = vmatprep.subr.bf16.mxu0 0
  %593 = vmatpush1.bf16.msra.mxu0 0
  %594 = vmatprep.subr.bf16.mxu0 0
  %595 = vmatpush1.bf16.msra.mxu0 0
  %596 = vmatprep.subr.bf16.mxu0 0
  %597 = vmatpush1.bf16.msra.mxu0 0
  %598 = vmatprep.subr.bf16.mxu0 0
  %599 = vmatpush1.bf16.msra.mxu0 0
  %600 = vmatprep.subr.bf16.mxu0 0
  %601 = vmatpush1.bf16.msra.mxu0 0
  %602 = vmatprep.mubr.bf16.mxu0 0
  %603 = vmatmul.mubr.bf16.gmra.mrb[0].mxu0 %v496
  %v604 = vpop.f32.mrb[0].mxu0
  %v605 = vadd.f32 %v520, %v604
  %v606 = vpop.f32.mrb[0].mxu0
  %v607 = vpop.f32.mrb[0].mxu0
  %v608 = vpop.f32.mrb[0].mxu0
  %609 = vdwg.mxu0
  %v610 = vsub.f32 0.0, %v605
  %v611 = vmul.f32 %v610, 1.442695
  %v612 = vpow.pop %v611
  %v613 = vadd.f32 %v612, 1.0
  %v614 = vrcp.pop %v613
  %v615 = vmul.f32 %v605, %v614
  %v616 = vld [vmem:[%s2] sm:$0x1]
  %v617 = vld [vmem:[%s1] sm:$0xff]
  %v619 = vlaneseq
  %v620 = vshrl.u32 %v619, 7
  %v621 = vsub.s32 0, %v620
  %v622 = vrot.slane %v616, %v621
  %v624 = vmul.f32 %v622, %v617
  %v625 = vadd.f32 %v624, %v615
  %626 = vst [vmem:[%s7] sm:$0xff] %v625
  // Predicated region
  $region30: #{subnet_forward.7} parent=0 // pred_check
    _
  $region31: #{subnet_forward.7} parent=0 // pred_check_branch
    %628 = sbr.rel (0) target = $region33
  $region32: #{subnet_forward.7} parent=0 // pred_region
    _
  $region33: #{subnet_forward.7} parent=0 // pred_fallthru
    _
  // Predicated region
  $region34: #{subnet_forward.7} parent=0 // pred_check
    _
  $region35: #{subnet_forward.7} parent=0 // pred_check_branch
    %630 = sbr.rel (0) target = $region37
  $region36: #{subnet_forward.7} parent=0 // pred_region
    _
  $region37: #{subnet_forward.7} parent=0 // pred_fallthru
    _

</llo_original>
